<compile_context>
chip_gen: v7x
topology: tpu7x:2x2x1
jax: 0.10.0
libtpu: 0.0.40
codegen_flags: <defaults>
</compile_context>

<pallas_src>
import functools

import jax
import jax.numpy as jnp
import numpy as np
from jax.experimental import pallas as pl
from jax.experimental.pallas import tpu as pltpu


def _round_up(x, m):
    return ((x + m - 1) // m) * m


def _triple(v):
    if isinstance(v, (tuple, list)):
        assert len(v) == 3
        return tuple(int(e) for e in v)
    return (int(v),) * 3


# ----------------------------------------------------------------------------- kernel
def _fused_transform3d_kernel(x_ref, w1_ref, b1_ref, w2_ref, b2_ref, out_ref,
                              *, taps, cp, center_tap):
    # x_ref  : (n_chunks, S3*Cp, tile_m) bf16 -- per-batch, phase-decomposed,
    #          flattened, chunked input (resident across the m grid axis).
    # w1_ref : (K3, EXPCp, Cp)  bf16  per-tap fused-conv weights (BN1 folded in)
    # b1_ref : (EXPCp, 1)       f32   folded BN1 bias
    # w2_ref : (OUCp, EXPCp)    bf16  1x1x1 projection weights (BN2 folded in)
    # b2_ref : (OUCp, 1)        f32   folded BN2 bias
    # out_ref: (OUCp, tile_m)   bf16
    m = pl.program_id(1)
    expcp = w1_ref.shape[1]
    tile_m = out_ref.shape[-1]

    # Hoist chunk loads: each distinct chunk offset q needs chunks (m+q, m+q+1)
    # lane-concatenated once; every tap then takes a *static* window of it.
    qs = sorted({q for (_, q, _) in taps})
    big = {q: jnp.concatenate([x_ref[m + q], x_ref[m + q + 1]], axis=-1)
           for q in qs}

    def tap_window(pt, q, r):
        row0 = pt * cp
        return big[q][row0:row0 + cp, r:r + tile_m]          # (Cp, tile_m) bf16

    # Conv3d as shift-and-matmul over the k^3 taps, f32 accumulation.
    acc = jnp.zeros((expcp, tile_m), jnp.float32)
    for t, (pt, q, r) in enumerate(taps):
        acc = acc + jnp.dot(w1_ref[t], tap_window(pt, q, r),
                            preferred_element_type=jnp.float32)

    h = jnp.maximum(acc + b1_ref[...], 0.0)                  # BN1 bias + ReLU
    y = jnp.dot(w2_ref[...], h.astype(jnp.bfloat16),
                preferred_element_type=jnp.float32)          # 1x1x1 projection
    y = y + b2_ref[...]                                      # BN2 bias
    if center_tap is not None:                               # skip connection:
        y = y + tap_window(*center_tap).astype(jnp.float32)  # center tap of x
    out_ref[...] = y.astype(out_ref.dtype)


# ----------------------------------------------------------------------------- tiling
def _vmem_budget():
    """Generation-aware VMEM budget / scoped limit (falls back to v7x-safe)."""
    try:
        cap = int(pltpu.get_tpu_info().vmem_capacity_bytes)
    except Exception:
        cap = 64 * 1024 * 1024
    limit = min(cap * 3 // 4, 112 * 1024 * 1024)
    budget = limit * 3 // 5
    return budget, limit


def _pick_tile_m(M, n_batch, o_max, rows_in, expcp, oucp, budget):
    """Smallest padding tile_m (multiple of 128) that fits the VMEM budget and
    keeps >= 4 total grid steps when there is enough work."""
    m_tiles = max(1, -(-4 // n_batch))
    while True:
        tile = _round_up(max(-(-M // m_tiles), 1), 128)
        n_chunks = -(-M // tile) + o_max // tile + 1
        fixed = 2 * n_chunks * tile * rows_in * 2        # double-buffered input slab
        per_tile = (2 * oucp * tile * 2                  # double-buffered bf16 out
                    + (expcp + oucp) * tile * 4          # f32 acc / epilogue temps
                    + 4 * rows_in * tile * 2)            # hoisted chunk-pair values
        if fixed + per_tile <= budget or tile == 128:
            return tile
        m_tiles += 1


# ----------------------------------------------------------------------------- wrapper
def fused_transform3d_pallas(x_ncdhw, params, *, kernel_size, stride,
                             out_dtype=jnp.bfloat16):
    """x_ncdhw: (N, inc, D, H, W) float32.  Returns (N, ouc, Do, Ho, Wo) bf16."""
    w1, s1, b1, w2, s2, b2 = params
    N, C, D, H, W = x_ncdhw.shape
    expc, ouc = w1.shape[0], w2.shape[0]
    kd_, kh_, kw_ = _triple(kernel_size)
    sd_, sh_, sw_ = _triple(stride)
    pd_, ph_, pw_ = kd_ // 2, kh_ // 2, kw_ // 2

    Do = (D + 2 * pd_ - kd_) // sd_ + 1
    Ho = (H + 2 * ph_ - kh_) // sh_ + 1
    Wo = (W + 2 * pw_ - kw_) // sw_ + 1

    # Per-phase lengths after stride decomposition (stride-1 problem per phase).
    Lq_d = Do + (kd_ - 1) // sd_
    Lq_h = Ho + (kh_ - 1) // sh_
    Lq_w = Wo + (kw_ - 1) // sw_
    LhLw = Lq_h * Lq_w
    Lq_flat = Lq_d * LhLw

    # Flat output bases that matter + max static tap offset in the flat space.
    M = (Do - 1) * LhLw + (Ho - 1) * Lq_w + Wo
    o_max = ((kd_ - 1) // sd_) * LhLw + ((kh_ - 1) // sh_) * Lq_w + (kw_ - 1) // sw_

    S3 = sd_ * sh_ * sw_
    Cp = _round_up(C, 8)
    EXPCp = _round_up(expc, 8)
    OUCp = _round_up(ouc, 8)
    rows_in = S3 * Cp
    K3 = kd_ * kh_ * kw_

    budget, vmem_limit = _vmem_budget()
    tile_m = _pick_tile_m(M, N, o_max, rows_in, EXPCp, OUCp, budget)
    num_m_tiles = -(-M // tile_m)
    n_chunks = num_m_tiles + o_max // tile_m + 1
    Lpad = n_chunks * tile_m

    # ---- phase-decomposed, flattened, chunked input (~1x input bytes, bf16) ----
    xb = x_ncdhw.astype(jnp.bfloat16)
    x_pad = jnp.pad(xb, ((0, 0), (0, 0), (pd_, pd_), (ph_, ph_), (pw_, pw_)))
    slabs = []
    for a in range(sd_):
        for b in range(sh_):
            for c in range(sw_):
                sl = x_pad[:, :, a::sd_, b::sh_, c::sw_][:, :, :Lq_d, :Lq_h, :Lq_w]
                sl = jnp.pad(sl, ((0, 0), (0, 0),
                                  (0, Lq_d - sl.shape[2]),
                                  (0, Lq_h - sl.shape[3]),
                                  (0, Lq_w - sl.shape[4])))
                slabs.append(sl)
    phases = jnp.stack(slabs, axis=1)                      # (N, S3, C, Lq_d, Lq_h, Lq_w)
    phases = phases.reshape(N, S3, C, Lq_flat)
    phases = jnp.pad(phases, ((0, 0), (0, 0), (0, Cp - C), (0, Lpad - Lq_flat)))
    phases = phases.reshape(N, rows_in, n_chunks, tile_m)
    phases = jnp.transpose(phases, (0, 2, 1, 3))           # (N, n_chunks, rows_in, tile_m)

    # ---- static tap table: (phase index, chunk offset q, lane offset r) ----
    taps = []
    for kd in range(kd_):
        for kh in range(kh_):
            for kw in range(kw_):
                pt = (kd % sd_) * (sh_ * sw_) + (kh % sh_) * sw_ + (kw % sw_)
                ot = (kd // sd_) * LhLw + (kh // sh_) * Lq_w + (kw // sw_)
                taps.append((pt, ot // tile_m, ot % tile_m))
    has_skip = (C == ouc) and (sd_ == sh_ == sw_ == 1)
    center_tap = None
    if has_skip:
        oc = pd_ * LhLw + ph_ * Lq_w + pw_
        center_tap = (0, oc // tile_m, oc % tile_m)

    # ---- fold BN scales into the conv weights (bias adds stay in-kernel) ----
    w1_taps = jnp.transpose(w1, (2, 3, 4, 0, 1)).reshape(K3, expc, C)
    w1_taps = (w1_taps * s1[None, :, None]).astype(jnp.bfloat16)
    w1_taps = jnp.pad(w1_taps, ((0, 0), (0, EXPCp - expc), (0, Cp - C)))
    b1_col = jnp.pad(b1.astype(jnp.float32), (0, EXPCp - expc)).reshape(EXPCp, 1)
    w2_mat = (w2.reshape(ouc, expc) * s2[:, None]).astype(jnp.bfloat16)
    w2_mat = jnp.pad(w2_mat, ((0, OUCp - ouc), (0, EXPCp - expc)))
    b2_col = jnp.pad(b2.astype(jnp.float32), (0, OUCp - ouc)).reshape(OUCp, 1)

    kernel = functools.partial(_fused_transform3d_kernel, taps=taps, cp=Cp,
                               center_tap=center_tap)
    out_flat = pl.pallas_call(
        kernel,
        out_shape=jax.ShapeDtypeStruct((N, OUCp, num_m_tiles * tile_m),
                                       jnp.bfloat16),
        grid_spec=pltpu.PrefetchScalarGridSpec(
            num_scalar_prefetch=0,
            grid=(N, num_m_tiles),
            in_specs=[
                # per-batch input slab: constant index along m -> stays resident
                pl.BlockSpec((None, n_chunks, rows_in, tile_m),
                             lambda n, m: (n, 0, 0, 0)),
                pl.BlockSpec((K3, EXPCp, Cp), lambda n, m: (0, 0, 0)),
                pl.BlockSpec((EXPCp, 1), lambda n, m: (0, 0)),
                pl.BlockSpec((OUCp, EXPCp), lambda n, m: (0, 0)),
                pl.BlockSpec((OUCp, 1), lambda n, m: (0, 0)),
            ],
            out_specs=pl.BlockSpec((None, OUCp, tile_m), lambda n, m: (n, 0, m)),
        ),
        compiler_params=pltpu.CompilerParams(
            dimension_semantics=("parallel", "parallel"),
            vmem_limit_bytes=vmem_limit,
        ),
    )(phases, w1_taps, b1_col, w2_mat, b2_col)

    # ---- un-flatten the valid voxels (padded/garbage lanes are never selected) --
    Lout = num_m_tiles * tile_m
    out_flat = out_flat[:, :ouc, :]
    if Lout < Lq_flat:
        out_flat = jnp.pad(out_flat, ((0, 0), (0, 0), (0, Lq_flat - Lout)))
    else:
        out_flat = out_flat[:, :, :Lq_flat]
    out = out_flat.reshape(N, ouc, Lq_d, Lq_h, Lq_w)[:, :, :Do, :Ho, :Wo]
    return out.astype(out_dtype)


# ----------------------------------------------------------------------------- reference
def fused_transform3d_ref(x, params, *, kernel_size, stride):
    """Plain-JAX f32 reference (lax conv) for correctness checking."""
    w1, s1, b1, w2, s2, b2 = params
    kd_, kh_, kw_ = _triple(kernel_size)
    sd_, sh_, sw_ = _triple(stride)
    pads = [(kd_ // 2,) * 2, (kh_ // 2,) * 2, (kw_ // 2,) * 2]
    dn = jax.lax.conv_dimension_numbers(x.shape, w1.shape, ("NCDHW", "OIDHW", "NCDHW"))
    h = jax.lax.conv_general_dilated(x, w1, window_strides=(sd_, sh_, sw_),
                                     padding=pads, dimension_numbers=dn)
    h = h * s1[None, :, None, None, None] + b1[None, :, None, None, None]
    h = jnp.maximum(h, 0.0)
    dn2 = jax.lax.conv_dimension_numbers(h.shape, w2.shape, ("NCDHW", "OIDHW", "NCDHW"))
    y = jax.lax.conv_general_dilated(h, w2, window_strides=(1, 1, 1),
                                     padding=[(0, 0)] * 3, dimension_numbers=dn2)
    y = y * s2[None, :, None, None, None] + b2[None, :, None, None, None]
    if x.shape[1] == y.shape[1] and (sd_, sh_, sw_) == (1, 1, 1):
        y = y + x
    return y


# ----------------------------------------------------------------------------- params
def make_params(key, inc, ouc, kernel_size, expand_ratio, bn_eps=0.001):
    kd_, kh_, kw_ = _triple(kernel_size)
    expc = int(round(ouc * expand_ratio))
    ks = jax.random.split(key, 6)
    w1 = jax.random.normal(ks[0], (expc, inc, kd_, kh_, kw_), jnp.float32) * 0.1
    w2 = jax.random.normal(ks[1], (ouc, expc, 1, 1, 1), jnp.float32) * 0.1
    # BatchNorm (inference mode): gamma, beta random; running_mean=0, running_var=1,
    # folded into per-channel scale/bias:  y = x*scale + bias.
    g1 = 1.0 + 0.1 * jax.random.normal(ks[2], (expc,), jnp.float32)
    be1 = 0.1 * jax.random.normal(ks[3], (expc,), jnp.float32)
    g2 = 1.0 + 0.1 * jax.random.normal(ks[4], (ouc,), jnp.float32)
    be2 = 0.1 * jax.random.normal(ks[5], (ouc,), jnp.float32)
    rm1 = jnp.zeros((expc,), jnp.float32); rv1 = jnp.ones((expc,), jnp.float32)
    rm2 = jnp.zeros((ouc,), jnp.float32);  rv2 = jnp.ones((ouc,), jnp.float32)
    s1 = g1 / jnp.sqrt(rv1 + bn_eps); b1 = be1 - rm1 * s1
    s2 = g2 / jnp.sqrt(rv2 + bn_eps); b2 = be2 - rm2 * s2
    return (w1, s1, b1, w2, s2, b2)


# ----------------------------------------------------------------------------- main
if __name__ == "__main__":
    key = jax.random.PRNGKey(0)
    keys = jax.random.split(key, 6)
    N, D, H, W = 2, 8, 8, 8

    def check(x, params, kernel_size, stride):
        out = jax.block_until_ready(
            fused_transform3d_pallas(x, params, kernel_size=kernel_size, stride=stride))
        ref = jax.block_until_ready(
            fused_transform3d_ref(x, params, kernel_size=kernel_size, stride=stride))
        # bf16 inputs/weights/output with f32 accumulation -> bf16-level tolerances.
        np.testing.assert_allclose(np.asarray(out.astype(jnp.float32)),
                                   np.asarray(ref), rtol=3e-2, atol=3e-2)

    # Config 1: inc == ouc, stride == 1 -> residual read from the center tap.
    x1 = jax.random.normal(keys[0], (N, 4, D, H, W), jnp.float32)
    p1 = make_params(keys[1], 4, 4, 3, 2.0)
    check(x1, p1, 3, 1)

    # Config 2: isotropic stride 2, channel-changing block (no skip).
    x2 = jax.random.normal(keys[2], (N, 4, D, H, W), jnp.float32)
    p2 = make_params(keys[3], 4, 8, 3, 2.0)
    check(x2, p2, 3, 2)

    # Config 3: stem-like anisotropic stride (1, 2, 2), 3 -> 8 channels.
    x3 = jax.random.normal(keys[4], (N, 3, D, H, W), jnp.float32)
    p3 = make_params(keys[5], 3, 8, (3, 3, 3), 2.0)
    check(x3, p3, (3, 3, 3), (1, 2, 2))

    print("KERNEL_OK")
</pallas_src>

<mosaic_0001>
module attributes {stable_mosaic.version = 11 : i64} {
  func.func @_fused_transform3d_kernel(%arg0: i32, %arg1: i32, %arg2: memref<1x3x8x512xbf16, #tpu.memory_space<vmem>>, %arg3: memref<27x8x8xbf16, #tpu.memory_space<vmem>>, %arg4: memref<8x1xf32, #tpu.memory_space<vmem>>, %arg5: memref<8x8xbf16, #tpu.memory_space<vmem>>, %arg6: memref<8x1xf32, #tpu.memory_space<vmem>>, %arg7: memref<1x8x512xbf16, #tpu.memory_space<vmem>>) attributes {dimension_semantics = [#tpu.dimension_semantics<parallel>, #tpu.dimension_semantics<parallel>], iteration_bounds = array<i64: 2, 2>, scalar_prefetch = 0 : i64, scratch_operands = 0 : i64, tpu.core_type = #tpu.core_type<tc>, window_params = [{transform_indices = @transform_0, window_bounds = array<i64: 1, 3, 8, 512>}, {pipeline_mode = #tpu.pipeline_mode<synchronous>, transform_indices = @transform_1, window_bounds = array<i64: 27, 8, 8>}, {pipeline_mode = #tpu.pipeline_mode<synchronous>, transform_indices = @transform_2, window_bounds = array<i64: 8, 1>}, {pipeline_mode = #tpu.pipeline_mode<synchronous>, transform_indices = @transform_3, window_bounds = array<i64: 8, 8>}, {pipeline_mode = #tpu.pipeline_mode<synchronous>, transform_indices = @transform_4, window_bounds = array<i64: 8, 1>}, {transform_indices = @transform_5, window_bounds = array<i64: 1, 8, 512>}]} {
    %c0_i32 = arith.constant 0 : i32
    %0 = arith.addi %arg1, %c0_i32 : i32
    %c0 = arith.constant 0 : index
    %1 = arith.index_cast %0 : i32 to index
    %c0_0 = arith.constant 0 : index
    %c0_1 = arith.constant 0 : index
    %2 = vector.load %arg2[%c0, %1, %c0_0, %c0_1] : memref<1x3x8x512xbf16, #tpu.memory_space<vmem>>, vector<1x1x8x512xbf16>
    %3 = vector.shape_cast %2 : vector<1x1x8x512xbf16> to vector<8x512xbf16>
    %c0_i32_2 = arith.constant 0 : i32
    %4 = arith.addi %arg1, %c0_i32_2 : i32
    %c1_i32 = arith.constant 1 : i32
    %5 = arith.addi %4, %c1_i32 : i32
    %c0_3 = arith.constant 0 : index
    %6 = arith.index_cast %5 : i32 to index
    %c0_4 = arith.constant 0 : index
    %c0_5 = arith.constant 0 : index
    %7 = vector.load %arg2[%c0_3, %6, %c0_4, %c0_5] : memref<1x3x8x512xbf16, #tpu.memory_space<vmem>>, vector<1x1x8x512xbf16>
    %8 = vector.shape_cast %7 : vector<1x1x8x512xbf16> to vector<8x512xbf16>
    %9 = tpu.concatenate %3, %8 in 1 : vector<8x512xbf16>, vector<8x512xbf16> -> vector<8x1024xbf16>
    %cst = arith.constant 0.000000e+00 : f32
    %10 = vector.broadcast %cst : f32 to vector<8x512xf32>
    %c0_6 = arith.constant 0 : index
    %c0_7 = arith.constant 0 : index
    %c0_8 = arith.constant 0 : index
    %11 = vector.load %arg3[%c0_6, %c0_7, %c0_8] : memref<27x8x8xbf16, #tpu.memory_space<vmem>>, vector<1x8x8xbf16>
    %12 = vector.shape_cast %11 : vector<1x8x8xbf16> to vector<8x8xbf16>
    %13 = vector.extract_strided_slice %9 {offsets = [0, 0], sizes = [8, 512], strides = [1, 1]} : vector<8x1024xbf16> to vector<8x512xbf16>
    %cst_9 = arith.constant dense<0.000000e+00> : vector<8x512xf32>
    %14 = tpu.matmul %12, %13, %cst_9 {dimension_numbers = #tpu.dot_dimension_numbers<[1], [0], [0], [1], [0, 0, 1, 1], [], []>} : vector<8x8xbf16>, vector<8x512xbf16>, vector<8x512xf32> -> vector<8x512xf32>
    %15 = arith.addf %10, %14 : vector<8x512xf32>
    %c1 = arith.constant 1 : index
    %c0_10 = arith.constant 0 : index
    %c0_11 = arith.constant 0 : index
    %16 = vector.load %arg3[%c1, %c0_10, %c0_11] : memref<27x8x8xbf16, #tpu.memory_space<vmem>>, vector<1x8x8xbf16>
    %17 = vector.shape_cast %16 : vector<1x8x8xbf16> to vector<8x8xbf16>
    %18 = vector.extract_strided_slice %9 {offsets = [0, 1], sizes = [8, 512], strides = [1, 1]} : vector<8x1024xbf16> to vector<8x512xbf16>
    %cst_12 = arith.constant dense<0.000000e+00> : vector<8x512xf32>
    %19 = tpu.matmul %17, %18, %cst_12 {dimension_numbers = #tpu.dot_dimension_numbers<[1], [0], [0], [1], [0, 0, 1, 1], [], []>} : vector<8x8xbf16>, vector<8x512xbf16>, vector<8x512xf32> -> vector<8x512xf32>
    %20 = arith.addf %15, %19 : vector<8x512xf32>
    %c2 = arith.constant 2 : index
    %c0_13 = arith.constant 0 : index
    %c0_14 = arith.constant 0 : index
    %21 = vector.load %arg3[%c2, %c0_13, %c0_14] : memref<27x8x8xbf16, #tpu.memory_space<vmem>>, vector<1x8x8xbf16>
    %22 = vector.shape_cast %21 : vector<1x8x8xbf16> to vector<8x8xbf16>
    %23 = vector.extract_strided_slice %9 {offsets = [0, 2], sizes = [8, 512], strides = [1, 1]} : vector<8x1024xbf16> to vector<8x512xbf16>
    %cst_15 = arith.constant dense<0.000000e+00> : vector<8x512xf32>
    %24 = tpu.matmul %22, %23, %cst_15 {dimension_numbers = #tpu.dot_dimension_numbers<[1], [0], [0], [1], [0, 0, 1, 1], [], []>} : vector<8x8xbf16>, vector<8x512xbf16>, vector<8x512xf32> -> vector<8x512xf32>
    %25 = arith.addf %20, %24 : vector<8x512xf32>
    %c3 = arith.constant 3 : index
    %c0_16 = arith.constant 0 : index
    %c0_17 = arith.constant 0 : index
    %26 = vector.load %arg3[%c3, %c0_16, %c0_17] : memref<27x8x8xbf16, #tpu.memory_space<vmem>>, vector<1x8x8xbf16>
    %27 = vector.shape_cast %26 : vector<1x8x8xbf16> to vector<8x8xbf16>
    %28 = vector.extract_strided_slice %9 {offsets = [0, 10], sizes = [8, 512], strides = [1, 1]} : vector<8x1024xbf16> to vector<8x512xbf16>
    %cst_18 = arith.constant dense<0.000000e+00> : vector<8x512xf32>
    %29 = tpu.matmul %27, %28, %cst_18 {dimension_numbers = #tpu.dot_dimension_numbers<[1], [0], [0], [1], [0, 0, 1, 1], [], []>} : vector<8x8xbf16>, vector<8x512xbf16>, vector<8x512xf32> -> vector<8x512xf32>
    %30 = arith.addf %25, %29 : vector<8x512xf32>
    %c4 = arith.constant 4 : index
    %c0_19 = arith.constant 0 : index
    %c0_20 = arith.constant 0 : index
    %31 = vector.load %arg3[%c4, %c0_19, %c0_20] : memref<27x8x8xbf16, #tpu.memory_space<vmem>>, vector<1x8x8xbf16>
    %32 = vector.shape_cast %31 : vector<1x8x8xbf16> to vector<8x8xbf16>
    %33 = vector.extract_strided_slice %9 {offsets = [0, 11], sizes = [8, 512], strides = [1, 1]} : vector<8x1024xbf16> to vector<8x512xbf16>
    %cst_21 = arith.constant dense<0.000000e+00> : vector<8x512xf32>
    %34 = tpu.matmul %32, %33, %cst_21 {dimension_numbers = #tpu.dot_dimension_numbers<[1], [0], [0], [1], [0, 0, 1, 1], [], []>} : vector<8x8xbf16>, vector<8x512xbf16>, vector<8x512xf32> -> vector<8x512xf32>
    %35 = arith.addf %30, %34 : vector<8x512xf32>
    %c5 = arith.constant 5 : index
    %c0_22 = arith.constant 0 : index
    %c0_23 = arith.constant 0 : index
    %36 = vector.load %arg3[%c5, %c0_22, %c0_23] : memref<27x8x8xbf16, #tpu.memory_space<vmem>>, vector<1x8x8xbf16>
    %37 = vector.shape_cast %36 : vector<1x8x8xbf16> to vector<8x8xbf16>
    %38 = vector.extract_strided_slice %9 {offsets = [0, 12], sizes = [8, 512], strides = [1, 1]} : vector<8x1024xbf16> to vector<8x512xbf16>
    %cst_24 = arith.constant dense<0.000000e+00> : vector<8x512xf32>
    %39 = tpu.matmul %37, %38, %cst_24 {dimension_numbers = #tpu.dot_dimension_numbers<[1], [0], [0], [1], [0, 0, 1, 1], [], []>} : vector<8x8xbf16>, vector<8x512xbf16>, vector<8x512xf32> -> vector<8x512xf32>
    %40 = arith.addf %35, %39 : vector<8x512xf32>
    %c6 = arith.constant 6 : index
    %c0_25 = arith.constant 0 : index
    %c0_26 = arith.constant 0 : index
    %41 = vector.load %arg3[%c6, %c0_25, %c0_26] : memref<27x8x8xbf16, #tpu.memory_space<vmem>>, vector<1x8x8xbf16>
    %42 = vector.shape_cast %41 : vector<1x8x8xbf16> to vector<8x8xbf16>
    %43 = vector.extract_strided_slice %9 {offsets = [0, 20], sizes = [8, 512], strides = [1, 1]} : vector<8x1024xbf16> to vector<8x512xbf16>
    %cst_27 = arith.constant dense<0.000000e+00> : vector<8x512xf32>
    %44 = tpu.matmul %42, %43, %cst_27 {dimension_numbers = #tpu.dot_dimension_numbers<[1], [0], [0], [1], [0, 0, 1, 1], [], []>} : vector<8x8xbf16>, vector<8x512xbf16>, vector<8x512xf32> -> vector<8x512xf32>
    %45 = arith.addf %40, %44 : vector<8x512xf32>
    %c7 = arith.constant 7 : index
    %c0_28 = arith.constant 0 : index
    %c0_29 = arith.constant 0 : index
    %46 = vector.load %arg3[%c7, %c0_28, %c0_29] : memref<27x8x8xbf16, #tpu.memory_space<vmem>>, vector<1x8x8xbf16>
    %47 = vector.shape_cast %46 : vector<1x8x8xbf16> to vector<8x8xbf16>
    %48 = vector.extract_strided_slice %9 {offsets = [0, 21], sizes = [8, 512], strides = [1, 1]} : vector<8x1024xbf16> to vector<8x512xbf16>
    %cst_30 = arith.constant dense<0.000000e+00> : vector<8x512xf32>
    %49 = tpu.matmul %47, %48, %cst_30 {dimension_numbers = #tpu.dot_dimension_numbers<[1], [0], [0], [1], [0, 0, 1, 1], [], []>} : vector<8x8xbf16>, vector<8x512xbf16>, vector<8x512xf32> -> vector<8x512xf32>
    %50 = arith.addf %45, %49 : vector<8x512xf32>
    %c8 = arith.constant 8 : index
    %c0_31 = arith.constant 0 : index
    %c0_32 = arith.constant 0 : index
    %51 = vector.load %arg3[%c8, %c0_31, %c0_32] : memref<27x8x8xbf16, #tpu.memory_space<vmem>>, vector<1x8x8xbf16>
    %52 = vector.shape_cast %51 : vector<1x8x8xbf16> to vector<8x8xbf16>
    %53 = vector.extract_strided_slice %9 {offsets = [0, 22], sizes = [8, 512], strides = [1, 1]} : vector<8x1024xbf16> to vector<8x512xbf16>
    %cst_33 = arith.constant dense<0.000000e+00> : vector<8x512xf32>
    %54 = tpu.matmul %52, %53, %cst_33 {dimension_numbers = #tpu.dot_dimension_numbers<[1], [0], [0], [1], [0, 0, 1, 1], [], []>} : vector<8x8xbf16>, vector<8x512xbf16>, vector<8x512xf32> -> vector<8x512xf32>
    %55 = arith.addf %50, %54 : vector<8x512xf32>
    %c9 = arith.constant 9 : index
    %c0_34 = arith.constant 0 : index
    %c0_35 = arith.constant 0 : index
    %56 = vector.load %arg3[%c9, %c0_34, %c0_35] : memref<27x8x8xbf16, #tpu.memory_space<vmem>>, vector<1x8x8xbf16>
    %57 = vector.shape_cast %56 : vector<1x8x8xbf16> to vector<8x8xbf16>
    %58 = vector.extract_strided_slice %9 {offsets = [0, 100], sizes = [8, 512], strides = [1, 1]} : vector<8x1024xbf16> to vector<8x512xbf16>
    %cst_36 = arith.constant dense<0.000000e+00> : vector<8x512xf32>
    %59 = tpu.matmul %57, %58, %cst_36 {dimension_numbers = #tpu.dot_dimension_numbers<[1], [0], [0], [1], [0, 0, 1, 1], [], []>} : vector<8x8xbf16>, vector<8x512xbf16>, vector<8x512xf32> -> vector<8x512xf32>
    %60 = arith.addf %55, %59 : vector<8x512xf32>
    %c10 = arith.constant 10 : index
    %c0_37 = arith.constant 0 : index
    %c0_38 = arith.constant 0 : index
    %61 = vector.load %arg3[%c10, %c0_37, %c0_38] : memref<27x8x8xbf16, #tpu.memory_space<vmem>>, vector<1x8x8xbf16>
    %62 = vector.shape_cast %61 : vector<1x8x8xbf16> to vector<8x8xbf16>
    %63 = vector.extract_strided_slice %9 {offsets = [0, 101], sizes = [8, 512], strides = [1, 1]} : vector<8x1024xbf16> to vector<8x512xbf16>
    %cst_39 = arith.constant dense<0.000000e+00> : vector<8x512xf32>
    %64 = tpu.matmul %62, %63, %cst_39 {dimension_numbers = #tpu.dot_dimension_numbers<[1], [0], [0], [1], [0, 0, 1, 1], [], []>} : vector<8x8xbf16>, vector<8x512xbf16>, vector<8x512xf32> -> vector<8x512xf32>
    %65 = arith.addf %60, %64 : vector<8x512xf32>
    %c11 = arith.constant 11 : index
    %c0_40 = arith.constant 0 : index
    %c0_41 = arith.constant 0 : index
    %66 = vector.load %arg3[%c11, %c0_40, %c0_41] : memref<27x8x8xbf16, #tpu.memory_space<vmem>>, vector<1x8x8xbf16>
    %67 = vector.shape_cast %66 : vector<1x8x8xbf16> to vector<8x8xbf16>
    %68 = vector.extract_strided_slice %9 {offsets = [0, 102], sizes = [8, 512], strides = [1, 1]} : vector<8x1024xbf16> to vector<8x512xbf16>
    %cst_42 = arith.constant dense<0.000000e+00> : vector<8x512xf32>
    %69 = tpu.matmul %67, %68, %cst_42 {dimension_numbers = #tpu.dot_dimension_numbers<[1], [0], [0], [1], [0, 0, 1, 1], [], []>} : vector<8x8xbf16>, vector<8x512xbf16>, vector<8x512xf32> -> vector<8x512xf32>
    %70 = arith.addf %65, %69 : vector<8x512xf32>
    %c12 = arith.constant 12 : index
    %c0_43 = arith.constant 0 : index
    %c0_44 = arith.constant 0 : index
    %71 = vector.load %arg3[%c12, %c0_43, %c0_44] : memref<27x8x8xbf16, #tpu.memory_space<vmem>>, vector<1x8x8xbf16>
    %72 = vector.shape_cast %71 : vector<1x8x8xbf16> to vector<8x8xbf16>
    %73 = vector.extract_strided_slice %9 {offsets = [0, 110], sizes = [8, 512], strides = [1, 1]} : vector<8x1024xbf16> to vector<8x512xbf16>
    %cst_45 = arith.constant dense<0.000000e+00> : vector<8x512xf32>
    %74 = tpu.matmul %72, %73, %cst_45 {dimension_numbers = #tpu.dot_dimension_numbers<[1], [0], [0], [1], [0, 0, 1, 1], [], []>} : vector<8x8xbf16>, vector<8x512xbf16>, vector<8x512xf32> -> vector<8x512xf32>
    %75 = arith.addf %70, %74 : vector<8x512xf32>
    %c13 = arith.constant 13 : index
    %c0_46 = arith.constant 0 : index
    %c0_47 = arith.constant 0 : index
    %76 = vector.load %arg3[%c13, %c0_46, %c0_47] : memref<27x8x8xbf16, #tpu.memory_space<vmem>>, vector<1x8x8xbf16>
    %77 = vector.shape_cast %76 : vector<1x8x8xbf16> to vector<8x8xbf16>
    %78 = vector.extract_strided_slice %9 {offsets = [0, 111], sizes = [8, 512], strides = [1, 1]} : vector<8x1024xbf16> to vector<8x512xbf16>
    %cst_48 = arith.constant dense<0.000000e+00> : vector<8x512xf32>
    %79 = tpu.matmul %77, %78, %cst_48 {dimension_numbers = #tpu.dot_dimension_numbers<[1], [0], [0], [1], [0, 0, 1, 1], [], []>} : vector<8x8xbf16>, vector<8x512xbf16>, vector<8x512xf32> -> vector<8x512xf32>
    %80 = arith.addf %75, %79 : vector<8x512xf32>
    %c14 = arith.constant 14 : index
    %c0_49 = arith.constant 0 : index
    %c0_50 = arith.constant 0 : index
    %81 = vector.load %arg3[%c14, %c0_49, %c0_50] : memref<27x8x8xbf16, #tpu.memory_space<vmem>>, vector<1x8x8xbf16>
    %82 = vector.shape_cast %81 : vector<1x8x8xbf16> to vector<8x8xbf16>
    %83 = vector.extract_strided_slice %9 {offsets = [0, 112], sizes = [8, 512], strides = [1, 1]} : vector<8x1024xbf16> to vector<8x512xbf16>
    %cst_51 = arith.constant dense<0.000000e+00> : vector<8x512xf32>
    %84 = tpu.matmul %82, %83, %cst_51 {dimension_numbers = #tpu.dot_dimension_numbers<[1], [0], [0], [1], [0, 0, 1, 1], [], []>} : vector<8x8xbf16>, vector<8x512xbf16>, vector<8x512xf32> -> vector<8x512xf32>
    %85 = arith.addf %80, %84 : vector<8x512xf32>
    %c15 = arith.constant 15 : index
    %c0_52 = arith.constant 0 : index
    %c0_53 = arith.constant 0 : index
    %86 = vector.load %arg3[%c15, %c0_52, %c0_53] : memref<27x8x8xbf16, #tpu.memory_space<vmem>>, vector<1x8x8xbf16>
    %87 = vector.shape_cast %86 : vector<1x8x8xbf16> to vector<8x8xbf16>
    %88 = vector.extract_strided_slice %9 {offsets = [0, 120], sizes = [8, 512], strides = [1, 1]} : vector<8x1024xbf16> to vector<8x512xbf16>
    %cst_54 = arith.constant dense<0.000000e+00> : vector<8x512xf32>
    %89 = tpu.matmul %87, %88, %cst_54 {dimension_numbers = #tpu.dot_dimension_numbers<[1], [0], [0], [1], [0, 0, 1, 1], [], []>} : vector<8x8xbf16>, vector<8x512xbf16>, vector<8x512xf32> -> vector<8x512xf32>
    %90 = arith.addf %85, %89 : vector<8x512xf32>
    %c16 = arith.constant 16 : index
    %c0_55 = arith.constant 0 : index
    %c0_56 = arith.constant 0 : index
    %91 = vector.load %arg3[%c16, %c0_55, %c0_56] : memref<27x8x8xbf16, #tpu.memory_space<vmem>>, vector<1x8x8xbf16>
    %92 = vector.shape_cast %91 : vector<1x8x8xbf16> to vector<8x8xbf16>
    %93 = vector.extract_strided_slice %9 {offsets = [0, 121], sizes = [8, 512], strides = [1, 1]} : vector<8x1024xbf16> to vector<8x512xbf16>
    %cst_57 = arith.constant dense<0.000000e+00> : vector<8x512xf32>
    %94 = tpu.matmul %92, %93, %cst_57 {dimension_numbers = #tpu.dot_dimension_numbers<[1], [0], [0], [1], [0, 0, 1, 1], [], []>} : vector<8x8xbf16>, vector<8x512xbf16>, vector<8x512xf32> -> vector<8x512xf32>
    %95 = arith.addf %90, %94 : vector<8x512xf32>
    %c17 = arith.constant 17 : index
    %c0_58 = arith.constant 0 : index
    %c0_59 = arith.constant 0 : index
    %96 = vector.load %arg3[%c17, %c0_58, %c0_59] : memref<27x8x8xbf16, #tpu.memory_space<vmem>>, vector<1x8x8xbf16>
    %97 = vector.shape_cast %96 : vector<1x8x8xbf16> to vector<8x8xbf16>
    %98 = vector.extract_strided_slice %9 {offsets = [0, 122], sizes = [8, 512], strides = [1, 1]} : vector<8x1024xbf16> to vector<8x512xbf16>
    %cst_60 = arith.constant dense<0.000000e+00> : vector<8x512xf32>
    %99 = tpu.matmul %97, %98, %cst_60 {dimension_numbers = #tpu.dot_dimension_numbers<[1], [0], [0], [1], [0, 0, 1, 1], [], []>} : vector<8x8xbf16>, vector<8x512xbf16>, vector<8x512xf32> -> vector<8x512xf32>
    %100 = arith.addf %95, %99 : vector<8x512xf32>
    %c18 = arith.constant 18 : index
    %c0_61 = arith.constant 0 : index
    %c0_62 = arith.constant 0 : index
    %101 = vector.load %arg3[%c18, %c0_61, %c0_62] : memref<27x8x8xbf16, #tpu.memory_space<vmem>>, vector<1x8x8xbf16>
    %102 = vector.shape_cast %101 : vector<1x8x8xbf16> to vector<8x8xbf16>
    %103 = vector.extract_strided_slice %9 {offsets = [0, 200], sizes = [8, 512], strides = [1, 1]} : vector<8x1024xbf16> to vector<8x512xbf16>
    %cst_63 = arith.constant dense<0.000000e+00> : vector<8x512xf32>
    %104 = tpu.matmul %102, %103, %cst_63 {dimension_numbers = #tpu.dot_dimension_numbers<[1], [0], [0], [1], [0, 0, 1, 1], [], []>} : vector<8x8xbf16>, vector<8x512xbf16>, vector<8x512xf32> -> vector<8x512xf32>
    %105 = arith.addf %100, %104 : vector<8x512xf32>
    %c19 = arith.constant 19 : index
    %c0_64 = arith.constant 0 : index
    %c0_65 = arith.constant 0 : index
    %106 = vector.load %arg3[%c19, %c0_64, %c0_65] : memref<27x8x8xbf16, #tpu.memory_space<vmem>>, vector<1x8x8xbf16>
    %107 = vector.shape_cast %106 : vector<1x8x8xbf16> to vector<8x8xbf16>
    %108 = vector.extract_strided_slice %9 {offsets = [0, 201], sizes = [8, 512], strides = [1, 1]} : vector<8x1024xbf16> to vector<8x512xbf16>
    %cst_66 = arith.constant dense<0.000000e+00> : vector<8x512xf32>
    %109 = tpu.matmul %107, %108, %cst_66 {dimension_numbers = #tpu.dot_dimension_numbers<[1], [0], [0], [1], [0, 0, 1, 1], [], []>} : vector<8x8xbf16>, vector<8x512xbf16>, vector<8x512xf32> -> vector<8x512xf32>
    %110 = arith.addf %105, %109 : vector<8x512xf32>
    %c20 = arith.constant 20 : index
    %c0_67 = arith.constant 0 : index
    %c0_68 = arith.constant 0 : index
    %111 = vector.load %arg3[%c20, %c0_67, %c0_68] : memref<27x8x8xbf16, #tpu.memory_space<vmem>>, vector<1x8x8xbf16>
    %112 = vector.shape_cast %111 : vector<1x8x8xbf16> to vector<8x8xbf16>
    %113 = vector.extract_strided_slice %9 {offsets = [0, 202], sizes = [8, 512], strides = [1, 1]} : vector<8x1024xbf16> to vector<8x512xbf16>
    %cst_69 = arith.constant dense<0.000000e+00> : vector<8x512xf32>
    %114 = tpu.matmul %112, %113, %cst_69 {dimension_numbers = #tpu.dot_dimension_numbers<[1], [0], [0], [1], [0, 0, 1, 1], [], []>} : vector<8x8xbf16>, vector<8x512xbf16>, vector<8x512xf32> -> vector<8x512xf32>
    %115 = arith.addf %110, %114 : vector<8x512xf32>
    %c21 = arith.constant 21 : index
    %c0_70 = arith.constant 0 : index
    %c0_71 = arith.constant 0 : index
    %116 = vector.load %arg3[%c21, %c0_70, %c0_71] : memref<27x8x8xbf16, #tpu.memory_space<vmem>>, vector<1x8x8xbf16>
    %117 = vector.shape_cast %116 : vector<1x8x8xbf16> to vector<8x8xbf16>
    %118 = vector.extract_strided_slice %9 {offsets = [0, 210], sizes = [8, 512], strides = [1, 1]} : vector<8x1024xbf16> to vector<8x512xbf16>
    %cst_72 = arith.constant dense<0.000000e+00> : vector<8x512xf32>
    %119 = tpu.matmul %117, %118, %cst_72 {dimension_numbers = #tpu.dot_dimension_numbers<[1], [0], [0], [1], [0, 0, 1, 1], [], []>} : vector<8x8xbf16>, vector<8x512xbf16>, vector<8x512xf32> -> vector<8x512xf32>
    %120 = arith.addf %115, %119 : vector<8x512xf32>
    %c22 = arith.constant 22 : index
    %c0_73 = arith.constant 0 : index
    %c0_74 = arith.constant 0 : index
    %121 = vector.load %arg3[%c22, %c0_73, %c0_74] : memref<27x8x8xbf16, #tpu.memory_space<vmem>>, vector<1x8x8xbf16>
    %122 = vector.shape_cast %121 : vector<1x8x8xbf16> to vector<8x8xbf16>
    %123 = vector.extract_strided_slice %9 {offsets = [0, 211], sizes = [8, 512], strides = [1, 1]} : vector<8x1024xbf16> to vector<8x512xbf16>
    %cst_75 = arith.constant dense<0.000000e+00> : vector<8x512xf32>
    %124 = tpu.matmul %122, %123, %cst_75 {dimension_numbers = #tpu.dot_dimension_numbers<[1], [0], [0], [1], [0, 0, 1, 1], [], []>} : vector<8x8xbf16>, vector<8x512xbf16>, vector<8x512xf32> -> vector<8x512xf32>
    %125 = arith.addf %120, %124 : vector<8x512xf32>
    %c23 = arith.constant 23 : index
    %c0_76 = arith.constant 0 : index
    %c0_77 = arith.constant 0 : index
    %126 = vector.load %arg3[%c23, %c0_76, %c0_77] : memref<27x8x8xbf16, #tpu.memory_space<vmem>>, vector<1x8x8xbf16>
    %127 = vector.shape_cast %126 : vector<1x8x8xbf16> to vector<8x8xbf16>
    %128 = vector.extract_strided_slice %9 {offsets = [0, 212], sizes = [8, 512], strides = [1, 1]} : vector<8x1024xbf16> to vector<8x512xbf16>
    %cst_78 = arith.constant dense<0.000000e+00> : vector<8x512xf32>
    %129 = tpu.matmul %127, %128, %cst_78 {dimension_numbers = #tpu.dot_dimension_numbers<[1], [0], [0], [1], [0, 0, 1, 1], [], []>} : vector<8x8xbf16>, vector<8x512xbf16>, vector<8x512xf32> -> vector<8x512xf32>
    %130 = arith.addf %125, %129 : vector<8x512xf32>
    %c24 = arith.constant 24 : index
    %c0_79 = arith.constant 0 : index
    %c0_80 = arith.constant 0 : index
    %131 = vector.load %arg3[%c24, %c0_79, %c0_80] : memref<27x8x8xbf16, #tpu.memory_space<vmem>>, vector<1x8x8xbf16>
    %132 = vector.shape_cast %131 : vector<1x8x8xbf16> to vector<8x8xbf16>
    %133 = vector.extract_strided_slice %9 {offsets = [0, 220], sizes = [8, 512], strides = [1, 1]} : vector<8x1024xbf16> to vector<8x512xbf16>
    %cst_81 = arith.constant dense<0.000000e+00> : vector<8x512xf32>
    %134 = tpu.matmul %132, %133, %cst_81 {dimension_numbers = #tpu.dot_dimension_numbers<[1], [0], [0], [1], [0, 0, 1, 1], [], []>} : vector<8x8xbf16>, vector<8x512xbf16>, vector<8x512xf32> -> vector<8x512xf32>
    %135 = arith.addf %130, %134 : vector<8x512xf32>
    %c25 = arith.constant 25 : index
    %c0_82 = arith.constant 0 : index
    %c0_83 = arith.constant 0 : index
    %136 = vector.load %arg3[%c25, %c0_82, %c0_83] : memref<27x8x8xbf16, #tpu.memory_space<vmem>>, vector<1x8x8xbf16>
    %137 = vector.shape_cast %136 : vector<1x8x8xbf16> to vector<8x8xbf16>
    %138 = vector.extract_strided_slice %9 {offsets = [0, 221], sizes = [8, 512], strides = [1, 1]} : vector<8x1024xbf16> to vector<8x512xbf16>
    %cst_84 = arith.constant dense<0.000000e+00> : vector<8x512xf32>
    %139 = tpu.matmul %137, %138, %cst_84 {dimension_numbers = #tpu.dot_dimension_numbers<[1], [0], [0], [1], [0, 0, 1, 1], [], []>} : vector<8x8xbf16>, vector<8x512xbf16>, vector<8x512xf32> -> vector<8x512xf32>
    %140 = arith.addf %135, %139 : vector<8x512xf32>
    %c26 = arith.constant 26 : index
    %c0_85 = arith.constant 0 : index
    %c0_86 = arith.constant 0 : index
    %141 = vector.load %arg3[%c26, %c0_85, %c0_86] : memref<27x8x8xbf16, #tpu.memory_space<vmem>>, vector<1x8x8xbf16>
    %142 = vector.shape_cast %141 : vector<1x8x8xbf16> to vector<8x8xbf16>
    %143 = vector.extract_strided_slice %9 {offsets = [0, 222], sizes = [8, 512], strides = [1, 1]} : vector<8x1024xbf16> to vector<8x512xbf16>
    %cst_87 = arith.constant dense<0.000000e+00> : vector<8x512xf32>
    %144 = tpu.matmul %142, %143, %cst_87 {dimension_numbers = #tpu.dot_dimension_numbers<[1], [0], [0], [1], [0, 0, 1, 1], [], []>} : vector<8x8xbf16>, vector<8x512xbf16>, vector<8x512xf32> -> vector<8x512xf32>
    %145 = arith.addf %140, %144 : vector<8x512xf32>
    %c0_88 = arith.constant 0 : index
    %c0_89 = arith.constant 0 : index
    %146 = vector.load %arg4[%c0_88, %c0_89] : memref<8x1xf32, #tpu.memory_space<vmem>>, vector<8x1xf32>
    %147 = vector.broadcast %146 : vector<8x1xf32> to vector<8x512xf32>
    %148 = arith.addf %145, %147 : vector<8x512xf32>
    %cst_90 = arith.constant 0.000000e+00 : f32
    %149 = vector.broadcast %cst_90 : f32 to vector<8x512xf32>
    %150 = arith.maximumf %148, %149 : vector<8x512xf32>
    %c0_91 = arith.constant 0 : index
    %c0_92 = arith.constant 0 : index
    %151 = vector.load %arg5[%c0_91, %c0_92] : memref<8x8xbf16, #tpu.memory_space<vmem>>, vector<8x8xbf16>
    %152 = arith.truncf %150 : vector<8x512xf32> to vector<8x512xbf16>
    %cst_93 = arith.constant dense<0.000000e+00> : vector<8x512xf32>
    %153 = tpu.matmul %151, %152, %cst_93 {dimension_numbers = #tpu.dot_dimension_numbers<[1], [0], [0], [1], [0, 0, 1, 1], [], []>} : vector<8x8xbf16>, vector<8x512xbf16>, vector<8x512xf32> -> vector<8x512xf32>
    %c0_94 = arith.constant 0 : index
    %c0_95 = arith.constant 0 : index
    %154 = vector.load %arg6[%c0_94, %c0_95] : memref<8x1xf32, #tpu.memory_space<vmem>>, vector<8x1xf32>
    %155 = vector.broadcast %154 : vector<8x1xf32> to vector<8x512xf32>
    %156 = arith.addf %153, %155 : vector<8x512xf32>
    %157 = vector.extract_strided_slice %9 {offsets = [0, 111], sizes = [8, 512], strides = [1, 1]} : vector<8x1024xbf16> to vector<8x512xbf16>
    %158 = arith.extf %157 : vector<8x512xbf16> to vector<8x512xf32>
    %159 = arith.addf %156, %158 : vector<8x512xf32>
    %160 = arith.truncf %159 : vector<8x512xf32> to vector<8x512xbf16>
    %c0_96 = arith.constant 0 : index
    %c0_97 = arith.constant 0 : index
    %c0_98 = arith.constant 0 : index
    %161 = vector.load %arg7[%c0_96, %c0_97, %c0_98] : memref<1x8x512xbf16, #tpu.memory_space<vmem>>, vector<1x8x512xbf16>
    %162 = vector.shape_cast %161 : vector<1x8x512xbf16> to vector<8x512xbf16>
    %163 = vector.shape_cast %160 : vector<8x512xbf16> to vector<1x8x512xbf16>
    tpu.vector_store %arg7[%c0_96, %c0_97, %c0_98], %163 {strides = array<i32>} : memref<1x8x512xbf16, #tpu.memory_space<vmem>>, vector<1x8x512xbf16>,
    return
  }
  func.func @transform_0(%arg0: i32, %arg1: i32) -> (i32, i32, i32, i32) {
    %c0_i32 = arith.constant 0 : i32
    %c0_i32_0 = arith.constant 0 : i32
    %c0_i32_1 = arith.constant 0 : i32
    %c0_i32_2 = arith.constant 0 : i32
    return %arg0, %c0_i32, %c0_i32_0, %c0_i32_1 : i32, i32, i32, i32
  }
  func.func @transform_1(%arg0: i32, %arg1: i32) -> (i32, i32, i32) {
    %c0_i32 = arith.constant 0 : i32
    %c0_i32_0 = arith.constant 0 : i32
    %c0_i32_1 = arith.constant 0 : i32
    %c0_i32_2 = arith.constant 0 : i32
    return %c0_i32, %c0_i32_0, %c0_i32_1 : i32, i32, i32
  }
  func.func @transform_2(%arg0: i32, %arg1: i32) -> (i32, i32) {
    %c0_i32 = arith.constant 0 : i32
    %c0_i32_0 = arith.constant 0 : i32
    %c0_i32_1 = arith.constant 0 : i32
    return %c0_i32, %c0_i32_0 : i32, i32
  }
  func.func @transform_3(%arg0: i32, %arg1: i32) -> (i32, i32) {
    %c0_i32 = arith.constant 0 : i32
    %c0_i32_0 = arith.constant 0 : i32
    %c0_i32_1 = arith.constant 0 : i32
    return %c0_i32, %c0_i32_0 : i32, i32
  }
  func.func @transform_4(%arg0: i32, %arg1: i32) -> (i32, i32) {
    %c0_i32 = arith.constant 0 : i32
    %c0_i32_0 = arith.constant 0 : i32
    %c0_i32_1 = arith.constant 0 : i32
    return %c0_i32, %c0_i32_0 : i32, i32
  }
  func.func @transform_5(%arg0: i32, %arg1: i32) -> (i32, i32, i32) {
    %c0_i32 = arith.constant 0 : i32
    %c0_i32_0 = arith.constant 0 : i32
    return %arg0, %c0_i32, %arg1 : i32, i32, i32
  }
}

</mosaic_0001>

<llo_original>
// kernel: tpu_custom_call.1
$region0: #{tpu_custom_call.1}
  #allocation0 [shape = 'u32[]', space=smem, size = 0x4, offset = 0x4, fixed_abs, tag = 'smem constant byte address 0x4 - core index']
  #allocation1 [shape = 'u32[144,128]{1,0:T(1,128)}', space=vmem, size = 0x12000, scoped, tag = 'internal scratch']
  %s0 = inlined_call_operand.vmem [shape: bf16[2,3,8,512], index: 0, kind: input, shape index: {}]
  %s1 = inlined_call_operand.vmem [shape: bf16[27,8,8], index: 1, kind: input, shape index: {}]
  %s2 = inlined_call_operand.vmem [shape: f32[8,1], index: 2, kind: input, shape index: {}]
  %s3 = inlined_call_operand.vmem [shape: bf16[8,8], index: 3, kind: input, shape index: {}]
  %s4 = inlined_call_operand.vmem [shape: f32[8,1], index: 4, kind: input, shape index: {}]
  %s5 = inlined_call_operand.hbm [shape: bf16[2,8,1024], index: 5, kind: output, shape index: {}]
  %s6 = sld [smem:[#allocation0]]
  $region53: #{tpu_custom_call.1} parent=0
    _
  %s8 = ssub.s32 1, %s6
  %s9 = scalar_select 0, %s8, %s6
  $region1: #{tpu_custom_call.1} parent=0
    #allocation2 [shape = 'u8[16384]{0}', space=vmem, size = 0x4000, scoped, tag = 'output window, operand 0']
    #allocation3 [shape = 's32[2]{0}', space=sflag, size = 0x8, scoped, tag = 'scoped memory for tpu_custom_call.1']
    %10 = vsyncpa [#allocation3], 0
    %s11 = scalar_lea.sflag [#allocation3], 1
    %12 = vsyncpa %s11, 0
    loop: start=0, step=1, limit=6
    $region2: #{tpu_custom_call.1} parent=1 // loop_pre_header
      _
    $region3: #{tpu_custom_call.1} parent=1 // loop_header
      %s14 = sphi 0, %s18
      %p15 = scmp.ge.s32.totalorder %s14, 6
      %s21 = sphi 0, %s33
      %s22 = sphi 0, %s29
      %s23 = sphi 0, %s21
      %s24 = sphi 0, %s22
      %s25 = sphi 0, %s23
      %s26 = sphi 0, %s24
      %s36 = sphi 0, %s38
      %s39 = sphi 0, %s36
      %s40 = sphi 0, %s39
      %s56 = sphi 0, %s40
      %s60 = sphi 0, %s60
      %s62 = sphi 0, %s60
      %s63 = sphi 0, %s62
      %s77 = sphi 0, %s63
      %s81 = sphi 0, %s81
      %s83 = sphi 0, %s81
      %s84 = sphi 0, %s83
      %s98 = sphi 0, %s84
      %s102 = sphi 0, %s102
      %s104 = sphi 0, %s102
      %s105 = sphi 0, %s104
      %s119 = sphi 0, %s105
      %s123 = sphi 0, %s123
      %s125 = sphi 0, %s123
      %s126 = sphi 0, %s125
      %s140 = sphi 0, %s126
      %s148 = sphi 0, %s150
      %s151 = sphi 0, %s148
      %s152 = sphi 0, %s151
      %s168 = sphi 0, %s152
    $region4: #{tpu_custom_call.1} parent=1 // loop_header_branch
      %17 = sbr.rel (%p15) target = $region8
    $region5: #{tpu_custom_call.1} parent=1 // loop_body
      %s19 = ssub.s32 %s14, 1
      %s20 = ssub.s32 %s14, 2
      %s27 = sadd.s32 1, %s22
      %p28 = scmp.ge.s32.totalorder %s27, 2
      %s29 = scalar_select %p28, 0, %s27
      %s30 = sadd.s32 1, %s21
      %s31 = scalar_select %p28, %s30, %s21
      %p32 = scmp.ge.s32.totalorder %s31, 2
      %s33 = scalar_select %p32, 0, %s31
      %s34 = ssub.s32 %s21, %s33
      %p35 = scmp.eq.s32.totalorder %s34, 0
      %s37 = sadd.s32 %s36, 1
      %s38 = scalar_select %p35, %s36, %s37
      %p41 = pneg %p35
      %p42 = scmp.eq.s32.totalorder %s14, 3
      %p43 = por %p41, %p42
      %p44 = scmp.ne.s32.totalorder %s36, %s39
      %p45 = scmp.eq.s32.totalorder %s14, 0
      %p46 = por %p44, %p45
      %p47 = scmp.ne.s32.totalorder %s36, %s39
      %p48 = scmp.eq.s32.totalorder %s19, 3
      %p49 = por %p47, %p48
      %p50 = scmp.ne.s32.totalorder %s39, %s40
      %p51 = scmp.eq.s32.totalorder %s19, 0
      %p52 = por %p50, %p51
      %p53 = scmp.ne.s32.totalorder %s39, %s40
      %p54 = scmp.eq.s32.totalorder %s20, 3
      %p55 = por %p53, %p54
      %p57 = scmp.ne.s32.totalorder %s40, %s56
      %p58 = scmp.eq.s32.totalorder %s20, 0
      %p59 = por %p57, %p58
      %s61 = sadd.s32 %s60, 1
      %p64 = scmp.eq.s32.totalorder %s14, 3
      %p65 = scmp.ne.s32.totalorder %s60, %s62
      %p66 = scmp.eq.s32.totalorder %s14, 0
      %p67 = por %p65, %p66
      %p68 = scmp.ne.s32.totalorder %s60, %s62
      %p69 = scmp.eq.s32.totalorder %s19, 3
      %p70 = por %p68, %p69
      %p71 = scmp.ne.s32.totalorder %s62, %s63
      %p72 = scmp.eq.s32.totalorder %s19, 0
      %p73 = por %p71, %p72
      %p74 = scmp.ne.s32.totalorder %s62, %s63
      %p75 = scmp.eq.s32.totalorder %s20, 3
      %p76 = por %p74, %p75
      %p78 = scmp.ne.s32.totalorder %s63, %s77
      %p79 = scmp.eq.s32.totalorder %s20, 0
      %p80 = por %p78, %p79
      %s82 = sadd.s32 %s81, 1
      %p85 = scmp.eq.s32.totalorder %s14, 3
      %p86 = scmp.ne.s32.totalorder %s81, %s83
      %p87 = scmp.eq.s32.totalorder %s14, 0
      %p88 = por %p86, %p87
      %p89 = scmp.ne.s32.totalorder %s81, %s83
      %p90 = scmp.eq.s32.totalorder %s19, 3
      %p91 = por %p89, %p90
      %p92 = scmp.ne.s32.totalorder %s83, %s84
      %p93 = scmp.eq.s32.totalorder %s19, 0
      %p94 = por %p92, %p93
      %p95 = scmp.ne.s32.totalorder %s83, %s84
      %p96 = scmp.eq.s32.totalorder %s20, 3
      %p97 = por %p95, %p96
      %p99 = scmp.ne.s32.totalorder %s84, %s98
      %p100 = scmp.eq.s32.totalorder %s20, 0
      %p101 = por %p99, %p100
      %s103 = sadd.s32 %s102, 1
      %p106 = scmp.eq.s32.totalorder %s14, 3
      %p107 = scmp.ne.s32.totalorder %s102, %s104
      %p108 = scmp.eq.s32.totalorder %s14, 0
      %p109 = por %p107, %p108
      %p110 = scmp.ne.s32.totalorder %s102, %s104
      %p111 = scmp.eq.s32.totalorder %s19, 3
      %p112 = por %p110, %p111
      %p113 = scmp.ne.s32.totalorder %s104, %s105
      %p114 = scmp.eq.s32.totalorder %s19, 0
      %p115 = por %p113, %p114
      %p116 = scmp.ne.s32.totalorder %s104, %s105
      %p117 = scmp.eq.s32.totalorder %s20, 3
      %p118 = por %p116, %p117
      %p120 = scmp.ne.s32.totalorder %s105, %s119
      %p121 = scmp.eq.s32.totalorder %s20, 0
      %p122 = por %p120, %p121
      %s124 = sadd.s32 %s123, 1
      %p127 = scmp.eq.s32.totalorder %s14, 3
      %p128 = scmp.ne.s32.totalorder %s123, %s125
      %p129 = scmp.eq.s32.totalorder %s14, 0
      %p130 = por %p128, %p129
      %p131 = scmp.ne.s32.totalorder %s123, %s125
      %p132 = scmp.eq.s32.totalorder %s19, 3
      %p133 = por %p131, %p132
      %p134 = scmp.ne.s32.totalorder %s125, %s126
      %p135 = scmp.eq.s32.totalorder %s19, 0
      %p136 = por %p134, %p135
      %p137 = scmp.ne.s32.totalorder %s125, %s126
      %p138 = scmp.eq.s32.totalorder %s20, 3
      %p139 = por %p137, %p138
      %p141 = scmp.ne.s32.totalorder %s126, %s140
      %p142 = scmp.eq.s32.totalorder %s20, 0
      %p143 = por %p141, %p142
      %s144 = ssub.s32 %s21, %s33
      %s145 = ssub.s32 %s22, %s29
      %s146 = sor.u32 %s144, %s145
      %p147 = scmp.eq.s32.totalorder %s146, 0
      %s149 = sadd.s32 %s148, 1
      %s150 = scalar_select %p147, %s148, %s149
      %p153 = pneg %p147
      %p154 = scmp.eq.s32.totalorder %s14, 3
      %p155 = por %p153, %p154
      %p156 = scmp.ne.s32.totalorder %s148, %s151
      %p157 = scmp.eq.s32.totalorder %s14, 0
      %p158 = por %p156, %p157
      %p159 = scmp.ne.s32.totalorder %s148, %s151
      %p160 = scmp.eq.s32.totalorder %s19, 3
      %p161 = por %p159, %p160
      %p162 = scmp.ne.s32.totalorder %s151, %s152
      %p163 = scmp.eq.s32.totalorder %s19, 0
      %p164 = por %p162, %p163
      %p165 = scmp.ne.s32.totalorder %s151, %s152
      %p166 = scmp.eq.s32.totalorder %s20, 3
      %p167 = por %p165, %p166
      %p169 = scmp.ne.s32.totalorder %s152, %s168
      %p170 = scmp.eq.s32.totalorder %s20, 0
      %p171 = por %p169, %p170
      %p172 = scmp.le.s32.totalorder 1, %s14
      %p173 = scmp.lt.s32.totalorder %s14, 5
      %p174 = pnand %p172, %p173
      %p175 = pneg %p174
      // Predicated region
      $region9: #{tpu_custom_call.1} parent=5 // pred_check
        _
      $region10: #{tpu_custom_call.1} parent=5 // pred_check_branch
        %177 = sbr.rel (%p174) target = $region12
      $region11: #{tpu_custom_call.1} parent=5 // pred_region
        %s178 = ssub.s32 %s14, 1
        // Predicated region
        $region13: #{tpu_custom_call.1} parent=11 // pred_check
          %p179 = pneg %p73
        $region14: #{tpu_custom_call.1} parent=11 // pred_check_branch
          %181 = sbr.rel (%p179) target = $region16
        $region15: #{tpu_custom_call.1} parent=11 // pred_region
          _
        $region16: #{tpu_custom_call.1} parent=11 // pred_fallthru
          _
        // Predicated region
        $region17: #{tpu_custom_call.1} parent=11 // pred_check
          %p182 = pneg %p94
        $region18: #{tpu_custom_call.1} parent=11 // pred_check_branch
          %184 = sbr.rel (%p182) target = $region20
        $region19: #{tpu_custom_call.1} parent=11 // pred_region
          _
        $region20: #{tpu_custom_call.1} parent=11 // pred_fallthru
          _
        // Predicated region
        $region21: #{tpu_custom_call.1} parent=11 // pred_check
          %p185 = pneg %p115
        $region22: #{tpu_custom_call.1} parent=11 // pred_check_branch
          %187 = sbr.rel (%p185) target = $region24
        $region23: #{tpu_custom_call.1} parent=11 // pred_region
          _
        $region24: #{tpu_custom_call.1} parent=11 // pred_fallthru
          _
        // Predicated region
        $region25: #{tpu_custom_call.1} parent=11 // pred_check
          %p188 = pneg %p136
        $region26: #{tpu_custom_call.1} parent=11 // pred_check_branch
          %190 = sbr.rel (%p188) target = $region28
        $region27: #{tpu_custom_call.1} parent=11 // pred_region
          _
        $region28: #{tpu_custom_call.1} parent=11 // pred_fallthru
          _
      $region12: #{tpu_custom_call.1} parent=5 // pred_fallthru
        _
      %p191 = scmp.lt.s32.totalorder %s14, 4
      // Predicated region
      $region29: #{tpu_custom_call.1} parent=5 // pred_check
        %p192 = pneg %p191
      $region30: #{tpu_custom_call.1} parent=5 // pred_check_branch
        %194 = sbr.rel (%p192) target = $region32
      $region31: #{tpu_custom_call.1} parent=5 // pred_region
        // Predicated region
        $region33: #{tpu_custom_call.1} parent=31 // pred_check
          %p195 = pneg %p46
        $region34: #{tpu_custom_call.1} parent=31 // pred_check_branch
          %197 = sbr.rel (%p195) target = $region36
        $region35: #{tpu_custom_call.1} parent=31 // pred_region
          %p198 = scmp.lt.s32.totalorder %s21, 1
          %s199 = scalar_select %p198, %s21, 1
          %s200 = smul.addr %s199, 12
          %s201 = smul.addr %s200, 4
          %s202 = scalar_lea.vmem %s0, %s201
        $region36: #{tpu_custom_call.1} parent=31 // pred_fallthru
          _
      $region32: #{tpu_custom_call.1} parent=5 // pred_fallthru
        _
      %p203 = scmp.le.s32.totalorder 1, %s14
      %p204 = scmp.lt.s32.totalorder %s14, 5
      %p205 = pnand %p203, %p204
      %p206 = pneg %p205
      // Predicated region
      $region37: #{tpu_custom_call.1} parent=5 // pred_check
        _
      $region38: #{tpu_custom_call.1} parent=5 // pred_check_branch
        %208 = sbr.rel (%p205) target = $region40
      $region39: #{tpu_custom_call.1} parent=5 // pred_region
        %s209 = ssub.s32 %s14, 1
        %p210 = scmp.lt.s32.totalorder %s23, 1
        %s211 = scalar_select %p210, %s23, 1
        %s212 = smul.addr %s211, 12
        %s213 = smul.addr %s212, 4
        %s214 = scalar_lea.vmem %s0, %s213
        %p215 = pneg %p52
        %p216 = pneg %p49
        %p217 = pneg %p73
        %p218 = pneg %p70
        %p219 = pneg %p94
        %p220 = pneg %p91
        %p221 = pneg %p115
        %p222 = pneg %p112
        %p223 = pneg %p136
        %p224 = pneg %p133
        %p225 = pneg %p164
        %p226 = pneg %p161
        %s227 = sand.u32 %s151, 1
        %s228 = scalar_lea.sflag [#allocation3], %s227
        %s229 = sand.u32 %s151, 1
        %s230 = smul.addr %s229, 16
        %s231 = scalar_lea.vmem [#allocation2], %s230
        %p232 = scmp.lt.s32.totalorder %s23, 1
        %s233 = scalar_select %p232, %s23, 1
        %s234 = smul.addr %s233, 12
        %s235 = smul.addr %s234, 4
        %s236 = scalar_lea.vmem %s0, %s235
        %s237 = smul.u32 4, %s24
        %s239 = smul.u32 %s24, 4
        %s240 = smul.addr %s239, 4
        %s241 = scalar_lea.vmem %s236, %s240
        %v242 = vld [vmem:[%s241] sm:$0xff]
        %v243 = vld [vmem:[%s241 + $0x8] sm:$0xff]
        %s244 = sadd.s32 %s24, 1
        %s245 = smul.u32 %s244, 4
        %s246 = smul.addr %s245, 4
        %s247 = scalar_lea.vmem %s236, %s246
        %v248 = vld [vmem:[%s247] sm:$0xff]
        %v251 = vunpack.c.l.b16 %v242
        %v252 = vunpack.c.h.b16 %v242
        %v253 = vunpack.c.l.b16 %v243
        %v254 = vunpack.c.h.b16 %v243
        %v255 = vpack.c.b16 %v251, %v251
        %v256 = vpack.c.b16 %v252, %v252
        %v257 = vpack.c.b16 %v253, %v253
        %v258 = vpack.c.b16 %v254, %v254
        %v264 = vunpack.c.l.b16 %v248
        %v265 = vunpack.c.h.b16 %v248
        %v266 = vpack.c.b16 %v264, %v264
        %v267 = vpack.c.b16 %v265, %v265
        %v269 = vld [vmem:[%s1] sm:$0xf]
        %s270 = scalar_lea.vmem %s1, 4
        %v271 = vld [vmem:[%s270] sm:$0xf]
        %272 = vrot.lane.b32.xlu0 %v255, 127
        %v273 = vpop.permute.xlu0 %272
        %274 = vrot.lane.b32.xlu0 %v256, 127
        %v275 = vpop.permute.xlu0 %274
        %276 = vrot.lane.b32.xlu0 %v257, 127
        %v277 = vpop.permute.xlu0 %276
        %278 = vrot.lane.b32.xlu0 %v258, 127
        %v279 = vpop.permute.xlu0 %278
        %280 = vrot.lane.b32.xlu0 %v266, 127
        %v281 = vpop.permute.xlu0 %280
        %vm282 = vcmask 1039360
        %v283 = vsel %vm282, %v273, %v275
        %v284 = vsel %vm282, %v275, %v277
        %v285 = vsel %vm282, %v277, %v279
        %v286 = vsel %vm282, %v279, %v281
        %vm287 = vcmask 64512
        %v289 = vsel %vm287, %v271, 0
        %vm291 = vcmask 1043456
        %v293 = vsel %vm291, %v283, 0
        %v296 = vsel %vm291, %v284, 0
        %v299 = vsel %vm291, %v285, 0
        %v302 = vsel %vm291, %v286, 0
        %304 = vmatprep.subr.bf16.mxu0 %v296
        %305 = vmatpush1.bf16.msra.mxu0 %v293
        %306 = vmatprep.subr.bf16.mxu0 0
        %307 = vmatpush1.bf16.msra.mxu0 0
        %308 = vmatprep.subr.bf16.mxu0 0
        %309 = vmatpush1.bf16.msra.mxu0 0
        %310 = vmatprep.subr.bf16.mxu0 0
        %311 = vmatpush1.bf16.msra.mxu0 0
        %312 = vmatprep.subr.bf16.mxu0 0
        %313 = vmatpush1.bf16.msra.mxu0 0
        %314 = vmatprep.subr.bf16.mxu0 0
        %315 = vmatpush1.bf16.msra.mxu0 0
        %316 = vmatprep.subr.bf16.mxu0 0
        %317 = vmatpush1.bf16.msra.mxu0 0
        %318 = vmatprep.subr.bf16.mxu0 0
        %319 = vmatpush1.bf16.msra.mxu0 0
        %320 = vmatprep.subr.bf16.mxu0 0
        %321 = vmatpush1.bf16.msra.mxu0 0
        %322 = vmatprep.subr.bf16.mxu0 0
        %323 = vmatpush1.bf16.msra.mxu0 0
        %324 = vmatprep.subr.bf16.mxu0 0
        %325 = vmatpush1.bf16.msra.mxu0 0
        %326 = vmatprep.subr.bf16.mxu0 0
        %327 = vmatpush1.bf16.msra.mxu0 0
        %328 = vmatprep.subr.bf16.mxu0 0
        %329 = vmatpush1.bf16.msra.mxu0 0
        %330 = vmatprep.subr.bf16.mxu0 0
        %331 = vmatpush1.bf16.msra.mxu0 0
        %332 = vmatprep.subr.bf16.mxu0 0
        %333 = vmatpush1.bf16.msra.mxu0 0
        %334 = vmatprep.subr.bf16.mxu0 0
        %335 = vmatpush1.bf16.msra.mxu0 0
        %336 = vmatprep.mubr.bf16.mxu0 0
        %337 = vmatmul.mubr.bf16.gmra.mrb[0].mxu0 %v289
        %v338 = vpop.f32.mrb[0].mxu0
        %v339 = vadd.f32 0.0, %v338
        %v340 = vpop.f32.mrb[0].mxu0
        %v341 = vadd.f32 0.0, %v340
        %v342 = vpop.f32.mrb[0].mxu0
        %v343 = vpop.f32.mrb[0].mxu0
        %344 = vdwg.mxu0
        %345 = vmatprep.subr.bf16.mxu0 %v302
        %346 = vmatpush1.bf16.msra.mxu0 %v299
        %347 = vmatprep.subr.bf16.mxu0 0
        %348 = vmatpush1.bf16.msra.mxu0 0
        %349 = vmatprep.subr.bf16.mxu0 0
        %350 = vmatpush1.bf16.msra.mxu0 0
        %351 = vmatprep.subr.bf16.mxu0 0
        %352 = vmatpush1.bf16.msra.mxu0 0
        %353 = vmatprep.subr.bf16.mxu0 0
        %354 = vmatpush1.bf16.msra.mxu0 0
        %355 = vmatprep.subr.bf16.mxu0 0
        %356 = vmatpush1.bf16.msra.mxu0 0
        %357 = vmatprep.subr.bf16.mxu0 0
        %358 = vmatpush1.bf16.msra.mxu0 0
        %359 = vmatprep.subr.bf16.mxu0 0
        %360 = vmatpush1.bf16.msra.mxu0 0
        %361 = vmatprep.subr.bf16.mxu0 0
        %362 = vmatpush1.bf16.msra.mxu0 0
        %363 = vmatprep.subr.bf16.mxu0 0
        %364 = vmatpush1.bf16.msra.mxu0 0
        %365 = vmatprep.subr.bf16.mxu0 0
        %366 = vmatpush1.bf16.msra.mxu0 0
        %367 = vmatprep.subr.bf16.mxu0 0
        %368 = vmatpush1.bf16.msra.mxu0 0
        %369 = vmatprep.subr.bf16.mxu0 0
        %370 = vmatpush1.bf16.msra.mxu0 0
        %371 = vmatprep.subr.bf16.mxu0 0
        %372 = vmatpush1.bf16.msra.mxu0 0
        %373 = vmatprep.subr.bf16.mxu0 0
        %374 = vmatpush1.bf16.msra.mxu0 0
        %375 = vmatprep.subr.bf16.mxu0 0
        %376 = vmatpush1.bf16.msra.mxu0 0
        %377 = vmatprep.mubr.bf16.mxu0 0
        %378 = vmatmul.mubr.bf16.gmra.mrb[0].mxu0 %v289
        %v379 = vpop.f32.mrb[0].mxu0
        %v380 = vadd.f32 0.0, %v379
        %v381 = vpop.f32.mrb[0].mxu0
        %v382 = vadd.f32 0.0, %v381
        %v383 = vpop.f32.mrb[0].mxu0
        %v384 = vpop.f32.mrb[0].mxu0
        %385 = vdwg.mxu0
        %v387 = vsel %vm287, %v269, 0
        %v390 = vsel %vm291, %v255, 0
        %v393 = vsel %vm291, %v256, 0
        %v396 = vsel %vm291, %v257, 0
        %v399 = vsel %vm291, %v258, 0
        %401 = vmatprep.subr.bf16.mxu0 %v393
        %402 = vmatpush1.bf16.msra.mxu0 %v390
        %403 = vmatprep.subr.bf16.mxu0 0
        %404 = vmatpush1.bf16.msra.mxu0 0
        %405 = vmatprep.subr.bf16.mxu0 0
        %406 = vmatpush1.bf16.msra.mxu0 0
        %407 = vmatprep.subr.bf16.mxu0 0
        %408 = vmatpush1.bf16.msra.mxu0 0
        %409 = vmatprep.subr.bf16.mxu0 0
        %410 = vmatpush1.bf16.msra.mxu0 0
        %411 = vmatprep.subr.bf16.mxu0 0
        %412 = vmatpush1.bf16.msra.mxu0 0
        %413 = vmatprep.subr.bf16.mxu0 0
        %414 = vmatpush1.bf16.msra.mxu0 0
        %415 = vmatprep.subr.bf16.mxu0 0
        %416 = vmatpush1.bf16.msra.mxu0 0
        %417 = vmatprep.subr.bf16.mxu0 0
        %418 = vmatpush1.bf16.msra.mxu0 0
        %419 = vmatprep.subr.bf16.mxu0 0
        %420 = vmatpush1.bf16.msra.mxu0 0
        %421 = vmatprep.subr.bf16.mxu0 0
        %422 = vmatpush1.bf16.msra.mxu0 0
        %423 = vmatprep.subr.bf16.mxu0 0
        %424 = vmatpush1.bf16.msra.mxu0 0
        %425 = vmatprep.subr.bf16.mxu0 0
        %426 = vmatpush1.bf16.msra.mxu0 0
        %427 = vmatprep.subr.bf16.mxu0 0
        %428 = vmatpush1.bf16.msra.mxu0 0
        %429 = vmatprep.subr.bf16.mxu0 0
        %430 = vmatpush1.bf16.msra.mxu0 0
        %431 = vmatprep.subr.bf16.mxu0 0
        %432 = vmatpush1.bf16.msra.mxu0 0
        %433 = vmatprep.mubr.bf16.mxu0 0
        %434 = vmatmul.mubr.bf16.gmra.mrb[0].mxu0 %v387
        %v435 = vpop.f32.mrb[0].mxu0
        %v436 = vadd.f32 %v339, %v435
        %v437 = vpop.f32.mrb[0].mxu0
        %v438 = vadd.f32 %v341, %v437
        %v439 = vpop.f32.mrb[0].mxu0
        %v440 = vpop.f32.mrb[0].mxu0
        %441 = vdwg.mxu0
        %442 = vmatprep.subr.bf16.mxu0 %v399
        %443 = vmatpush1.bf16.msra.mxu0 %v396
        %444 = vmatprep.subr.bf16.mxu0 0
        %445 = vmatpush1.bf16.msra.mxu0 0
        %446 = vmatprep.subr.bf16.mxu0 0
        %447 = vmatpush1.bf16.msra.mxu0 0
        %448 = vmatprep.subr.bf16.mxu0 0
        %449 = vmatpush1.bf16.msra.mxu0 0
        %450 = vmatprep.subr.bf16.mxu0 0
        %451 = vmatpush1.bf16.msra.mxu0 0
        %452 = vmatprep.subr.bf16.mxu0 0
        %453 = vmatpush1.bf16.msra.mxu0 0
        %454 = vmatprep.subr.bf16.mxu0 0
        %455 = vmatpush1.bf16.msra.mxu0 0
        %456 = vmatprep.subr.bf16.mxu0 0
        %457 = vmatpush1.bf16.msra.mxu0 0
        %458 = vmatprep.subr.bf16.mxu0 0
        %459 = vmatpush1.bf16.msra.mxu0 0
        %460 = vmatprep.subr.bf16.mxu0 0
        %461 = vmatpush1.bf16.msra.mxu0 0
        %462 = vmatprep.subr.bf16.mxu0 0
        %463 = vmatpush1.bf16.msra.mxu0 0
        %464 = vmatprep.subr.bf16.mxu0 0
        %465 = vmatpush1.bf16.msra.mxu0 0
        %466 = vmatprep.subr.bf16.mxu0 0
        %467 = vmatpush1.bf16.msra.mxu0 0
        %468 = vmatprep.subr.bf16.mxu0 0
        %469 = vmatpush1.bf16.msra.mxu0 0
        %470 = vmatprep.subr.bf16.mxu0 0
        %471 = vmatpush1.bf16.msra.mxu0 0
        %472 = vmatprep.subr.bf16.mxu0 0
        %473 = vmatpush1.bf16.msra.mxu0 0
        %474 = vmatprep.mubr.bf16.mxu0 0
        %475 = vmatmul.mubr.bf16.gmra.mrb[0].mxu0 %v387
        %v476 = vpop.f32.mrb[0].mxu0
        %v477 = vadd.f32 %v380, %v476
        %v478 = vpop.f32.mrb[0].mxu0
        %v479 = vadd.f32 %v382, %v478
        %v480 = vpop.f32.mrb[0].mxu0
        %v481 = vpop.f32.mrb[0].mxu0
        %482 = vdwg.mxu0
        %s483 = scalar_lea.vmem %s1, 8
        %v484 = vld [vmem:[%s483] sm:$0xf]
        %485 = vrot.lane.b32.xlu0 %v255, 126
        %v486 = vpop.permute.xlu0 %485
        %487 = vrot.lane.b32.xlu0 %v256, 126
        %v488 = vpop.permute.xlu0 %487
        %489 = vrot.lane.b32.xlu0 %v257, 126
        %v490 = vpop.permute.xlu0 %489
        %491 = vrot.lane.b32.xlu0 %v258, 126
        %v492 = vpop.permute.xlu0 %491
        %493 = vrot.lane.b32.xlu0 %v266, 126
        %v494 = vpop.permute.xlu0 %493
        %vm495 = vcmask 1031168
        %v496 = vsel %vm495, %v486, %v488
        %v497 = vsel %vm495, %v488, %v490
        %v498 = vsel %vm495, %v490, %v492
        %v499 = vsel %vm495, %v492, %v494
        %v501 = vsel %vm287, %v484, 0
        %v504 = vsel %vm291, %v496, 0
        %v507 = vsel %vm291, %v497, 0
        %v510 = vsel %vm291, %v498, 0
        %v513 = vsel %vm291, %v499, 0
        %515 = vmatprep.subr.bf16.mxu0 %v507
        %516 = vmatpush1.bf16.msra.mxu0 %v504
        %517 = vmatprep.subr.bf16.mxu0 0
        %518 = vmatpush1.bf16.msra.mxu0 0
        %519 = vmatprep.subr.bf16.mxu0 0
        %520 = vmatpush1.bf16.msra.mxu0 0
        %521 = vmatprep.subr.bf16.mxu0 0
        %522 = vmatpush1.bf16.msra.mxu0 0
        %523 = vmatprep.subr.bf16.mxu0 0
        %524 = vmatpush1.bf16.msra.mxu0 0
        %525 = vmatprep.subr.bf16.mxu0 0
        %526 = vmatpush1.bf16.msra.mxu0 0
        %527 = vmatprep.subr.bf16.mxu0 0
        %528 = vmatpush1.bf16.msra.mxu0 0
        %529 = vmatprep.subr.bf16.mxu0 0
        %530 = vmatpush1.bf16.msra.mxu0 0
        %531 = vmatprep.subr.bf16.mxu0 0
        %532 = vmatpush1.bf16.msra.mxu0 0
        %533 = vmatprep.subr.bf16.mxu0 0
        %534 = vmatpush1.bf16.msra.mxu0 0
        %535 = vmatprep.subr.bf16.mxu0 0
        %536 = vmatpush1.bf16.msra.mxu0 0
        %537 = vmatprep.subr.bf16.mxu0 0
        %538 = vmatpush1.bf16.msra.mxu0 0
        %539 = vmatprep.subr.bf16.mxu0 0
        %540 = vmatpush1.bf16.msra.mxu0 0
        %541 = vmatprep.subr.bf16.mxu0 0
        %542 = vmatpush1.bf16.msra.mxu0 0
        %543 = vmatprep.subr.bf16.mxu0 0
        %544 = vmatpush1.bf16.msra.mxu0 0
        %545 = vmatprep.subr.bf16.mxu0 0
        %546 = vmatpush1.bf16.msra.mxu0 0
        %547 = vmatprep.mubr.bf16.mxu0 0
        %548 = vmatmul.mubr.bf16.gmra.mrb[0].mxu0 %v501
        %v549 = vpop.f32.mrb[0].mxu0
        %v550 = vadd.f32 0.0, %v549
        %v551 = vpop.f32.mrb[0].mxu0
        %v552 = vadd.f32 0.0, %v551
        %v553 = vpop.f32.mrb[0].mxu0
        %v554 = vpop.f32.mrb[0].mxu0
        %555 = vdwg.mxu0
        %556 = vmatprep.subr.bf16.mxu0 %v513
        %557 = vmatpush1.bf16.msra.mxu0 %v510
        %558 = vmatprep.subr.bf16.mxu0 0
        %559 = vmatpush1.bf16.msra.mxu0 0
        %560 = vmatprep.subr.bf16.mxu0 0
        %561 = vmatpush1.bf16.msra.mxu0 0
        %562 = vmatprep.subr.bf16.mxu0 0
        %563 = vmatpush1.bf16.msra.mxu0 0
        %564 = vmatprep.subr.bf16.mxu0 0
        %565 = vmatpush1.bf16.msra.mxu0 0
        %566 = vmatprep.subr.bf16.mxu0 0
        %567 = vmatpush1.bf16.msra.mxu0 0
        %568 = vmatprep.subr.bf16.mxu0 0
        %569 = vmatpush1.bf16.msra.mxu0 0
        %570 = vmatprep.subr.bf16.mxu0 0
        %571 = vmatpush1.bf16.msra.mxu0 0
        %572 = vmatprep.subr.bf16.mxu0 0
        %573 = vmatpush1.bf16.msra.mxu0 0
        %574 = vmatprep.subr.bf16.mxu0 0
        %575 = vmatpush1.bf16.msra.mxu0 0
        %576 = vmatprep.subr.bf16.mxu0 0
        %577 = vmatpush1.bf16.msra.mxu0 0
        %578 = vmatprep.subr.bf16.mxu0 0
        %579 = vmatpush1.bf16.msra.mxu0 0
        %580 = vmatprep.subr.bf16.mxu0 0
        %581 = vmatpush1.bf16.msra.mxu0 0
        %582 = vmatprep.subr.bf16.mxu0 0
        %583 = vmatpush1.bf16.msra.mxu0 0
        %584 = vmatprep.subr.bf16.mxu0 0
        %585 = vmatpush1.bf16.msra.mxu0 0
        %586 = vmatprep.subr.bf16.mxu0 0
        %587 = vmatpush1.bf16.msra.mxu0 0
        %588 = vmatprep.mubr.bf16.mxu0 0
        %589 = vmatmul.mubr.bf16.gmra.mrb[0].mxu0 %v501
        %v590 = vpop.f32.mrb[0].mxu0
        %v591 = vadd.f32 0.0, %v590
        %v592 = vpop.f32.mrb[0].mxu0
        %v593 = vadd.f32 0.0, %v592
        %v594 = vpop.f32.mrb[0].mxu0
        %v595 = vpop.f32.mrb[0].mxu0
        %596 = vdwg.mxu0
        %v597 = vadd.f32 %v436, %v550
        %v598 = vadd.f32 %v438, %v552
        %v599 = vadd.f32 %v477, %v591
        %v600 = vadd.f32 %v479, %v593
        %s601 = scalar_lea.vmem %s1, 12
        %v602 = vld [vmem:[%s601] sm:$0xf]
        %603 = vrot.lane.b32.xlu0 %v255, 118
        %v604 = vpop.permute.xlu0 %603
        %605 = vrot.lane.b32.xlu0 %v256, 118
        %v606 = vpop.permute.xlu0 %605
        %607 = vrot.lane.b32.xlu0 %v257, 118
        %v608 = vpop.permute.xlu0 %607
        %609 = vrot.lane.b32.xlu0 %v258, 118
        %v610 = vpop.permute.xlu0 %609
        %611 = vrot.lane.b32.xlu0 %v266, 118
        %v612 = vpop.permute.xlu0 %611
        %vm613 = vcmask 965632
        %v614 = vsel %vm613, %v604, %v606
        %v615 = vsel %vm613, %v606, %v608
        %v616 = vsel %vm613, %v608, %v610
        %v617 = vsel %vm613, %v610, %v612
        %v619 = vsel %vm287, %v602, 0
        %v622 = vsel %vm291, %v614, 0
        %v625 = vsel %vm291, %v615, 0
        %v628 = vsel %vm291, %v616, 0
        %v631 = vsel %vm291, %v617, 0
        %633 = vmatprep.subr.bf16.mxu0 %v625
        %634 = vmatpush1.bf16.msra.mxu0 %v622
        %635 = vmatprep.subr.bf16.mxu0 0
        %636 = vmatpush1.bf16.msra.mxu0 0
        %637 = vmatprep.subr.bf16.mxu0 0
        %638 = vmatpush1.bf16.msra.mxu0 0
        %639 = vmatprep.subr.bf16.mxu0 0
        %640 = vmatpush1.bf16.msra.mxu0 0
        %641 = vmatprep.subr.bf16.mxu0 0
        %642 = vmatpush1.bf16.msra.mxu0 0
        %643 = vmatprep.subr.bf16.mxu0 0
        %644 = vmatpush1.bf16.msra.mxu0 0
        %645 = vmatprep.subr.bf16.mxu0 0
        %646 = vmatpush1.bf16.msra.mxu0 0
        %647 = vmatprep.subr.bf16.mxu0 0
        %648 = vmatpush1.bf16.msra.mxu0 0
        %649 = vmatprep.subr.bf16.mxu0 0
        %650 = vmatpush1.bf16.msra.mxu0 0
        %651 = vmatprep.subr.bf16.mxu0 0
        %652 = vmatpush1.bf16.msra.mxu0 0
        %653 = vmatprep.subr.bf16.mxu0 0
        %654 = vmatpush1.bf16.msra.mxu0 0
        %655 = vmatprep.subr.bf16.mxu0 0
        %656 = vmatpush1.bf16.msra.mxu0 0
        %657 = vmatprep.subr.bf16.mxu0 0
        %658 = vmatpush1.bf16.msra.mxu0 0
        %659 = vmatprep.subr.bf16.mxu0 0
        %660 = vmatpush1.bf16.msra.mxu0 0
        %661 = vmatprep.subr.bf16.mxu0 0
        %662 = vmatpush1.bf16.msra.mxu0 0
        %663 = vmatprep.subr.bf16.mxu0 0
        %664 = vmatpush1.bf16.msra.mxu0 0
        %665 = vmatprep.mubr.bf16.mxu0 0
        %666 = vmatmul.mubr.bf16.gmra.mrb[0].mxu0 %v619
        %v667 = vpop.f32.mrb[0].mxu0
        %v668 = vadd.f32 0.0, %v667
        %v669 = vpop.f32.mrb[0].mxu0
        %v670 = vadd.f32 0.0, %v669
        %v671 = vpop.f32.mrb[0].mxu0
        %v672 = vpop.f32.mrb[0].mxu0
        %673 = vdwg.mxu0
        %674 = vmatprep.subr.bf16.mxu0 %v631
        %675 = vmatpush1.bf16.msra.mxu0 %v628
        %676 = vmatprep.subr.bf16.mxu0 0
        %677 = vmatpush1.bf16.msra.mxu0 0
        %678 = vmatprep.subr.bf16.mxu0 0
        %679 = vmatpush1.bf16.msra.mxu0 0
        %680 = vmatprep.subr.bf16.mxu0 0
        %681 = vmatpush1.bf16.msra.mxu0 0
        %682 = vmatprep.subr.bf16.mxu0 0
        %683 = vmatpush1.bf16.msra.mxu0 0
        %684 = vmatprep.subr.bf16.mxu0 0
        %685 = vmatpush1.bf16.msra.mxu0 0
        %686 = vmatprep.subr.bf16.mxu0 0
        %687 = vmatpush1.bf16.msra.mxu0 0
        %688 = vmatprep.subr.bf16.mxu0 0
        %689 = vmatpush1.bf16.msra.mxu0 0
        %690 = vmatprep.subr.bf16.mxu0 0
        %691 = vmatpush1.bf16.msra.mxu0 0
        %692 = vmatprep.subr.bf16.mxu0 0
        %693 = vmatpush1.bf16.msra.mxu0 0
        %694 = vmatprep.subr.bf16.mxu0 0
        %695 = vmatpush1.bf16.msra.mxu0 0
        %696 = vmatprep.subr.bf16.mxu0 0
        %697 = vmatpush1.bf16.msra.mxu0 0
        %698 = vmatprep.subr.bf16.mxu0 0
        %699 = vmatpush1.bf16.msra.mxu0 0
        %700 = vmatprep.subr.bf16.mxu0 0
        %701 = vmatpush1.bf16.msra.mxu0 0
        %702 = vmatprep.subr.bf16.mxu0 0
        %703 = vmatpush1.bf16.msra.mxu0 0
        %704 = vmatprep.subr.bf16.mxu0 0
        %705 = vmatpush1.bf16.msra.mxu0 0
        %706 = vmatprep.mubr.bf16.mxu0 0
        %707 = vmatmul.mubr.bf16.gmra.mrb[0].mxu0 %v619
        %v708 = vpop.f32.mrb[0].mxu0
        %v709 = vadd.f32 0.0, %v708
        %v710 = vpop.f32.mrb[0].mxu0
        %v711 = vadd.f32 0.0, %v710
        %v712 = vpop.f32.mrb[0].mxu0
        %v713 = vpop.f32.mrb[0].mxu0
        %714 = vdwg.mxu0
        %v715 = vadd.f32 %v597, %v668
        %v716 = vadd.f32 %v598, %v670
        %v717 = vadd.f32 %v599, %v709
        %v718 = vadd.f32 %v600, %v711
        %s719 = scalar_lea.vmem %s1, 16
        %v720 = vld [vmem:[%s719] sm:$0xf]
        %721 = vrot.lane.b32.xlu0 %v255, 117
        %v722 = vpop.permute.xlu0 %721
        %723 = vrot.lane.b32.xlu0 %v256, 117
        %v724 = vpop.permute.xlu0 %723
        %725 = vrot.lane.b32.xlu0 %v257, 117
        %v726 = vpop.permute.xlu0 %725
        %727 = vrot.lane.b32.xlu0 %v258, 117
        %v728 = vpop.permute.xlu0 %727
        %729 = vrot.lane.b32.xlu0 %v266, 117
        %v730 = vpop.permute.xlu0 %729
        %vm731 = vcmask 957440
        %v732 = vsel %vm731, %v722, %v724
        %v733 = vsel %vm731, %v724, %v726
        %v734 = vsel %vm731, %v726, %v728
        %v735 = vsel %vm731, %v728, %v730
        %v737 = vsel %vm287, %v720, 0
        %v740 = vsel %vm291, %v732, 0
        %v743 = vsel %vm291, %v733, 0
        %v746 = vsel %vm291, %v734, 0
        %v749 = vsel %vm291, %v735, 0
        %751 = vmatprep.subr.bf16.mxu0 %v743
        %752 = vmatpush1.bf16.msra.mxu0 %v740
        %753 = vmatprep.subr.bf16.mxu0 0
        %754 = vmatpush1.bf16.msra.mxu0 0
        %755 = vmatprep.subr.bf16.mxu0 0
        %756 = vmatpush1.bf16.msra.mxu0 0
        %757 = vmatprep.subr.bf16.mxu0 0
        %758 = vmatpush1.bf16.msra.mxu0 0
        %759 = vmatprep.subr.bf16.mxu0 0
        %760 = vmatpush1.bf16.msra.mxu0 0
        %761 = vmatprep.subr.bf16.mxu0 0
        %762 = vmatpush1.bf16.msra.mxu0 0
        %763 = vmatprep.subr.bf16.mxu0 0
        %764 = vmatpush1.bf16.msra.mxu0 0
        %765 = vmatprep.subr.bf16.mxu0 0
        %766 = vmatpush1.bf16.msra.mxu0 0
        %767 = vmatprep.subr.bf16.mxu0 0
        %768 = vmatpush1.bf16.msra.mxu0 0
        %769 = vmatprep.subr.bf16.mxu0 0
        %770 = vmatpush1.bf16.msra.mxu0 0
        %771 = vmatprep.subr.bf16.mxu0 0
        %772 = vmatpush1.bf16.msra.mxu0 0
        %773 = vmatprep.subr.bf16.mxu0 0
        %774 = vmatpush1.bf16.msra.mxu0 0
        %775 = vmatprep.subr.bf16.mxu0 0
        %776 = vmatpush1.bf16.msra.mxu0 0
        %777 = vmatprep.subr.bf16.mxu0 0
        %778 = vmatpush1.bf16.msra.mxu0 0
        %779 = vmatprep.subr.bf16.mxu0 0
        %780 = vmatpush1.bf16.msra.mxu0 0
        %781 = vmatprep.subr.bf16.mxu0 0
        %782 = vmatpush1.bf16.msra.mxu0 0
        %783 = vmatprep.mubr.bf16.mxu0 0
        %784 = vmatmul.mubr.bf16.gmra.mrb[0].mxu0 %v737
        %v785 = vpop.f32.mrb[0].mxu0
        %v786 = vadd.f32 0.0, %v785
        %v787 = vpop.f32.mrb[0].mxu0
        %v788 = vadd.f32 0.0, %v787
        %v789 = vpop.f32.mrb[0].mxu0
        %v790 = vpop.f32.mrb[0].mxu0
        %791 = vdwg.mxu0
        %792 = vmatprep.subr.bf16.mxu0 %v749
        %793 = vmatpush1.bf16.msra.mxu0 %v746
        %794 = vmatprep.subr.bf16.mxu0 0
        %795 = vmatpush1.bf16.msra.mxu0 0
        %796 = vmatprep.subr.bf16.mxu0 0
        %797 = vmatpush1.bf16.msra.mxu0 0
        %798 = vmatprep.subr.bf16.mxu0 0
        %799 = vmatpush1.bf16.msra.mxu0 0
        %800 = vmatprep.subr.bf16.mxu0 0
        %801 = vmatpush1.bf16.msra.mxu0 0
        %802 = vmatprep.subr.bf16.mxu0 0
        %803 = vmatpush1.bf16.msra.mxu0 0
        %804 = vmatprep.subr.bf16.mxu0 0
        %805 = vmatpush1.bf16.msra.mxu0 0
        %806 = vmatprep.subr.bf16.mxu0 0
        %807 = vmatpush1.bf16.msra.mxu0 0
        %808 = vmatprep.subr.bf16.mxu0 0
        %809 = vmatpush1.bf16.msra.mxu0 0
        %810 = vmatprep.subr.bf16.mxu0 0
        %811 = vmatpush1.bf16.msra.mxu0 0
        %812 = vmatprep.subr.bf16.mxu0 0
        %813 = vmatpush1.bf16.msra.mxu0 0
        %814 = vmatprep.subr.bf16.mxu0 0
        %815 = vmatpush1.bf16.msra.mxu0 0
        %816 = vmatprep.subr.bf16.mxu0 0
        %817 = vmatpush1.bf16.msra.mxu0 0
        %818 = vmatprep.subr.bf16.mxu0 0
        %819 = vmatpush1.bf16.msra.mxu0 0
        %820 = vmatprep.subr.bf16.mxu0 0
        %821 = vmatpush1.bf16.msra.mxu0 0
        %822 = vmatprep.subr.bf16.mxu0 0
        %823 = vmatpush1.bf16.msra.mxu0 0
        %824 = vmatprep.mubr.bf16.mxu0 0
        %825 = vmatmul.mubr.bf16.gmra.mrb[0].mxu0 %v737
        %v826 = vpop.f32.mrb[0].mxu0
        %v827 = vadd.f32 0.0, %v826
        %v828 = vpop.f32.mrb[0].mxu0
        %v829 = vadd.f32 0.0, %v828
        %v830 = vpop.f32.mrb[0].mxu0
        %v831 = vpop.f32.mrb[0].mxu0
        %832 = vdwg.mxu0
        %v833 = vadd.f32 %v715, %v786
        %v834 = vadd.f32 %v716, %v788
        %v835 = vadd.f32 %v717, %v827
        %v836 = vadd.f32 %v718, %v829
        %s837 = scalar_lea.vmem %s1, 20
        %v838 = vld [vmem:[%s837] sm:$0xf]
        %839 = vrot.lane.b32.xlu0 %v255, 116
        %v840 = vpop.permute.xlu0 %839
        %841 = vrot.lane.b32.xlu0 %v256, 116
        %v842 = vpop.permute.xlu0 %841
        %843 = vrot.lane.b32.xlu0 %v257, 116
        %v844 = vpop.permute.xlu0 %843
        %845 = vrot.lane.b32.xlu0 %v258, 116
        %v846 = vpop.permute.xlu0 %845
        %847 = vrot.lane.b32.xlu0 %v266, 116
        %v848 = vpop.permute.xlu0 %847
        %vm849 = vcmask 949248
        %v850 = vsel %vm849, %v840, %v842
        %v851 = vsel %vm849, %v842, %v844
        %v852 = vsel %vm849, %v844, %v846
        %v853 = vsel %vm849, %v846, %v848
        %v855 = vsel %vm287, %v838, 0
        %v858 = vsel %vm291, %v850, 0
        %v861 = vsel %vm291, %v851, 0
        %v864 = vsel %vm291, %v852, 0
        %v867 = vsel %vm291, %v853, 0
        %869 = vmatprep.subr.bf16.mxu0 %v861
        %870 = vmatpush1.bf16.msra.mxu0 %v858
        %871 = vmatprep.subr.bf16.mxu0 0
        %872 = vmatpush1.bf16.msra.mxu0 0
        %873 = vmatprep.subr.bf16.mxu0 0
        %874 = vmatpush1.bf16.msra.mxu0 0
        %875 = vmatprep.subr.bf16.mxu0 0
        %876 = vmatpush1.bf16.msra.mxu0 0
        %877 = vmatprep.subr.bf16.mxu0 0
        %878 = vmatpush1.bf16.msra.mxu0 0
        %879 = vmatprep.subr.bf16.mxu0 0
        %880 = vmatpush1.bf16.msra.mxu0 0
        %881 = vmatprep.subr.bf16.mxu0 0
        %882 = vmatpush1.bf16.msra.mxu0 0
        %883 = vmatprep.subr.bf16.mxu0 0
        %884 = vmatpush1.bf16.msra.mxu0 0
        %885 = vmatprep.subr.bf16.mxu0 0
        %886 = vmatpush1.bf16.msra.mxu0 0
        %887 = vmatprep.subr.bf16.mxu0 0
        %888 = vmatpush1.bf16.msra.mxu0 0
        %889 = vmatprep.subr.bf16.mxu0 0
        %890 = vmatpush1.bf16.msra.mxu0 0
        %891 = vmatprep.subr.bf16.mxu0 0
        %892 = vmatpush1.bf16.msra.mxu0 0
        %893 = vmatprep.subr.bf16.mxu0 0
        %894 = vmatpush1.bf16.msra.mxu0 0
        %895 = vmatprep.subr.bf16.mxu0 0
        %896 = vmatpush1.bf16.msra.mxu0 0
        %897 = vmatprep.subr.bf16.mxu0 0
        %898 = vmatpush1.bf16.msra.mxu0 0
        %899 = vmatprep.subr.bf16.mxu0 0
        %900 = vmatpush1.bf16.msra.mxu0 0
        %901 = vmatprep.mubr.bf16.mxu0 0
        %902 = vmatmul.mubr.bf16.gmra.mrb[0].mxu0 %v855
        %v903 = vpop.f32.mrb[0].mxu0
        %v904 = vadd.f32 0.0, %v903
        %v905 = vpop.f32.mrb[0].mxu0
        %v906 = vadd.f32 0.0, %v905
        %v907 = vpop.f32.mrb[0].mxu0
        %v908 = vpop.f32.mrb[0].mxu0
        %909 = vdwg.mxu0
        %910 = vmatprep.subr.bf16.mxu0 %v867
        %911 = vmatpush1.bf16.msra.mxu0 %v864
        %912 = vmatprep.subr.bf16.mxu0 0
        %913 = vmatpush1.bf16.msra.mxu0 0
        %914 = vmatprep.subr.bf16.mxu0 0
        %915 = vmatpush1.bf16.msra.mxu0 0
        %916 = vmatprep.subr.bf16.mxu0 0
        %917 = vmatpush1.bf16.msra.mxu0 0
        %918 = vmatprep.subr.bf16.mxu0 0
        %919 = vmatpush1.bf16.msra.mxu0 0
        %920 = vmatprep.subr.bf16.mxu0 0
        %921 = vmatpush1.bf16.msra.mxu0 0
        %922 = vmatprep.subr.bf16.mxu0 0
        %923 = vmatpush1.bf16.msra.mxu0 0
        %924 = vmatprep.subr.bf16.mxu0 0
        %925 = vmatpush1.bf16.msra.mxu0 0
        %926 = vmatprep.subr.bf16.mxu0 0
        %927 = vmatpush1.bf16.msra.mxu0 0
        %928 = vmatprep.subr.bf16.mxu0 0
        %929 = vmatpush1.bf16.msra.mxu0 0
        %930 = vmatprep.subr.bf16.mxu0 0
        %931 = vmatpush1.bf16.msra.mxu0 0
        %932 = vmatprep.subr.bf16.mxu0 0
        %933 = vmatpush1.bf16.msra.mxu0 0
        %934 = vmatprep.subr.bf16.mxu0 0
        %935 = vmatpush1.bf16.msra.mxu0 0
        %936 = vmatprep.subr.bf16.mxu0 0
        %937 = vmatpush1.bf16.msra.mxu0 0
        %938 = vmatprep.subr.bf16.mxu0 0
        %939 = vmatpush1.bf16.msra.mxu0 0
        %940 = vmatprep.subr.bf16.mxu0 0
        %941 = vmatpush1.bf16.msra.mxu0 0
        %942 = vmatprep.mubr.bf16.mxu0 0
        %943 = vmatmul.mubr.bf16.gmra.mrb[0].mxu0 %v855
        %v944 = vpop.f32.mrb[0].mxu0
        %v945 = vadd.f32 0.0, %v944
        %v946 = vpop.f32.mrb[0].mxu0
        %v947 = vadd.f32 0.0, %v946
        %v948 = vpop.f32.mrb[0].mxu0
        %v949 = vpop.f32.mrb[0].mxu0
        %950 = vdwg.mxu0
        %v951 = vadd.f32 %v833, %v904
        %v952 = vadd.f32 %v834, %v906
        %v953 = vadd.f32 %v835, %v945
        %v954 = vadd.f32 %v836, %v947
        %s955 = scalar_lea.vmem %s1, 24
        %v956 = vld [vmem:[%s955] sm:$0xf]
        %957 = vrot.lane.b32.xlu0 %v255, 108
        %v958 = vpop.permute.xlu0 %957
        %959 = vrot.lane.b32.xlu0 %v256, 108
        %v960 = vpop.permute.xlu0 %959
        %961 = vrot.lane.b32.xlu0 %v257, 108
        %v962 = vpop.permute.xlu0 %961
        %963 = vrot.lane.b32.xlu0 %v258, 108
        %v964 = vpop.permute.xlu0 %963
        %965 = vrot.lane.b32.xlu0 %v266, 108
        %v966 = vpop.permute.xlu0 %965
        %vm967 = vcmask 883712
        %v968 = vsel %vm967, %v958, %v960
        %v969 = vsel %vm967, %v960, %v962
        %v970 = vsel %vm967, %v962, %v964
        %v971 = vsel %vm967, %v964, %v966
        %v973 = vsel %vm287, %v956, 0
        %v976 = vsel %vm291, %v968, 0
        %v979 = vsel %vm291, %v969, 0
        %v982 = vsel %vm291, %v970, 0
        %v985 = vsel %vm291, %v971, 0
        %987 = vmatprep.subr.bf16.mxu0 %v979
        %988 = vmatpush1.bf16.msra.mxu0 %v976
        %989 = vmatprep.subr.bf16.mxu0 0
        %990 = vmatpush1.bf16.msra.mxu0 0
        %991 = vmatprep.subr.bf16.mxu0 0
        %992 = vmatpush1.bf16.msra.mxu0 0
        %993 = vmatprep.subr.bf16.mxu0 0
        %994 = vmatpush1.bf16.msra.mxu0 0
        %995 = vmatprep.subr.bf16.mxu0 0
        %996 = vmatpush1.bf16.msra.mxu0 0
        %997 = vmatprep.subr.bf16.mxu0 0
        %998 = vmatpush1.bf16.msra.mxu0 0
        %999 = vmatprep.subr.bf16.mxu0 0
        %1000 = vmatpush1.bf16.msra.mxu0 0
        %1001 = vmatprep.subr.bf16.mxu0 0
        %1002 = vmatpush1.bf16.msra.mxu0 0
        %1003 = vmatprep.subr.bf16.mxu0 0
        %1004 = vmatpush1.bf16.msra.mxu0 0
        %1005 = vmatprep.subr.bf16.mxu0 0
        %1006 = vmatpush1.bf16.msra.mxu0 0
        %1007 = vmatprep.subr.bf16.mxu0 0
        %1008 = vmatpush1.bf16.msra.mxu0 0
        %1009 = vmatprep.subr.bf16.mxu0 0
        %1010 = vmatpush1.bf16.msra.mxu0 0
        %1011 = vmatprep.subr.bf16.mxu0 0
        %1012 = vmatpush1.bf16.msra.mxu0 0
        %1013 = vmatprep.subr.bf16.mxu0 0
        %1014 = vmatpush1.bf16.msra.mxu0 0
        %1015 = vmatprep.subr.bf16.mxu0 0
        %1016 = vmatpush1.bf16.msra.mxu0 0
        %1017 = vmatprep.subr.bf16.mxu0 0
        %1018 = vmatpush1.bf16.msra.mxu0 0
        %1019 = vmatprep.mubr.bf16.mxu0 0
        %1020 = vmatmul.mubr.bf16.gmra.mrb[0].mxu0 %v973
        %v1021 = vpop.f32.mrb[0].mxu0
        %v1022 = vadd.f32 0.0, %v1021
        %v1023 = vpop.f32.mrb[0].mxu0
        %v1024 = vadd.f32 0.0, %v1023
        %v1025 = vpop.f32.mrb[0].mxu0
        %v1026 = vpop.f32.mrb[0].mxu0
        %1027 = vdwg.mxu0
        %1028 = vmatprep.subr.bf16.mxu0 %v985
        %1029 = vmatpush1.bf16.msra.mxu0 %v982
        %1030 = vmatprep.subr.bf16.mxu0 0
        %1031 = vmatpush1.bf16.msra.mxu0 0
        %1032 = vmatprep.subr.bf16.mxu0 0
        %1033 = vmatpush1.bf16.msra.mxu0 0
        %1034 = vmatprep.subr.bf16.mxu0 0
        %1035 = vmatpush1.bf16.msra.mxu0 0
        %1036 = vmatprep.subr.bf16.mxu0 0
        %1037 = vmatpush1.bf16.msra.mxu0 0
        %1038 = vmatprep.subr.bf16.mxu0 0
        %1039 = vmatpush1.bf16.msra.mxu0 0
        %1040 = vmatprep.subr.bf16.mxu0 0
        %1041 = vmatpush1.bf16.msra.mxu0 0
        %1042 = vmatprep.subr.bf16.mxu0 0
        %1043 = vmatpush1.bf16.msra.mxu0 0
        %1044 = vmatprep.subr.bf16.mxu0 0
        %1045 = vmatpush1.bf16.msra.mxu0 0
        %1046 = vmatprep.subr.bf16.mxu0 0
        %1047 = vmatpush1.bf16.msra.mxu0 0
        %1048 = vmatprep.subr.bf16.mxu0 0
        %1049 = vmatpush1.bf16.msra.mxu0 0
        %1050 = vmatprep.subr.bf16.mxu0 0
        %1051 = vmatpush1.bf16.msra.mxu0 0
        %1052 = vmatprep.subr.bf16.mxu0 0
        %1053 = vmatpush1.bf16.msra.mxu0 0
        %1054 = vmatprep.subr.bf16.mxu0 0
        %1055 = vmatpush1.bf16.msra.mxu0 0
        %1056 = vmatprep.subr.bf16.mxu0 0
        %1057 = vmatpush1.bf16.msra.mxu0 0
        %1058 = vmatprep.subr.bf16.mxu0 0
        %1059 = vmatpush1.bf16.msra.mxu0 0
        %1060 = vmatprep.mubr.bf16.mxu0 0
        %1061 = vmatmul.mubr.bf16.gmra.mrb[0].mxu0 %v973
        %v1062 = vpop.f32.mrb[0].mxu0
        %v1063 = vadd.f32 0.0, %v1062
        %v1064 = vpop.f32.mrb[0].mxu0
        %v1065 = vadd.f32 0.0, %v1064
        %v1066 = vpop.f32.mrb[0].mxu0
        %v1067 = vpop.f32.mrb[0].mxu0
        %1068 = vdwg.mxu0
        %v1069 = vadd.f32 %v951, %v1022
        %v1070 = vadd.f32 %v952, %v1024
        %v1071 = vadd.f32 %v953, %v1063
        %v1072 = vadd.f32 %v954, %v1065
        %s1073 = scalar_lea.vmem %s1, 28
        %v1074 = vld [vmem:[%s1073] sm:$0xf]
        %1075 = vrot.lane.b32.xlu0 %v255, 107
        %v1076 = vpop.permute.xlu0 %1075
        %1077 = vrot.lane.b32.xlu0 %v256, 107
        %v1078 = vpop.permute.xlu0 %1077
        %1079 = vrot.lane.b32.xlu0 %v257, 107
        %v1080 = vpop.permute.xlu0 %1079
        %1081 = vrot.lane.b32.xlu0 %v258, 107
        %v1082 = vpop.permute.xlu0 %1081
        %1083 = vrot.lane.b32.xlu0 %v266, 107
        %v1084 = vpop.permute.xlu0 %1083
        %vm1085 = vcmask 875520
        %v1086 = vsel %vm1085, %v1076, %v1078
        %v1087 = vsel %vm1085, %v1078, %v1080
        %v1088 = vsel %vm1085, %v1080, %v1082
        %v1089 = vsel %vm1085, %v1082, %v1084
        %v1091 = vsel %vm287, %v1074, 0
        %v1094 = vsel %vm291, %v1086, 0
        %v1097 = vsel %vm291, %v1087, 0
        %v1100 = vsel %vm291, %v1088, 0
        %v1103 = vsel %vm291, %v1089, 0
        %1105 = vmatprep.subr.bf16.mxu0 %v1097
        %1106 = vmatpush1.bf16.msra.mxu0 %v1094
        %1107 = vmatprep.subr.bf16.mxu0 0
        %1108 = vmatpush1.bf16.msra.mxu0 0
        %1109 = vmatprep.subr.bf16.mxu0 0
        %1110 = vmatpush1.bf16.msra.mxu0 0
        %1111 = vmatprep.subr.bf16.mxu0 0
        %1112 = vmatpush1.bf16.msra.mxu0 0
        %1113 = vmatprep.subr.bf16.mxu0 0
        %1114 = vmatpush1.bf16.msra.mxu0 0
        %1115 = vmatprep.subr.bf16.mxu0 0
        %1116 = vmatpush1.bf16.msra.mxu0 0
        %1117 = vmatprep.subr.bf16.mxu0 0
        %1118 = vmatpush1.bf16.msra.mxu0 0
        %1119 = vmatprep.subr.bf16.mxu0 0
        %1120 = vmatpush1.bf16.msra.mxu0 0
        %1121 = vmatprep.subr.bf16.mxu0 0
        %1122 = vmatpush1.bf16.msra.mxu0 0
        %1123 = vmatprep.subr.bf16.mxu0 0
        %1124 = vmatpush1.bf16.msra.mxu0 0
        %1125 = vmatprep.subr.bf16.mxu0 0
        %1126 = vmatpush1.bf16.msra.mxu0 0
        %1127 = vmatprep.subr.bf16.mxu0 0
        %1128 = vmatpush1.bf16.msra.mxu0 0
        %1129 = vmatprep.subr.bf16.mxu0 0
        %1130 = vmatpush1.bf16.msra.mxu0 0
        %1131 = vmatprep.subr.bf16.mxu0 0
        %1132 = vmatpush1.bf16.msra.mxu0 0
        %1133 = vmatprep.subr.bf16.mxu0 0
        %1134 = vmatpush1.bf16.msra.mxu0 0
        %1135 = vmatprep.subr.bf16.mxu0 0
        %1136 = vmatpush1.bf16.msra.mxu0 0
        %1137 = vmatprep.mubr.bf16.mxu0 0
        %1138 = vmatmul.mubr.bf16.gmra.mrb[0].mxu0 %v1091
        %v1139 = vpop.f32.mrb[0].mxu0
        %v1140 = vadd.f32 0.0, %v1139
        %v1141 = vpop.f32.mrb[0].mxu0
        %v1142 = vadd.f32 0.0, %v1141
        %v1143 = vpop.f32.mrb[0].mxu0
        %v1144 = vpop.f32.mrb[0].mxu0
        %1145 = vdwg.mxu0
        %1146 = vmatprep.subr.bf16.mxu0 %v1103
        %1147 = vmatpush1.bf16.msra.mxu0 %v1100
        %1148 = vmatprep.subr.bf16.mxu0 0
        %1149 = vmatpush1.bf16.msra.mxu0 0
        %1150 = vmatprep.subr.bf16.mxu0 0
        %1151 = vmatpush1.bf16.msra.mxu0 0
        %1152 = vmatprep.subr.bf16.mxu0 0
        %1153 = vmatpush1.bf16.msra.mxu0 0
        %1154 = vmatprep.subr.bf16.mxu0 0
        %1155 = vmatpush1.bf16.msra.mxu0 0
        %1156 = vmatprep.subr.bf16.mxu0 0
        %1157 = vmatpush1.bf16.msra.mxu0 0
        %1158 = vmatprep.subr.bf16.mxu0 0
        %1159 = vmatpush1.bf16.msra.mxu0 0
        %1160 = vmatprep.subr.bf16.mxu0 0
        %1161 = vmatpush1.bf16.msra.mxu0 0
        %1162 = vmatprep.subr.bf16.mxu0 0
        %1163 = vmatpush1.bf16.msra.mxu0 0
        %1164 = vmatprep.subr.bf16.mxu0 0
        %1165 = vmatpush1.bf16.msra.mxu0 0
        %1166 = vmatprep.subr.bf16.mxu0 0
        %1167 = vmatpush1.bf16.msra.mxu0 0
        %1168 = vmatprep.subr.bf16.mxu0 0
        %1169 = vmatpush1.bf16.msra.mxu0 0
        %1170 = vmatprep.subr.bf16.mxu0 0
        %1171 = vmatpush1.bf16.msra.mxu0 0
        %1172 = vmatprep.subr.bf16.mxu0 0
        %1173 = vmatpush1.bf16.msra.mxu0 0
        %1174 = vmatprep.subr.bf16.mxu0 0
        %1175 = vmatpush1.bf16.msra.mxu0 0
        %1176 = vmatprep.subr.bf16.mxu0 0
        %1177 = vmatpush1.bf16.msra.mxu0 0
        %1178 = vmatprep.mubr.bf16.mxu0 0
        %1179 = vmatmul.mubr.bf16.gmra.mrb[0].mxu0 %v1091
        %v1180 = vpop.f32.mrb[0].mxu0
        %v1181 = vadd.f32 0.0, %v1180
        %v1182 = vpop.f32.mrb[0].mxu0
        %v1183 = vadd.f32 0.0, %v1182
        %v1184 = vpop.f32.mrb[0].mxu0
        %v1185 = vpop.f32.mrb[0].mxu0
        %1186 = vdwg.mxu0
        %v1187 = vadd.f32 %v1069, %v1140
        %v1188 = vadd.f32 %v1070, %v1142
        %v1189 = vadd.f32 %v1071, %v1181
        %v1190 = vadd.f32 %v1072, %v1183
        %s1191 = scalar_lea.vmem %s1, 32
        %v1192 = vld [vmem:[%s1191] sm:$0xf]
        %1193 = vrot.lane.b32.xlu0 %v255, 106
        %v1194 = vpop.permute.xlu0 %1193
        %1195 = vrot.lane.b32.xlu0 %v256, 106
        %v1196 = vpop.permute.xlu0 %1195
        %1197 = vrot.lane.b32.xlu0 %v257, 106
        %v1198 = vpop.permute.xlu0 %1197
        %1199 = vrot.lane.b32.xlu0 %v258, 106
        %v1200 = vpop.permute.xlu0 %1199
        %1201 = vrot.lane.b32.xlu0 %v266, 106
        %v1202 = vpop.permute.xlu0 %1201
        %vm1203 = vcmask 867328
        %v1204 = vsel %vm1203, %v1194, %v1196
        %v1205 = vsel %vm1203, %v1196, %v1198
        %v1206 = vsel %vm1203, %v1198, %v1200
        %v1207 = vsel %vm1203, %v1200, %v1202
        %v1209 = vsel %vm287, %v1192, 0
        %v1212 = vsel %vm291, %v1204, 0
        %v1215 = vsel %vm291, %v1205, 0
        %v1218 = vsel %vm291, %v1206, 0
        %v1221 = vsel %vm291, %v1207, 0
        %1223 = vmatprep.subr.bf16.mxu0 %v1215
        %1224 = vmatpush1.bf16.msra.mxu0 %v1212
        %1225 = vmatprep.subr.bf16.mxu0 0
        %1226 = vmatpush1.bf16.msra.mxu0 0
        %1227 = vmatprep.subr.bf16.mxu0 0
        %1228 = vmatpush1.bf16.msra.mxu0 0
        %1229 = vmatprep.subr.bf16.mxu0 0
        %1230 = vmatpush1.bf16.msra.mxu0 0
        %1231 = vmatprep.subr.bf16.mxu0 0
        %1232 = vmatpush1.bf16.msra.mxu0 0
        %1233 = vmatprep.subr.bf16.mxu0 0
        %1234 = vmatpush1.bf16.msra.mxu0 0
        %1235 = vmatprep.subr.bf16.mxu0 0
        %1236 = vmatpush1.bf16.msra.mxu0 0
        %1237 = vmatprep.subr.bf16.mxu0 0
        %1238 = vmatpush1.bf16.msra.mxu0 0
        %1239 = vmatprep.subr.bf16.mxu0 0
        %1240 = vmatpush1.bf16.msra.mxu0 0
        %1241 = vmatprep.subr.bf16.mxu0 0
        %1242 = vmatpush1.bf16.msra.mxu0 0
        %1243 = vmatprep.subr.bf16.mxu0 0
        %1244 = vmatpush1.bf16.msra.mxu0 0
        %1245 = vmatprep.subr.bf16.mxu0 0
        %1246 = vmatpush1.bf16.msra.mxu0 0
        %1247 = vmatprep.subr.bf16.mxu0 0
        %1248 = vmatpush1.bf16.msra.mxu0 0
        %1249 = vmatprep.subr.bf16.mxu0 0
        %1250 = vmatpush1.bf16.msra.mxu0 0
        %1251 = vmatprep.subr.bf16.mxu0 0
        %1252 = vmatpush1.bf16.msra.mxu0 0
        %1253 = vmatprep.subr.bf16.mxu0 0
        %1254 = vmatpush1.bf16.msra.mxu0 0
        %1255 = vmatprep.mubr.bf16.mxu0 0
        %1256 = vmatmul.mubr.bf16.gmra.mrb[0].mxu0 %v1209
        %v1257 = vpop.f32.mrb[0].mxu0
        %v1258 = vadd.f32 0.0, %v1257
        %v1259 = vpop.f32.mrb[0].mxu0
        %v1260 = vadd.f32 0.0, %v1259
        %v1261 = vpop.f32.mrb[0].mxu0
        %v1262 = vpop.f32.mrb[0].mxu0
        %1263 = vdwg.mxu0
        %1264 = vmatprep.subr.bf16.mxu0 %v1221
        %1265 = vmatpush1.bf16.msra.mxu0 %v1218
        %1266 = vmatprep.subr.bf16.mxu0 0
        %1267 = vmatpush1.bf16.msra.mxu0 0
        %1268 = vmatprep.subr.bf16.mxu0 0
        %1269 = vmatpush1.bf16.msra.mxu0 0
        %1270 = vmatprep.subr.bf16.mxu0 0
        %1271 = vmatpush1.bf16.msra.mxu0 0
        %1272 = vmatprep.subr.bf16.mxu0 0
        %1273 = vmatpush1.bf16.msra.mxu0 0
        %1274 = vmatprep.subr.bf16.mxu0 0
        %1275 = vmatpush1.bf16.msra.mxu0 0
        %1276 = vmatprep.subr.bf16.mxu0 0
        %1277 = vmatpush1.bf16.msra.mxu0 0
        %1278 = vmatprep.subr.bf16.mxu0 0
        %1279 = vmatpush1.bf16.msra.mxu0 0
        %1280 = vmatprep.subr.bf16.mxu0 0
        %1281 = vmatpush1.bf16.msra.mxu0 0
        %1282 = vmatprep.subr.bf16.mxu0 0
        %1283 = vmatpush1.bf16.msra.mxu0 0
        %1284 = vmatprep.subr.bf16.mxu0 0
        %1285 = vmatpush1.bf16.msra.mxu0 0
        %1286 = vmatprep.subr.bf16.mxu0 0
        %1287 = vmatpush1.bf16.msra.mxu0 0
        %1288 = vmatprep.subr.bf16.mxu0 0
        %1289 = vmatpush1.bf16.msra.mxu0 0
        %1290 = vmatprep.subr.bf16.mxu0 0
        %1291 = vmatpush1.bf16.msra.mxu0 0
        %1292 = vmatprep.subr.bf16.mxu0 0
        %1293 = vmatpush1.bf16.msra.mxu0 0
        %1294 = vmatprep.subr.bf16.mxu0 0
        %1295 = vmatpush1.bf16.msra.mxu0 0
        %1296 = vmatprep.mubr.bf16.mxu0 0
        %1297 = vmatmul.mubr.bf16.gmra.mrb[0].mxu0 %v1209
        %v1298 = vpop.f32.mrb[0].mxu0
        %v1299 = vadd.f32 0.0, %v1298
        %v1300 = vpop.f32.mrb[0].mxu0
        %v1301 = vadd.f32 0.0, %v1300
        %v1302 = vpop.f32.mrb[0].mxu0
        %v1303 = vpop.f32.mrb[0].mxu0
        %1304 = vdwg.mxu0
        %v1305 = vadd.f32 %v1187, %v1258
        %v1306 = vadd.f32 %v1188, %v1260
        %v1307 = vadd.f32 %v1189, %v1299
        %v1308 = vadd.f32 %v1190, %v1301
        %s1309 = scalar_lea.vmem %s1, 36
        %v1310 = vld [vmem:[%s1309] sm:$0xf]
        %1311 = vrot.lane.b32.xlu0 %v255, 28
        %v1312 = vpop.permute.xlu0 %1311
        %1313 = vrot.lane.b32.xlu0 %v256, 28
        %v1314 = vpop.permute.xlu0 %1313
        %1315 = vrot.lane.b32.xlu0 %v257, 28
        %v1316 = vpop.permute.xlu0 %1315
        %1317 = vrot.lane.b32.xlu0 %v258, 28
        %v1318 = vpop.permute.xlu0 %1317
        %1319 = vrot.lane.b32.xlu0 %v266, 28
        %v1320 = vpop.permute.xlu0 %1319
        %vm1321 = vcmask 228352
        %v1322 = vsel %vm1321, %v1312, %v1314
        %v1323 = vsel %vm1321, %v1314, %v1316
        %v1324 = vsel %vm1321, %v1316, %v1318
        %v1325 = vsel %vm1321, %v1318, %v1320
        %v1327 = vsel %vm287, %v1310, 0
        %v1330 = vsel %vm291, %v1322, 0
        %v1333 = vsel %vm291, %v1323, 0
        %v1336 = vsel %vm291, %v1324, 0
        %v1339 = vsel %vm291, %v1325, 0
        %1341 = vmatprep.subr.bf16.mxu0 %v1333
        %1342 = vmatpush1.bf16.msra.mxu0 %v1330
        %1343 = vmatprep.subr.bf16.mxu0 0
        %1344 = vmatpush1.bf16.msra.mxu0 0
        %1345 = vmatprep.subr.bf16.mxu0 0
        %1346 = vmatpush1.bf16.msra.mxu0 0
        %1347 = vmatprep.subr.bf16.mxu0 0
        %1348 = vmatpush1.bf16.msra.mxu0 0
        %1349 = vmatprep.subr.bf16.mxu0 0
        %1350 = vmatpush1.bf16.msra.mxu0 0
        %1351 = vmatprep.subr.bf16.mxu0 0
        %1352 = vmatpush1.bf16.msra.mxu0 0
        %1353 = vmatprep.subr.bf16.mxu0 0
        %1354 = vmatpush1.bf16.msra.mxu0 0
        %1355 = vmatprep.subr.bf16.mxu0 0
        %1356 = vmatpush1.bf16.msra.mxu0 0
        %1357 = vmatprep.subr.bf16.mxu0 0
        %1358 = vmatpush1.bf16.msra.mxu0 0
        %1359 = vmatprep.subr.bf16.mxu0 0
        %1360 = vmatpush1.bf16.msra.mxu0 0
        %1361 = vmatprep.subr.bf16.mxu0 0
        %1362 = vmatpush1.bf16.msra.mxu0 0
        %1363 = vmatprep.subr.bf16.mxu0 0
        %1364 = vmatpush1.bf16.msra.mxu0 0
        %1365 = vmatprep.subr.bf16.mxu0 0
        %1366 = vmatpush1.bf16.msra.mxu0 0
        %1367 = vmatprep.subr.bf16.mxu0 0
        %1368 = vmatpush1.bf16.msra.mxu0 0
        %1369 = vmatprep.subr.bf16.mxu0 0
        %1370 = vmatpush1.bf16.msra.mxu0 0
        %1371 = vmatprep.subr.bf16.mxu0 0
        %1372 = vmatpush1.bf16.msra.mxu0 0
        %1373 = vmatprep.mubr.bf16.mxu0 0
        %1374 = vmatmul.mubr.bf16.gmra.mrb[0].mxu0 %v1327
        %v1375 = vpop.f32.mrb[0].mxu0
        %v1376 = vadd.f32 0.0, %v1375
        %v1377 = vpop.f32.mrb[0].mxu0
        %v1378 = vadd.f32 0.0, %v1377
        %v1379 = vpop.f32.mrb[0].mxu0
        %v1380 = vpop.f32.mrb[0].mxu0
        %1381 = vdwg.mxu0
        %1382 = vmatprep.subr.bf16.mxu0 %v1339
        %1383 = vmatpush1.bf16.msra.mxu0 %v1336
        %1384 = vmatprep.subr.bf16.mxu0 0
        %1385 = vmatpush1.bf16.msra.mxu0 0
        %1386 = vmatprep.subr.bf16.mxu0 0
        %1387 = vmatpush1.bf16.msra.mxu0 0
        %1388 = vmatprep.subr.bf16.mxu0 0
        %1389 = vmatpush1.bf16.msra.mxu0 0
        %1390 = vmatprep.subr.bf16.mxu0 0
        %1391 = vmatpush1.bf16.msra.mxu0 0
        %1392 = vmatprep.subr.bf16.mxu0 0
        %1393 = vmatpush1.bf16.msra.mxu0 0
        %1394 = vmatprep.subr.bf16.mxu0 0
        %1395 = vmatpush1.bf16.msra.mxu0 0
        %1396 = vmatprep.subr.bf16.mxu0 0
        %1397 = vmatpush1.bf16.msra.mxu0 0
        %1398 = vmatprep.subr.bf16.mxu0 0
        %1399 = vmatpush1.bf16.msra.mxu0 0
        %1400 = vmatprep.subr.bf16.mxu0 0
        %1401 = vmatpush1.bf16.msra.mxu0 0
        %1402 = vmatprep.subr.bf16.mxu0 0
        %1403 = vmatpush1.bf16.msra.mxu0 0
        %1404 = vmatprep.subr.bf16.mxu0 0
        %1405 = vmatpush1.bf16.msra.mxu0 0
        %1406 = vmatprep.subr.bf16.mxu0 0
        %1407 = vmatpush1.bf16.msra.mxu0 0
        %1408 = vmatprep.subr.bf16.mxu0 0
        %1409 = vmatpush1.bf16.msra.mxu0 0
        %1410 = vmatprep.subr.bf16.mxu0 0
        %1411 = vmatpush1.bf16.msra.mxu0 0
        %1412 = vmatprep.subr.bf16.mxu0 0
        %1413 = vmatpush1.bf16.msra.mxu0 0
        %1414 = vmatprep.mubr.bf16.mxu0 0
        %1415 = vmatmul.mubr.bf16.gmra.mrb[0].mxu0 %v1327
        %v1416 = vpop.f32.mrb[0].mxu0
        %v1417 = vadd.f32 0.0, %v1416
        %v1418 = vpop.f32.mrb[0].mxu0
        %v1419 = vadd.f32 0.0, %v1418
        %v1420 = vpop.f32.mrb[0].mxu0
        %v1421 = vpop.f32.mrb[0].mxu0
        %1422 = vdwg.mxu0
        %v1423 = vadd.f32 %v1305, %v1376
        %v1424 = vadd.f32 %v1306, %v1378
        %v1425 = vadd.f32 %v1307, %v1417
        %v1426 = vadd.f32 %v1308, %v1419
        %s1427 = scalar_lea.vmem %s1, 40
        %v1428 = vld [vmem:[%s1427] sm:$0xf]
        %1429 = vrot.lane.b32.xlu0 %v255, 27
        %v1430 = vpop.permute.xlu0 %1429
        %1431 = vrot.lane.b32.xlu0 %v256, 27
        %v1432 = vpop.permute.xlu0 %1431
        %1433 = vrot.lane.b32.xlu0 %v257, 27
        %v1434 = vpop.permute.xlu0 %1433
        %1435 = vrot.lane.b32.xlu0 %v258, 27
        %v1436 = vpop.permute.xlu0 %1435
        %1437 = vrot.lane.b32.xlu0 %v266, 27
        %v1438 = vpop.permute.xlu0 %1437
        %vm1439 = vcmask 220160
        %v1440 = vsel %vm1439, %v1430, %v1432
        %v1441 = vsel %vm1439, %v1432, %v1434
        %v1442 = vsel %vm1439, %v1434, %v1436
        %v1443 = vsel %vm1439, %v1436, %v1438
        %v1445 = vsel %vm287, %v1428, 0
        %v1448 = vsel %vm291, %v1440, 0
        %v1451 = vsel %vm291, %v1441, 0
        %v1454 = vsel %vm291, %v1442, 0
        %v1457 = vsel %vm291, %v1443, 0
        %1459 = vmatprep.subr.bf16.mxu0 %v1451
        %1460 = vmatpush1.bf16.msra.mxu0 %v1448
        %1461 = vmatprep.subr.bf16.mxu0 0
        %1462 = vmatpush1.bf16.msra.mxu0 0
        %1463 = vmatprep.subr.bf16.mxu0 0
        %1464 = vmatpush1.bf16.msra.mxu0 0
        %1465 = vmatprep.subr.bf16.mxu0 0
        %1466 = vmatpush1.bf16.msra.mxu0 0
        %1467 = vmatprep.subr.bf16.mxu0 0
        %1468 = vmatpush1.bf16.msra.mxu0 0
        %1469 = vmatprep.subr.bf16.mxu0 0
        %1470 = vmatpush1.bf16.msra.mxu0 0
        %1471 = vmatprep.subr.bf16.mxu0 0
        %1472 = vmatpush1.bf16.msra.mxu0 0
        %1473 = vmatprep.subr.bf16.mxu0 0
        %1474 = vmatpush1.bf16.msra.mxu0 0
        %1475 = vmatprep.subr.bf16.mxu0 0
        %1476 = vmatpush1.bf16.msra.mxu0 0
        %1477 = vmatprep.subr.bf16.mxu0 0
        %1478 = vmatpush1.bf16.msra.mxu0 0
        %1479 = vmatprep.subr.bf16.mxu0 0
        %1480 = vmatpush1.bf16.msra.mxu0 0
        %1481 = vmatprep.subr.bf16.mxu0 0
        %1482 = vmatpush1.bf16.msra.mxu0 0
        %1483 = vmatprep.subr.bf16.mxu0 0
        %1484 = vmatpush1.bf16.msra.mxu0 0
        %1485 = vmatprep.subr.bf16.mxu0 0
        %1486 = vmatpush1.bf16.msra.mxu0 0
        %1487 = vmatprep.subr.bf16.mxu0 0
        %1488 = vmatpush1.bf16.msra.mxu0 0
        %1489 = vmatprep.subr.bf16.mxu0 0
        %1490 = vmatpush1.bf16.msra.mxu0 0
        %1491 = vmatprep.mubr.bf16.mxu0 0
        %1492 = vmatmul.mubr.bf16.gmra.mrb[0].mxu0 %v1445
        %v1493 = vpop.f32.mrb[0].mxu0
        %v1494 = vadd.f32 0.0, %v1493
        %v1495 = vpop.f32.mrb[0].mxu0
        %v1496 = vadd.f32 0.0, %v1495
        %v1497 = vpop.f32.mrb[0].mxu0
        %v1498 = vpop.f32.mrb[0].mxu0
        %1499 = vdwg.mxu0
        %1500 = vmatprep.subr.bf16.mxu0 %v1457
        %1501 = vmatpush1.bf16.msra.mxu0 %v1454
        %1502 = vmatprep.subr.bf16.mxu0 0
        %1503 = vmatpush1.bf16.msra.mxu0 0
        %1504 = vmatprep.subr.bf16.mxu0 0
        %1505 = vmatpush1.bf16.msra.mxu0 0
        %1506 = vmatprep.subr.bf16.mxu0 0
        %1507 = vmatpush1.bf16.msra.mxu0 0
        %1508 = vmatprep.subr.bf16.mxu0 0
        %1509 = vmatpush1.bf16.msra.mxu0 0
        %1510 = vmatprep.subr.bf16.mxu0 0
        %1511 = vmatpush1.bf16.msra.mxu0 0
        %1512 = vmatprep.subr.bf16.mxu0 0
        %1513 = vmatpush1.bf16.msra.mxu0 0
        %1514 = vmatprep.subr.bf16.mxu0 0
        %1515 = vmatpush1.bf16.msra.mxu0 0
        %1516 = vmatprep.subr.bf16.mxu0 0
        %1517 = vmatpush1.bf16.msra.mxu0 0
        %1518 = vmatprep.subr.bf16.mxu0 0
        %1519 = vmatpush1.bf16.msra.mxu0 0
        %1520 = vmatprep.subr.bf16.mxu0 0
        %1521 = vmatpush1.bf16.msra.mxu0 0
        %1522 = vmatprep.subr.bf16.mxu0 0
        %1523 = vmatpush1.bf16.msra.mxu0 0
        %1524 = vmatprep.subr.bf16.mxu0 0
        %1525 = vmatpush1.bf16.msra.mxu0 0
        %1526 = vmatprep.subr.bf16.mxu0 0
        %1527 = vmatpush1.bf16.msra.mxu0 0
        %1528 = vmatprep.subr.bf16.mxu0 0
        %1529 = vmatpush1.bf16.msra.mxu0 0
        %1530 = vmatprep.subr.bf16.mxu0 0
        %1531 = vmatpush1.bf16.msra.mxu0 0
        %1532 = vmatprep.mubr.bf16.mxu0 0
        %1533 = vmatmul.mubr.bf16.gmra.mrb[0].mxu0 %v1445
        %v1534 = vpop.f32.mrb[0].mxu0
        %v1535 = vadd.f32 0.0, %v1534
        %v1536 = vpop.f32.mrb[0].mxu0
        %v1537 = vadd.f32 0.0, %v1536
        %v1538 = vpop.f32.mrb[0].mxu0
        %v1539 = vpop.f32.mrb[0].mxu0
        %1540 = vdwg.mxu0
        %v1541 = vadd.f32 %v1423, %v1494
        %v1542 = vadd.f32 %v1424, %v1496
        %v1543 = vadd.f32 %v1425, %v1535
        %v1544 = vadd.f32 %v1426, %v1537
        %s1545 = scalar_lea.vmem %s1, 44
        %v1546 = vld [vmem:[%s1545] sm:$0xf]
        %1547 = vrot.lane.b32.xlu0 %v255, 26
        %v1548 = vpop.permute.xlu0 %1547
        %1549 = vrot.lane.b32.xlu0 %v256, 26
        %v1550 = vpop.permute.xlu0 %1549
        %1551 = vrot.lane.b32.xlu0 %v257, 26
        %v1552 = vpop.permute.xlu0 %1551
        %1553 = vrot.lane.b32.xlu0 %v258, 26
        %v1554 = vpop.permute.xlu0 %1553
        %1555 = vrot.lane.b32.xlu0 %v266, 26
        %v1556 = vpop.permute.xlu0 %1555
        %vm1557 = vcmask 211968
        %v1558 = vsel %vm1557, %v1548, %v1550
        %v1559 = vsel %vm1557, %v1550, %v1552
        %v1560 = vsel %vm1557, %v1552, %v1554
        %v1561 = vsel %vm1557, %v1554, %v1556
        %v1563 = vsel %vm287, %v1546, 0
        %v1566 = vsel %vm291, %v1558, 0
        %v1569 = vsel %vm291, %v1559, 0
        %v1572 = vsel %vm291, %v1560, 0
        %v1575 = vsel %vm291, %v1561, 0
        %1577 = vmatprep.subr.bf16.mxu0 %v1569
        %1578 = vmatpush1.bf16.msra.mxu0 %v1566
        %1579 = vmatprep.subr.bf16.mxu0 0
        %1580 = vmatpush1.bf16.msra.mxu0 0
        %1581 = vmatprep.subr.bf16.mxu0 0
        %1582 = vmatpush1.bf16.msra.mxu0 0
        %1583 = vmatprep.subr.bf16.mxu0 0
        %1584 = vmatpush1.bf16.msra.mxu0 0
        %1585 = vmatprep.subr.bf16.mxu0 0
        %1586 = vmatpush1.bf16.msra.mxu0 0
        %1587 = vmatprep.subr.bf16.mxu0 0
        %1588 = vmatpush1.bf16.msra.mxu0 0
        %1589 = vmatprep.subr.bf16.mxu0 0
        %1590 = vmatpush1.bf16.msra.mxu0 0
        %1591 = vmatprep.subr.bf16.mxu0 0
        %1592 = vmatpush1.bf16.msra.mxu0 0
        %1593 = vmatprep.subr.bf16.mxu0 0
        %1594 = vmatpush1.bf16.msra.mxu0 0
        %1595 = vmatprep.subr.bf16.mxu0 0
        %1596 = vmatpush1.bf16.msra.mxu0 0
        %1597 = vmatprep.subr.bf16.mxu0 0
        %1598 = vmatpush1.bf16.msra.mxu0 0
        %1599 = vmatprep.subr.bf16.mxu0 0
        %1600 = vmatpush1.bf16.msra.mxu0 0
        %1601 = vmatprep.subr.bf16.mxu0 0
        %1602 = vmatpush1.bf16.msra.mxu0 0
        %1603 = vmatprep.subr.bf16.mxu0 0
        %1604 = vmatpush1.bf16.msra.mxu0 0
        %1605 = vmatprep.subr.bf16.mxu0 0
        %1606 = vmatpush1.bf16.msra.mxu0 0
        %1607 = vmatprep.subr.bf16.mxu0 0
        %1608 = vmatpush1.bf16.msra.mxu0 0
        %1609 = vmatprep.mubr.bf16.mxu0 0
        %1610 = vmatmul.mubr.bf16.gmra.mrb[0].mxu0 %v1563
        %v1611 = vpop.f32.mrb[0].mxu0
        %v1612 = vadd.f32 0.0, %v1611
        %v1613 = vpop.f32.mrb[0].mxu0
        %v1614 = vadd.f32 0.0, %v1613
        %v1615 = vpop.f32.mrb[0].mxu0
        %v1616 = vpop.f32.mrb[0].mxu0
        %1617 = vdwg.mxu0
        %1618 = vmatprep.subr.bf16.mxu0 %v1575
        %1619 = vmatpush1.bf16.msra.mxu0 %v1572
        %1620 = vmatprep.subr.bf16.mxu0 0
        %1621 = vmatpush1.bf16.msra.mxu0 0
        %1622 = vmatprep.subr.bf16.mxu0 0
        %1623 = vmatpush1.bf16.msra.mxu0 0
        %1624 = vmatprep.subr.bf16.mxu0 0
        %1625 = vmatpush1.bf16.msra.mxu0 0
        %1626 = vmatprep.subr.bf16.mxu0 0
        %1627 = vmatpush1.bf16.msra.mxu0 0
        %1628 = vmatprep.subr.bf16.mxu0 0
        %1629 = vmatpush1.bf16.msra.mxu0 0
        %1630 = vmatprep.subr.bf16.mxu0 0
        %1631 = vmatpush1.bf16.msra.mxu0 0
        %1632 = vmatprep.subr.bf16.mxu0 0
        %1633 = vmatpush1.bf16.msra.mxu0 0
        %1634 = vmatprep.subr.bf16.mxu0 0
        %1635 = vmatpush1.bf16.msra.mxu0 0
        %1636 = vmatprep.subr.bf16.mxu0 0
        %1637 = vmatpush1.bf16.msra.mxu0 0
        %1638 = vmatprep.subr.bf16.mxu0 0
        %1639 = vmatpush1.bf16.msra.mxu0 0
        %1640 = vmatprep.subr.bf16.mxu0 0
        %1641 = vmatpush1.bf16.msra.mxu0 0
        %1642 = vmatprep.subr.bf16.mxu0 0
        %1643 = vmatpush1.bf16.msra.mxu0 0
        %1644 = vmatprep.subr.bf16.mxu0 0
        %1645 = vmatpush1.bf16.msra.mxu0 0
        %1646 = vmatprep.subr.bf16.mxu0 0
        %1647 = vmatpush1.bf16.msra.mxu0 0
        %1648 = vmatprep.subr.bf16.mxu0 0
        %1649 = vmatpush1.bf16.msra.mxu0 0
        %1650 = vmatprep.mubr.bf16.mxu0 0
        %1651 = vmatmul.mubr.bf16.gmra.mrb[0].mxu0 %v1563
        %v1652 = vpop.f32.mrb[0].mxu0
        %v1653 = vadd.f32 0.0, %v1652
        %v1654 = vpop.f32.mrb[0].mxu0
        %v1655 = vadd.f32 0.0, %v1654
        %v1656 = vpop.f32.mrb[0].mxu0
        %v1657 = vpop.f32.mrb[0].mxu0
        %1658 = vdwg.mxu0
        %v1659 = vadd.f32 %v1541, %v1612
        %v1660 = vadd.f32 %v1542, %v1614
        %v1661 = vadd.f32 %v1543, %v1653
        %v1662 = vadd.f32 %v1544, %v1655
        %s1663 = scalar_lea.vmem %s1, 48
        %v1664 = vld [vmem:[%s1663] sm:$0xf]
        %1665 = vrot.lane.b32.xlu0 %v255, 18
        %v1666 = vpop.permute.xlu0 %1665
        %1667 = vrot.lane.b32.xlu0 %v256, 18
        %v1668 = vpop.permute.xlu0 %1667
        %1669 = vrot.lane.b32.xlu0 %v257, 18
        %v1670 = vpop.permute.xlu0 %1669
        %1671 = vrot.lane.b32.xlu0 %v258, 18
        %v1672 = vpop.permute.xlu0 %1671
        %1673 = vrot.lane.b32.xlu0 %v266, 18
        %v1674 = vpop.permute.xlu0 %1673
        %vm1675 = vcmask 146432
        %v1676 = vsel %vm1675, %v1666, %v1668
        %v1677 = vsel %vm1675, %v1668, %v1670
        %v1678 = vsel %vm1675, %v1670, %v1672
        %v1679 = vsel %vm1675, %v1672, %v1674
        %v1681 = vsel %vm287, %v1664, 0
        %v1684 = vsel %vm291, %v1676, 0
        %v1687 = vsel %vm291, %v1677, 0
        %v1690 = vsel %vm291, %v1678, 0
        %v1693 = vsel %vm291, %v1679, 0
        %1695 = vmatprep.subr.bf16.mxu0 %v1687
        %1696 = vmatpush1.bf16.msra.mxu0 %v1684
        %1697 = vmatprep.subr.bf16.mxu0 0
        %1698 = vmatpush1.bf16.msra.mxu0 0
        %1699 = vmatprep.subr.bf16.mxu0 0
        %1700 = vmatpush1.bf16.msra.mxu0 0
        %1701 = vmatprep.subr.bf16.mxu0 0
        %1702 = vmatpush1.bf16.msra.mxu0 0
        %1703 = vmatprep.subr.bf16.mxu0 0
        %1704 = vmatpush1.bf16.msra.mxu0 0
        %1705 = vmatprep.subr.bf16.mxu0 0
        %1706 = vmatpush1.bf16.msra.mxu0 0
        %1707 = vmatprep.subr.bf16.mxu0 0
        %1708 = vmatpush1.bf16.msra.mxu0 0
        %1709 = vmatprep.subr.bf16.mxu0 0
        %1710 = vmatpush1.bf16.msra.mxu0 0
        %1711 = vmatprep.subr.bf16.mxu0 0
        %1712 = vmatpush1.bf16.msra.mxu0 0
        %1713 = vmatprep.subr.bf16.mxu0 0
        %1714 = vmatpush1.bf16.msra.mxu0 0
        %1715 = vmatprep.subr.bf16.mxu0 0
        %1716 = vmatpush1.bf16.msra.mxu0 0
        %1717 = vmatprep.subr.bf16.mxu0 0
        %1718 = vmatpush1.bf16.msra.mxu0 0
        %1719 = vmatprep.subr.bf16.mxu0 0
        %1720 = vmatpush1.bf16.msra.mxu0 0
        %1721 = vmatprep.subr.bf16.mxu0 0
        %1722 = vmatpush1.bf16.msra.mxu0 0
        %1723 = vmatprep.subr.bf16.mxu0 0
        %1724 = vmatpush1.bf16.msra.mxu0 0
        %1725 = vmatprep.subr.bf16.mxu0 0
        %1726 = vmatpush1.bf16.msra.mxu0 0
        %1727 = vmatprep.mubr.bf16.mxu0 0
        %1728 = vmatmul.mubr.bf16.gmra.mrb[0].mxu0 %v1681
        %v1729 = vpop.f32.mrb[0].mxu0
        %v1730 = vadd.f32 0.0, %v1729
        %v1731 = vpop.f32.mrb[0].mxu0
        %v1732 = vadd.f32 0.0, %v1731
        %v1733 = vpop.f32.mrb[0].mxu0
        %v1734 = vpop.f32.mrb[0].mxu0
        %1735 = vdwg.mxu0
        %1736 = vmatprep.subr.bf16.mxu0 %v1693
        %1737 = vmatpush1.bf16.msra.mxu0 %v1690
        %1738 = vmatprep.subr.bf16.mxu0 0
        %1739 = vmatpush1.bf16.msra.mxu0 0
        %1740 = vmatprep.subr.bf16.mxu0 0
        %1741 = vmatpush1.bf16.msra.mxu0 0
        %1742 = vmatprep.subr.bf16.mxu0 0
        %1743 = vmatpush1.bf16.msra.mxu0 0
        %1744 = vmatprep.subr.bf16.mxu0 0
        %1745 = vmatpush1.bf16.msra.mxu0 0
        %1746 = vmatprep.subr.bf16.mxu0 0
        %1747 = vmatpush1.bf16.msra.mxu0 0
        %1748 = vmatprep.subr.bf16.mxu0 0
        %1749 = vmatpush1.bf16.msra.mxu0 0
        %1750 = vmatprep.subr.bf16.mxu0 0
        %1751 = vmatpush1.bf16.msra.mxu0 0
        %1752 = vmatprep.subr.bf16.mxu0 0
        %1753 = vmatpush1.bf16.msra.mxu0 0
        %1754 = vmatprep.subr.bf16.mxu0 0
        %1755 = vmatpush1.bf16.msra.mxu0 0
        %1756 = vmatprep.subr.bf16.mxu0 0
        %1757 = vmatpush1.bf16.msra.mxu0 0
        %1758 = vmatprep.subr.bf16.mxu0 0
        %1759 = vmatpush1.bf16.msra.mxu0 0
        %1760 = vmatprep.subr.bf16.mxu0 0
        %1761 = vmatpush1.bf16.msra.mxu0 0
        %1762 = vmatprep.subr.bf16.mxu0 0
        %1763 = vmatpush1.bf16.msra.mxu0 0
        %1764 = vmatprep.subr.bf16.mxu0 0
        %1765 = vmatpush1.bf16.msra.mxu0 0
        %1766 = vmatprep.subr.bf16.mxu0 0
        %1767 = vmatpush1.bf16.msra.mxu0 0
        %1768 = vmatprep.mubr.bf16.mxu0 0
        %1769 = vmatmul.mubr.bf16.gmra.mrb[0].mxu0 %v1681
        %v1770 = vpop.f32.mrb[0].mxu0
        %v1771 = vadd.f32 0.0, %v1770
        %v1772 = vpop.f32.mrb[0].mxu0
        %v1773 = vadd.f32 0.0, %v1772
        %v1774 = vpop.f32.mrb[0].mxu0
        %v1775 = vpop.f32.mrb[0].mxu0
        %1776 = vdwg.mxu0
        %v1777 = vadd.f32 %v1659, %v1730
        %v1778 = vadd.f32 %v1660, %v1732
        %v1779 = vadd.f32 %v1661, %v1771
        %v1780 = vadd.f32 %v1662, %v1773
        %s1781 = scalar_lea.vmem %s1, 52
        %v1782 = vld [vmem:[%s1781] sm:$0xf]
        %1783 = vrot.lane.b32.xlu0 %v255, 17
        %v1784 = vpop.permute.xlu0 %1783
        %1785 = vrot.lane.b32.xlu0 %v256, 17
        %v1786 = vpop.permute.xlu0 %1785
        %1787 = vrot.lane.b32.xlu0 %v257, 17
        %v1788 = vpop.permute.xlu0 %1787
        %1789 = vrot.lane.b32.xlu0 %v258, 17
        %v1790 = vpop.permute.xlu0 %1789
        %1791 = vrot.lane.b32.xlu0 %v266, 17
        %v1792 = vpop.permute.xlu0 %1791
        %vm1793 = vcmask 138240
        %v1794 = vsel %vm1793, %v1784, %v1786
        %v1795 = vsel %vm1793, %v1786, %v1788
        %v1796 = vsel %vm1793, %v1788, %v1790
        %v1797 = vsel %vm1793, %v1790, %v1792
        %v1799 = vsel %vm287, %v1782, 0
        %v1802 = vsel %vm291, %v1794, 0
        %v1805 = vsel %vm291, %v1795, 0
        %v1808 = vsel %vm291, %v1796, 0
        %v1811 = vsel %vm291, %v1797, 0
        %1813 = vmatprep.subr.bf16.mxu0 %v1805
        %1814 = vmatpush1.bf16.msra.mxu0 %v1802
        %1815 = vmatprep.subr.bf16.mxu0 0
        %1816 = vmatpush1.bf16.msra.mxu0 0
        %1817 = vmatprep.subr.bf16.mxu0 0
        %1818 = vmatpush1.bf16.msra.mxu0 0
        %1819 = vmatprep.subr.bf16.mxu0 0
        %1820 = vmatpush1.bf16.msra.mxu0 0
        %1821 = vmatprep.subr.bf16.mxu0 0
        %1822 = vmatpush1.bf16.msra.mxu0 0
        %1823 = vmatprep.subr.bf16.mxu0 0
        %1824 = vmatpush1.bf16.msra.mxu0 0
        %1825 = vmatprep.subr.bf16.mxu0 0
        %1826 = vmatpush1.bf16.msra.mxu0 0
        %1827 = vmatprep.subr.bf16.mxu0 0
        %1828 = vmatpush1.bf16.msra.mxu0 0
        %1829 = vmatprep.subr.bf16.mxu0 0
        %1830 = vmatpush1.bf16.msra.mxu0 0
        %1831 = vmatprep.subr.bf16.mxu0 0
        %1832 = vmatpush1.bf16.msra.mxu0 0
        %1833 = vmatprep.subr.bf16.mxu0 0
        %1834 = vmatpush1.bf16.msra.mxu0 0
        %1835 = vmatprep.subr.bf16.mxu0 0
        %1836 = vmatpush1.bf16.msra.mxu0 0
        %1837 = vmatprep.subr.bf16.mxu0 0
        %1838 = vmatpush1.bf16.msra.mxu0 0
        %1839 = vmatprep.subr.bf16.mxu0 0
        %1840 = vmatpush1.bf16.msra.mxu0 0
        %1841 = vmatprep.subr.bf16.mxu0 0
        %1842 = vmatpush1.bf16.msra.mxu0 0
        %1843 = vmatprep.subr.bf16.mxu0 0
        %1844 = vmatpush1.bf16.msra.mxu0 0
        %1845 = vmatprep.mubr.bf16.mxu0 0
        %1846 = vmatmul.mubr.bf16.gmra.mrb[0].mxu0 %v1799
        %v1847 = vpop.f32.mrb[0].mxu0
        %v1848 = vadd.f32 0.0, %v1847
        %v1849 = vpop.f32.mrb[0].mxu0
        %v1850 = vadd.f32 0.0, %v1849
        %v1851 = vpop.f32.mrb[0].mxu0
        %v1852 = vpop.f32.mrb[0].mxu0
        %1853 = vdwg.mxu0
        %1854 = vmatprep.subr.bf16.mxu0 %v1811
        %1855 = vmatpush1.bf16.msra.mxu0 %v1808
        %1856 = vmatprep.subr.bf16.mxu0 0
        %1857 = vmatpush1.bf16.msra.mxu0 0
        %1858 = vmatprep.subr.bf16.mxu0 0
        %1859 = vmatpush1.bf16.msra.mxu0 0
        %1860 = vmatprep.subr.bf16.mxu0 0
        %1861 = vmatpush1.bf16.msra.mxu0 0
        %1862 = vmatprep.subr.bf16.mxu0 0
        %1863 = vmatpush1.bf16.msra.mxu0 0
        %1864 = vmatprep.subr.bf16.mxu0 0
        %1865 = vmatpush1.bf16.msra.mxu0 0
        %1866 = vmatprep.subr.bf16.mxu0 0
        %1867 = vmatpush1.bf16.msra.mxu0 0
        %1868 = vmatprep.subr.bf16.mxu0 0
        %1869 = vmatpush1.bf16.msra.mxu0 0
        %1870 = vmatprep.subr.bf16.mxu0 0
        %1871 = vmatpush1.bf16.msra.mxu0 0
        %1872 = vmatprep.subr.bf16.mxu0 0
        %1873 = vmatpush1.bf16.msra.mxu0 0
        %1874 = vmatprep.subr.bf16.mxu0 0
        %1875 = vmatpush1.bf16.msra.mxu0 0
        %1876 = vmatprep.subr.bf16.mxu0 0
        %1877 = vmatpush1.bf16.msra.mxu0 0
        %1878 = vmatprep.subr.bf16.mxu0 0
        %1879 = vmatpush1.bf16.msra.mxu0 0
        %1880 = vmatprep.subr.bf16.mxu0 0
        %1881 = vmatpush1.bf16.msra.mxu0 0
        %1882 = vmatprep.subr.bf16.mxu0 0
        %1883 = vmatpush1.bf16.msra.mxu0 0
        %1884 = vmatprep.subr.bf16.mxu0 0
        %1885 = vmatpush1.bf16.msra.mxu0 0
        %1886 = vmatprep.mubr.bf16.mxu0 0
        %1887 = vmatmul.mubr.bf16.gmra.mrb[0].mxu0 %v1799
        %v1888 = vpop.f32.mrb[0].mxu0
        %v1889 = vadd.f32 0.0, %v1888
        %v1890 = vpop.f32.mrb[0].mxu0
        %v1891 = vadd.f32 0.0, %v1890
        %v1892 = vpop.f32.mrb[0].mxu0
        %v1893 = vpop.f32.mrb[0].mxu0
        %1894 = vdwg.mxu0
        %v1895 = vadd.f32 %v1777, %v1848
        %v1896 = vadd.f32 %v1778, %v1850
        %v1897 = vadd.f32 %v1779, %v1889
        %v1898 = vadd.f32 %v1780, %v1891
        %s1899 = scalar_lea.vmem %s1, 56
        %v1900 = vld [vmem:[%s1899] sm:$0xf]
        %1901 = vrot.lane.b32.xlu0 %v255, 16
        %v1902 = vpop.permute.xlu0 %1901
        %1903 = vrot.lane.b32.xlu0 %v256, 16
        %v1904 = vpop.permute.xlu0 %1903
        %1905 = vrot.lane.b32.xlu0 %v257, 16
        %v1906 = vpop.permute.xlu0 %1905
        %1907 = vrot.lane.b32.xlu0 %v258, 16
        %v1908 = vpop.permute.xlu0 %1907
        %1909 = vrot.lane.b32.xlu0 %v266, 16
        %v1910 = vpop.permute.xlu0 %1909
        %vm1911 = vcmask 130048
        %v1912 = vsel %vm1911, %v1902, %v1904
        %v1913 = vsel %vm1911, %v1904, %v1906
        %v1914 = vsel %vm1911, %v1906, %v1908
        %v1915 = vsel %vm1911, %v1908, %v1910
        %v1917 = vsel %vm287, %v1900, 0
        %v1920 = vsel %vm291, %v1912, 0
        %v1923 = vsel %vm291, %v1913, 0
        %v1926 = vsel %vm291, %v1914, 0
        %v1929 = vsel %vm291, %v1915, 0
        %1931 = vmatprep.subr.bf16.mxu0 %v1923
        %1932 = vmatpush1.bf16.msra.mxu0 %v1920
        %1933 = vmatprep.subr.bf16.mxu0 0
        %1934 = vmatpush1.bf16.msra.mxu0 0
        %1935 = vmatprep.subr.bf16.mxu0 0
        %1936 = vmatpush1.bf16.msra.mxu0 0
        %1937 = vmatprep.subr.bf16.mxu0 0
        %1938 = vmatpush1.bf16.msra.mxu0 0
        %1939 = vmatprep.subr.bf16.mxu0 0
        %1940 = vmatpush1.bf16.msra.mxu0 0
        %1941 = vmatprep.subr.bf16.mxu0 0
        %1942 = vmatpush1.bf16.msra.mxu0 0
        %1943 = vmatprep.subr.bf16.mxu0 0
        %1944 = vmatpush1.bf16.msra.mxu0 0
        %1945 = vmatprep.subr.bf16.mxu0 0
        %1946 = vmatpush1.bf16.msra.mxu0 0
        %1947 = vmatprep.subr.bf16.mxu0 0
        %1948 = vmatpush1.bf16.msra.mxu0 0
        %1949 = vmatprep.subr.bf16.mxu0 0
        %1950 = vmatpush1.bf16.msra.mxu0 0
        %1951 = vmatprep.subr.bf16.mxu0 0
        %1952 = vmatpush1.bf16.msra.mxu0 0
        %1953 = vmatprep.subr.bf16.mxu0 0
        %1954 = vmatpush1.bf16.msra.mxu0 0
        %1955 = vmatprep.subr.bf16.mxu0 0
        %1956 = vmatpush1.bf16.msra.mxu0 0
        %1957 = vmatprep.subr.bf16.mxu0 0
        %1958 = vmatpush1.bf16.msra.mxu0 0
        %1959 = vmatprep.subr.bf16.mxu0 0
        %1960 = vmatpush1.bf16.msra.mxu0 0
        %1961 = vmatprep.subr.bf16.mxu0 0
        %1962 = vmatpush1.bf16.msra.mxu0 0
        %1963 = vmatprep.mubr.bf16.mxu0 0
        %1964 = vmatmul.mubr.bf16.gmra.mrb[0].mxu0 %v1917
        %v1965 = vpop.f32.mrb[0].mxu0
        %v1966 = vadd.f32 0.0, %v1965
        %v1967 = vpop.f32.mrb[0].mxu0
        %v1968 = vadd.f32 0.0, %v1967
        %v1969 = vpop.f32.mrb[0].mxu0
        %v1970 = vpop.f32.mrb[0].mxu0
        %1971 = vdwg.mxu0
        %1972 = vmatprep.subr.bf16.mxu0 %v1929
        %1973 = vmatpush1.bf16.msra.mxu0 %v1926
        %1974 = vmatprep.subr.bf16.mxu0 0
        %1975 = vmatpush1.bf16.msra.mxu0 0
        %1976 = vmatprep.subr.bf16.mxu0 0
        %1977 = vmatpush1.bf16.msra.mxu0 0
        %1978 = vmatprep.subr.bf16.mxu0 0
        %1979 = vmatpush1.bf16.msra.mxu0 0
        %1980 = vmatprep.subr.bf16.mxu0 0
        %1981 = vmatpush1.bf16.msra.mxu0 0
        %1982 = vmatprep.subr.bf16.mxu0 0
        %1983 = vmatpush1.bf16.msra.mxu0 0
        %1984 = vmatprep.subr.bf16.mxu0 0
        %1985 = vmatpush1.bf16.msra.mxu0 0
        %1986 = vmatprep.subr.bf16.mxu0 0
        %1987 = vmatpush1.bf16.msra.mxu0 0
        %1988 = vmatprep.subr.bf16.mxu0 0
        %1989 = vmatpush1.bf16.msra.mxu0 0
        %1990 = vmatprep.subr.bf16.mxu0 0
        %1991 = vmatpush1.bf16.msra.mxu0 0
        %1992 = vmatprep.subr.bf16.mxu0 0
        %1993 = vmatpush1.bf16.msra.mxu0 0
        %1994 = vmatprep.subr.bf16.mxu0 0
        %1995 = vmatpush1.bf16.msra.mxu0 0
        %1996 = vmatprep.subr.bf16.mxu0 0
        %1997 = vmatpush1.bf16.msra.mxu0 0
        %1998 = vmatprep.subr.bf16.mxu0 0
        %1999 = vmatpush1.bf16.msra.mxu0 0
        %2000 = vmatprep.subr.bf16.mxu0 0
        %2001 = vmatpush1.bf16.msra.mxu0 0
        %2002 = vmatprep.subr.bf16.mxu0 0
        %2003 = vmatpush1.bf16.msra.mxu0 0
        %2004 = vmatprep.mubr.bf16.mxu0 0
        %2005 = vmatmul.mubr.bf16.gmra.mrb[0].mxu0 %v1917
        %v2006 = vpop.f32.mrb[0].mxu0
        %v2007 = vadd.f32 0.0, %v2006
        %v2008 = vpop.f32.mrb[0].mxu0
        %v2009 = vadd.f32 0.0, %v2008
        %v2010 = vpop.f32.mrb[0].mxu0
        %v2011 = vpop.f32.mrb[0].mxu0
        %2012 = vdwg.mxu0
        %v2013 = vadd.f32 %v1895, %v1966
        %v2014 = vadd.f32 %v1896, %v1968
        %v2015 = vadd.f32 %v1897, %v2007
        %v2016 = vadd.f32 %v1898, %v2009
        %s2017 = scalar_lea.vmem %s1, 60
        %v2018 = vld [vmem:[%s2017] sm:$0xf]
        %2019 = vrot.lane.b32.xlu0 %v255, 8
        %v2020 = vpop.permute.xlu0 %2019
        %2021 = vrot.lane.b32.xlu0 %v256, 8
        %v2022 = vpop.permute.xlu0 %2021
        %2023 = vrot.lane.b32.xlu0 %v257, 8
        %v2024 = vpop.permute.xlu0 %2023
        %2025 = vrot.lane.b32.xlu0 %v258, 8
        %v2026 = vpop.permute.xlu0 %2025
        %2027 = vrot.lane.b32.xlu0 %v266, 8
        %v2028 = vpop.permute.xlu0 %2027
        %vm2029 = vcmask 64512
        %v2030 = vsel %vm2029, %v2020, %v2022
        %v2031 = vsel %vm2029, %v2022, %v2024
        %v2032 = vsel %vm2029, %v2024, %v2026
        %v2033 = vsel %vm2029, %v2026, %v2028
        %v2035 = vsel %vm287, %v2018, 0
        %v2038 = vsel %vm291, %v2030, 0
        %v2041 = vsel %vm291, %v2031, 0
        %v2044 = vsel %vm291, %v2032, 0
        %v2047 = vsel %vm291, %v2033, 0
        %2049 = vmatprep.subr.bf16.mxu0 %v2041
        %2050 = vmatpush1.bf16.msra.mxu0 %v2038
        %2051 = vmatprep.subr.bf16.mxu0 0
        %2052 = vmatpush1.bf16.msra.mxu0 0
        %2053 = vmatprep.subr.bf16.mxu0 0
        %2054 = vmatpush1.bf16.msra.mxu0 0
        %2055 = vmatprep.subr.bf16.mxu0 0
        %2056 = vmatpush1.bf16.msra.mxu0 0
        %2057 = vmatprep.subr.bf16.mxu0 0
        %2058 = vmatpush1.bf16.msra.mxu0 0
        %2059 = vmatprep.subr.bf16.mxu0 0
        %2060 = vmatpush1.bf16.msra.mxu0 0
        %2061 = vmatprep.subr.bf16.mxu0 0
        %2062 = vmatpush1.bf16.msra.mxu0 0
        %2063 = vmatprep.subr.bf16.mxu0 0
        %2064 = vmatpush1.bf16.msra.mxu0 0
        %2065 = vmatprep.subr.bf16.mxu0 0
        %2066 = vmatpush1.bf16.msra.mxu0 0
        %2067 = vmatprep.subr.bf16.mxu0 0
        %2068 = vmatpush1.bf16.msra.mxu0 0
        %2069 = vmatprep.subr.bf16.mxu0 0
        %2070 = vmatpush1.bf16.msra.mxu0 0
        %2071 = vmatprep.subr.bf16.mxu0 0
        %2072 = vmatpush1.bf16.msra.mxu0 0
        %2073 = vmatprep.subr.bf16.mxu0 0
        %2074 = vmatpush1.bf16.msra.mxu0 0
        %2075 = vmatprep.subr.bf16.mxu0 0
        %2076 = vmatpush1.bf16.msra.mxu0 0
        %2077 = vmatprep.subr.bf16.mxu0 0
        %2078 = vmatpush1.bf16.msra.mxu0 0
        %2079 = vmatprep.subr.bf16.mxu0 0
        %2080 = vmatpush1.bf16.msra.mxu0 0
        %2081 = vmatprep.mubr.bf16.mxu0 0
        %2082 = vmatmul.mubr.bf16.gmra.mrb[0].mxu0 %v2035
        %v2083 = vpop.f32.mrb[0].mxu0
        %v2084 = vadd.f32 0.0, %v2083
        %v2085 = vpop.f32.mrb[0].mxu0
        %v2086 = vadd.f32 0.0, %v2085
        %v2087 = vpop.f32.mrb[0].mxu0
        %v2088 = vpop.f32.mrb[0].mxu0
        %2089 = vdwg.mxu0
        %2090 = vmatprep.subr.bf16.mxu0 %v2047
        %2091 = vmatpush1.bf16.msra.mxu0 %v2044
        %2092 = vmatprep.subr.bf16.mxu0 0
        %2093 = vmatpush1.bf16.msra.mxu0 0
        %2094 = vmatprep.subr.bf16.mxu0 0
        %2095 = vmatpush1.bf16.msra.mxu0 0
        %2096 = vmatprep.subr.bf16.mxu0 0
        %2097 = vmatpush1.bf16.msra.mxu0 0
        %2098 = vmatprep.subr.bf16.mxu0 0
        %2099 = vmatpush1.bf16.msra.mxu0 0
        %2100 = vmatprep.subr.bf16.mxu0 0
        %2101 = vmatpush1.bf16.msra.mxu0 0
        %2102 = vmatprep.subr.bf16.mxu0 0
        %2103 = vmatpush1.bf16.msra.mxu0 0
        %2104 = vmatprep.subr.bf16.mxu0 0
        %2105 = vmatpush1.bf16.msra.mxu0 0
        %2106 = vmatprep.subr.bf16.mxu0 0
        %2107 = vmatpush1.bf16.msra.mxu0 0
        %2108 = vmatprep.subr.bf16.mxu0 0
        %2109 = vmatpush1.bf16.msra.mxu0 0
        %2110 = vmatprep.subr.bf16.mxu0 0
        %2111 = vmatpush1.bf16.msra.mxu0 0
        %2112 = vmatprep.subr.bf16.mxu0 0
        %2113 = vmatpush1.bf16.msra.mxu0 0
        %2114 = vmatprep.subr.bf16.mxu0 0
        %2115 = vmatpush1.bf16.msra.mxu0 0
        %2116 = vmatprep.subr.bf16.mxu0 0
        %2117 = vmatpush1.bf16.msra.mxu0 0
        %2118 = vmatprep.subr.bf16.mxu0 0
        %2119 = vmatpush1.bf16.msra.mxu0 0
        %2120 = vmatprep.subr.bf16.mxu0 0
        %2121 = vmatpush1.bf16.msra.mxu0 0
        %2122 = vmatprep.mubr.bf16.mxu0 0
        %2123 = vmatmul.mubr.bf16.gmra.mrb[0].mxu0 %v2035
        %v2124 = vpop.f32.mrb[0].mxu0
        %v2125 = vadd.f32 0.0, %v2124
        %v2126 = vpop.f32.mrb[0].mxu0
        %v2127 = vadd.f32 0.0, %v2126
        %v2128 = vpop.f32.mrb[0].mxu0
        %v2129 = vpop.f32.mrb[0].mxu0
        %2130 = vdwg.mxu0
        %v2131 = vadd.f32 %v2013, %v2084
        %v2132 = vadd.f32 %v2014, %v2086
        %v2133 = vadd.f32 %v2015, %v2125
        %v2134 = vadd.f32 %v2016, %v2127
        %s2135 = scalar_lea.vmem %s1, 64
        %v2136 = vld [vmem:[%s2135] sm:$0xf]
        %2137 = vrot.lane.b32.xlu0 %v255, 7
        %v2138 = vpop.permute.xlu0 %2137
        %2139 = vrot.lane.b32.xlu0 %v256, 7
        %v2140 = vpop.permute.xlu0 %2139
        %2141 = vrot.lane.b32.xlu0 %v257, 7
        %v2142 = vpop.permute.xlu0 %2141
        %2143 = vrot.lane.b32.xlu0 %v258, 7
        %v2144 = vpop.permute.xlu0 %2143
        %2145 = vrot.lane.b32.xlu0 %v266, 7
        %v2146 = vpop.permute.xlu0 %2145
        %vm2147 = vcmask 56320
        %v2148 = vsel %vm2147, %v2138, %v2140
        %v2149 = vsel %vm2147, %v2140, %v2142
        %v2150 = vsel %vm2147, %v2142, %v2144
        %v2151 = vsel %vm2147, %v2144, %v2146
        %v2153 = vsel %vm287, %v2136, 0
        %v2156 = vsel %vm291, %v2148, 0
        %v2159 = vsel %vm291, %v2149, 0
        %v2162 = vsel %vm291, %v2150, 0
        %v2165 = vsel %vm291, %v2151, 0
        %2167 = vmatprep.subr.bf16.mxu0 %v2159
        %2168 = vmatpush1.bf16.msra.mxu0 %v2156
        %2169 = vmatprep.subr.bf16.mxu0 0
        %2170 = vmatpush1.bf16.msra.mxu0 0
        %2171 = vmatprep.subr.bf16.mxu0 0
        %2172 = vmatpush1.bf16.msra.mxu0 0
        %2173 = vmatprep.subr.bf16.mxu0 0
        %2174 = vmatpush1.bf16.msra.mxu0 0
        %2175 = vmatprep.subr.bf16.mxu0 0
        %2176 = vmatpush1.bf16.msra.mxu0 0
        %2177 = vmatprep.subr.bf16.mxu0 0
        %2178 = vmatpush1.bf16.msra.mxu0 0
        %2179 = vmatprep.subr.bf16.mxu0 0
        %2180 = vmatpush1.bf16.msra.mxu0 0
        %2181 = vmatprep.subr.bf16.mxu0 0
        %2182 = vmatpush1.bf16.msra.mxu0 0
        %2183 = vmatprep.subr.bf16.mxu0 0
        %2184 = vmatpush1.bf16.msra.mxu0 0
        %2185 = vmatprep.subr.bf16.mxu0 0
        %2186 = vmatpush1.bf16.msra.mxu0 0
        %2187 = vmatprep.subr.bf16.mxu0 0
        %2188 = vmatpush1.bf16.msra.mxu0 0
        %2189 = vmatprep.subr.bf16.mxu0 0
        %2190 = vmatpush1.bf16.msra.mxu0 0
        %2191 = vmatprep.subr.bf16.mxu0 0
        %2192 = vmatpush1.bf16.msra.mxu0 0
        %2193 = vmatprep.subr.bf16.mxu0 0
        %2194 = vmatpush1.bf16.msra.mxu0 0
        %2195 = vmatprep.subr.bf16.mxu0 0
        %2196 = vmatpush1.bf16.msra.mxu0 0
        %2197 = vmatprep.subr.bf16.mxu0 0
        %2198 = vmatpush1.bf16.msra.mxu0 0
        %2199 = vmatprep.mubr.bf16.mxu0 0
        %2200 = vmatmul.mubr.bf16.gmra.mrb[0].mxu0 %v2153
        %v2201 = vpop.f32.mrb[0].mxu0
        %v2202 = vadd.f32 0.0, %v2201
        %v2203 = vpop.f32.mrb[0].mxu0
        %v2204 = vadd.f32 0.0, %v2203
        %v2205 = vpop.f32.mrb[0].mxu0
        %v2206 = vpop.f32.mrb[0].mxu0
        %2207 = vdwg.mxu0
        %2208 = vmatprep.subr.bf16.mxu0 %v2165
        %2209 = vmatpush1.bf16.msra.mxu0 %v2162
        %2210 = vmatprep.subr.bf16.mxu0 0
        %2211 = vmatpush1.bf16.msra.mxu0 0
        %2212 = vmatprep.subr.bf16.mxu0 0
        %2213 = vmatpush1.bf16.msra.mxu0 0
        %2214 = vmatprep.subr.bf16.mxu0 0
        %2215 = vmatpush1.bf16.msra.mxu0 0
        %2216 = vmatprep.subr.bf16.mxu0 0
        %2217 = vmatpush1.bf16.msra.mxu0 0
        %2218 = vmatprep.subr.bf16.mxu0 0
        %2219 = vmatpush1.bf16.msra.mxu0 0
        %2220 = vmatprep.subr.bf16.mxu0 0
        %2221 = vmatpush1.bf16.msra.mxu0 0
        %2222 = vmatprep.subr.bf16.mxu0 0
        %2223 = vmatpush1.bf16.msra.mxu0 0
        %2224 = vmatprep.subr.bf16.mxu0 0
        %2225 = vmatpush1.bf16.msra.mxu0 0
        %2226 = vmatprep.subr.bf16.mxu0 0
        %2227 = vmatpush1.bf16.msra.mxu0 0
        %2228 = vmatprep.subr.bf16.mxu0 0
        %2229 = vmatpush1.bf16.msra.mxu0 0
        %2230 = vmatprep.subr.bf16.mxu0 0
        %2231 = vmatpush1.bf16.msra.mxu0 0
        %2232 = vmatprep.subr.bf16.mxu0 0
        %2233 = vmatpush1.bf16.msra.mxu0 0
        %2234 = vmatprep.subr.bf16.mxu0 0
        %2235 = vmatpush1.bf16.msra.mxu0 0
        %2236 = vmatprep.subr.bf16.mxu0 0
        %2237 = vmatpush1.bf16.msra.mxu0 0
        %2238 = vmatprep.subr.bf16.mxu0 0
        %2239 = vmatpush1.bf16.msra.mxu0 0
        %2240 = vmatprep.mubr.bf16.mxu0 0
        %2241 = vmatmul.mubr.bf16.gmra.mrb[0].mxu0 %v2153
        %v2242 = vpop.f32.mrb[0].mxu0
        %v2243 = vadd.f32 0.0, %v2242
        %v2244 = vpop.f32.mrb[0].mxu0
        %v2245 = vadd.f32 0.0, %v2244
        %v2246 = vpop.f32.mrb[0].mxu0
        %v2247 = vpop.f32.mrb[0].mxu0
        %2248 = vdwg.mxu0
        %v2249 = vadd.f32 %v2131, %v2202
        %v2250 = vadd.f32 %v2132, %v2204
        %v2251 = vadd.f32 %v2133, %v2243
        %v2252 = vadd.f32 %v2134, %v2245
        %s2253 = scalar_lea.vmem %s1, 68
        %v2254 = vld [vmem:[%s2253] sm:$0xf]
        %2255 = vrot.lane.b32.xlu0 %v255, 6
        %v2256 = vpop.permute.xlu0 %2255
        %2257 = vrot.lane.b32.xlu0 %v256, 6
        %v2258 = vpop.permute.xlu0 %2257
        %2259 = vrot.lane.b32.xlu0 %v257, 6
        %v2260 = vpop.permute.xlu0 %2259
        %2261 = vrot.lane.b32.xlu0 %v258, 6
        %v2262 = vpop.permute.xlu0 %2261
        %2263 = vrot.lane.b32.xlu0 %v266, 6
        %v2264 = vpop.permute.xlu0 %2263
        %vm2265 = vcmask 48128
        %v2266 = vsel %vm2265, %v2256, %v2258
        %v2267 = vsel %vm2265, %v2258, %v2260
        %v2268 = vsel %vm2265, %v2260, %v2262
        %v2269 = vsel %vm2265, %v2262, %v2264
        %v2271 = vsel %vm287, %v2254, 0
        %v2274 = vsel %vm291, %v2266, 0
        %v2277 = vsel %vm291, %v2267, 0
        %v2280 = vsel %vm291, %v2268, 0
        %v2283 = vsel %vm291, %v2269, 0
        %2285 = vmatprep.subr.bf16.mxu0 %v2277
        %2286 = vmatpush1.bf16.msra.mxu0 %v2274
        %2287 = vmatprep.subr.bf16.mxu0 0
        %2288 = vmatpush1.bf16.msra.mxu0 0
        %2289 = vmatprep.subr.bf16.mxu0 0
        %2290 = vmatpush1.bf16.msra.mxu0 0
        %2291 = vmatprep.subr.bf16.mxu0 0
        %2292 = vmatpush1.bf16.msra.mxu0 0
        %2293 = vmatprep.subr.bf16.mxu0 0
        %2294 = vmatpush1.bf16.msra.mxu0 0
        %2295 = vmatprep.subr.bf16.mxu0 0
        %2296 = vmatpush1.bf16.msra.mxu0 0
        %2297 = vmatprep.subr.bf16.mxu0 0
        %2298 = vmatpush1.bf16.msra.mxu0 0
        %2299 = vmatprep.subr.bf16.mxu0 0
        %2300 = vmatpush1.bf16.msra.mxu0 0
        %2301 = vmatprep.subr.bf16.mxu0 0
        %2302 = vmatpush1.bf16.msra.mxu0 0
        %2303 = vmatprep.subr.bf16.mxu0 0
        %2304 = vmatpush1.bf16.msra.mxu0 0
        %2305 = vmatprep.subr.bf16.mxu0 0
        %2306 = vmatpush1.bf16.msra.mxu0 0
        %2307 = vmatprep.subr.bf16.mxu0 0
        %2308 = vmatpush1.bf16.msra.mxu0 0
        %2309 = vmatprep.subr.bf16.mxu0 0
        %2310 = vmatpush1.bf16.msra.mxu0 0
        %2311 = vmatprep.subr.bf16.mxu0 0
        %2312 = vmatpush1.bf16.msra.mxu0 0
        %2313 = vmatprep.subr.bf16.mxu0 0
        %2314 = vmatpush1.bf16.msra.mxu0 0
        %2315 = vmatprep.subr.bf16.mxu0 0
        %2316 = vmatpush1.bf16.msra.mxu0 0
        %2317 = vmatprep.mubr.bf16.mxu0 0
        %2318 = vmatmul.mubr.bf16.gmra.mrb[0].mxu0 %v2271
        %v2319 = vpop.f32.mrb[0].mxu0
        %v2320 = vadd.f32 0.0, %v2319
        %v2321 = vpop.f32.mrb[0].mxu0
        %v2322 = vadd.f32 0.0, %v2321
        %v2323 = vpop.f32.mrb[0].mxu0
        %v2324 = vpop.f32.mrb[0].mxu0
        %2325 = vdwg.mxu0
        %2326 = vmatprep.subr.bf16.mxu0 %v2283
        %2327 = vmatpush1.bf16.msra.mxu0 %v2280
        %2328 = vmatprep.subr.bf16.mxu0 0
        %2329 = vmatpush1.bf16.msra.mxu0 0
        %2330 = vmatprep.subr.bf16.mxu0 0
        %2331 = vmatpush1.bf16.msra.mxu0 0
        %2332 = vmatprep.subr.bf16.mxu0 0
        %2333 = vmatpush1.bf16.msra.mxu0 0
        %2334 = vmatprep.subr.bf16.mxu0 0
        %2335 = vmatpush1.bf16.msra.mxu0 0
        %2336 = vmatprep.subr.bf16.mxu0 0
        %2337 = vmatpush1.bf16.msra.mxu0 0
        %2338 = vmatprep.subr.bf16.mxu0 0
        %2339 = vmatpush1.bf16.msra.mxu0 0
        %2340 = vmatprep.subr.bf16.mxu0 0
        %2341 = vmatpush1.bf16.msra.mxu0 0
        %2342 = vmatprep.subr.bf16.mxu0 0
        %2343 = vmatpush1.bf16.msra.mxu0 0
        %2344 = vmatprep.subr.bf16.mxu0 0
        %2345 = vmatpush1.bf16.msra.mxu0 0
        %2346 = vmatprep.subr.bf16.mxu0 0
        %2347 = vmatpush1.bf16.msra.mxu0 0
        %2348 = vmatprep.subr.bf16.mxu0 0
        %2349 = vmatpush1.bf16.msra.mxu0 0
        %2350 = vmatprep.subr.bf16.mxu0 0
        %2351 = vmatpush1.bf16.msra.mxu0 0
        %2352 = vmatprep.subr.bf16.mxu0 0
        %2353 = vmatpush1.bf16.msra.mxu0 0
        %2354 = vmatprep.subr.bf16.mxu0 0
        %2355 = vmatpush1.bf16.msra.mxu0 0
        %2356 = vmatprep.subr.bf16.mxu0 0
        %2357 = vmatpush1.bf16.msra.mxu0 0
        %2358 = vmatprep.mubr.bf16.mxu0 0
        %2359 = vmatmul.mubr.bf16.gmra.mrb[0].mxu0 %v2271
        %v2360 = vpop.f32.mrb[0].mxu0
        %v2361 = vadd.f32 0.0, %v2360
        %v2362 = vpop.f32.mrb[0].mxu0
        %v2363 = vadd.f32 0.0, %v2362
        %v2364 = vpop.f32.mrb[0].mxu0
        %v2365 = vpop.f32.mrb[0].mxu0
        %2366 = vdwg.mxu0
        %v2367 = vadd.f32 %v2249, %v2320
        %v2368 = vadd.f32 %v2250, %v2322
        %v2369 = vadd.f32 %v2251, %v2361
        %v2370 = vadd.f32 %v2252, %v2363
        %s2371 = scalar_lea.vmem %s1, 72
        %v2372 = vld [vmem:[%s2371] sm:$0xf]
        %2373 = vrot.lane.b32.xlu0 %v256, 56
        %v2374 = vpop.permute.xlu0 %2373
        %2375 = vrot.lane.b32.xlu0 %v257, 56
        %v2376 = vpop.permute.xlu0 %2375
        %2377 = vrot.lane.b32.xlu0 %v258, 56
        %v2378 = vpop.permute.xlu0 %2377
        %2379 = vrot.lane.b32.xlu0 %v266, 56
        %v2380 = vpop.permute.xlu0 %2379
        %2381 = vrot.lane.b32.xlu0 %v267, 56
        %v2382 = vpop.permute.xlu0 %2381
        %vm2383 = vcmask 457728
        %v2384 = vsel %vm2383, %v2374, %v2376
        %v2385 = vsel %vm2383, %v2376, %v2378
        %v2386 = vsel %vm2383, %v2378, %v2380
        %v2387 = vsel %vm2383, %v2380, %v2382
        %v2389 = vsel %vm287, %v2372, 0
        %v2392 = vsel %vm291, %v2384, 0
        %v2395 = vsel %vm291, %v2385, 0
        %v2398 = vsel %vm291, %v2386, 0
        %v2401 = vsel %vm291, %v2387, 0
        %2403 = vmatprep.subr.bf16.mxu0 %v2395
        %2404 = vmatpush1.bf16.msra.mxu0 %v2392
        %2405 = vmatprep.subr.bf16.mxu0 0
        %2406 = vmatpush1.bf16.msra.mxu0 0
        %2407 = vmatprep.subr.bf16.mxu0 0
        %2408 = vmatpush1.bf16.msra.mxu0 0
        %2409 = vmatprep.subr.bf16.mxu0 0
        %2410 = vmatpush1.bf16.msra.mxu0 0
        %2411 = vmatprep.subr.bf16.mxu0 0
        %2412 = vmatpush1.bf16.msra.mxu0 0
        %2413 = vmatprep.subr.bf16.mxu0 0
        %2414 = vmatpush1.bf16.msra.mxu0 0
        %2415 = vmatprep.subr.bf16.mxu0 0
        %2416 = vmatpush1.bf16.msra.mxu0 0
        %2417 = vmatprep.subr.bf16.mxu0 0
        %2418 = vmatpush1.bf16.msra.mxu0 0
        %2419 = vmatprep.subr.bf16.mxu0 0
        %2420 = vmatpush1.bf16.msra.mxu0 0
        %2421 = vmatprep.subr.bf16.mxu0 0
        %2422 = vmatpush1.bf16.msra.mxu0 0
        %2423 = vmatprep.subr.bf16.mxu0 0
        %2424 = vmatpush1.bf16.msra.mxu0 0
        %2425 = vmatprep.subr.bf16.mxu0 0
        %2426 = vmatpush1.bf16.msra.mxu0 0
        %2427 = vmatprep.subr.bf16.mxu0 0
        %2428 = vmatpush1.bf16.msra.mxu0 0
        %2429 = vmatprep.subr.bf16.mxu0 0
        %2430 = vmatpush1.bf16.msra.mxu0 0
        %2431 = vmatprep.subr.bf16.mxu0 0
        %2432 = vmatpush1.bf16.msra.mxu0 0
        %2433 = vmatprep.subr.bf16.mxu0 0
        %2434 = vmatpush1.bf16.msra.mxu0 0
        %2435 = vmatprep.mubr.bf16.mxu0 0
        %2436 = vmatmul.mubr.bf16.gmra.mrb[0].mxu0 %v2389
        %v2437 = vpop.f32.mrb[0].mxu0
        %v2438 = vadd.f32 0.0, %v2437
        %v2439 = vpop.f32.mrb[0].mxu0
        %v2440 = vadd.f32 0.0, %v2439
        %v2441 = vpop.f32.mrb[0].mxu0
        %v2442 = vpop.f32.mrb[0].mxu0
        %2443 = vdwg.mxu0
        %2444 = vmatprep.subr.bf16.mxu0 %v2401
        %2445 = vmatpush1.bf16.msra.mxu0 %v2398
        %2446 = vmatprep.subr.bf16.mxu0 0
        %2447 = vmatpush1.bf16.msra.mxu0 0
        %2448 = vmatprep.subr.bf16.mxu0 0
        %2449 = vmatpush1.bf16.msra.mxu0 0
        %2450 = vmatprep.subr.bf16.mxu0 0
        %2451 = vmatpush1.bf16.msra.mxu0 0
        %2452 = vmatprep.subr.bf16.mxu0 0
        %2453 = vmatpush1.bf16.msra.mxu0 0
        %2454 = vmatprep.subr.bf16.mxu0 0
        %2455 = vmatpush1.bf16.msra.mxu0 0
        %2456 = vmatprep.subr.bf16.mxu0 0
        %2457 = vmatpush1.bf16.msra.mxu0 0
        %2458 = vmatprep.subr.bf16.mxu0 0
        %2459 = vmatpush1.bf16.msra.mxu0 0
        %2460 = vmatprep.subr.bf16.mxu0 0
        %2461 = vmatpush1.bf16.msra.mxu0 0
        %2462 = vmatprep.subr.bf16.mxu0 0
        %2463 = vmatpush1.bf16.msra.mxu0 0
        %2464 = vmatprep.subr.bf16.mxu0 0
        %2465 = vmatpush1.bf16.msra.mxu0 0
        %2466 = vmatprep.subr.bf16.mxu0 0
        %2467 = vmatpush1.bf16.msra.mxu0 0
        %2468 = vmatprep.subr.bf16.mxu0 0
        %2469 = vmatpush1.bf16.msra.mxu0 0
        %2470 = vmatprep.subr.bf16.mxu0 0
        %2471 = vmatpush1.bf16.msra.mxu0 0
        %2472 = vmatprep.subr.bf16.mxu0 0
        %2473 = vmatpush1.bf16.msra.mxu0 0
        %2474 = vmatprep.subr.bf16.mxu0 0
        %2475 = vmatpush1.bf16.msra.mxu0 0
        %2476 = vmatprep.mubr.bf16.mxu0 0
        %2477 = vmatmul.mubr.bf16.gmra.mrb[0].mxu0 %v2389
        %v2478 = vpop.f32.mrb[0].mxu0
        %v2479 = vadd.f32 0.0, %v2478
        %v2480 = vpop.f32.mrb[0].mxu0
        %v2481 = vadd.f32 0.0, %v2480
        %v2482 = vpop.f32.mrb[0].mxu0
        %v2483 = vpop.f32.mrb[0].mxu0
        %2484 = vdwg.mxu0
        %v2485 = vadd.f32 %v2367, %v2438
        %v2486 = vadd.f32 %v2368, %v2440
        %v2487 = vadd.f32 %v2369, %v2479
        %v2488 = vadd.f32 %v2370, %v2481
        %s2489 = scalar_lea.vmem %s1, 76
        %v2490 = vld [vmem:[%s2489] sm:$0xf]
        %2491 = vrot.lane.b32.xlu0 %v256, 55
        %v2492 = vpop.permute.xlu0 %2491
        %2493 = vrot.lane.b32.xlu0 %v257, 55
        %v2494 = vpop.permute.xlu0 %2493
        %2495 = vrot.lane.b32.xlu0 %v258, 55
        %v2496 = vpop.permute.xlu0 %2495
        %2497 = vrot.lane.b32.xlu0 %v266, 55
        %v2498 = vpop.permute.xlu0 %2497
        %2499 = vrot.lane.b32.xlu0 %v267, 55
        %v2500 = vpop.permute.xlu0 %2499
        %vm2501 = vcmask 449536
        %v2502 = vsel %vm2501, %v2492, %v2494
        %v2503 = vsel %vm2501, %v2494, %v2496
        %v2504 = vsel %vm2501, %v2496, %v2498
        %v2505 = vsel %vm2501, %v2498, %v2500
        %v2507 = vsel %vm287, %v2490, 0
        %v2510 = vsel %vm291, %v2502, 0
        %v2513 = vsel %vm291, %v2503, 0
        %v2516 = vsel %vm291, %v2504, 0
        %v2519 = vsel %vm291, %v2505, 0
        %2521 = vmatprep.subr.bf16.mxu0 %v2513
        %2522 = vmatpush1.bf16.msra.mxu0 %v2510
        %2523 = vmatprep.subr.bf16.mxu0 0
        %2524 = vmatpush1.bf16.msra.mxu0 0
        %2525 = vmatprep.subr.bf16.mxu0 0
        %2526 = vmatpush1.bf16.msra.mxu0 0
        %2527 = vmatprep.subr.bf16.mxu0 0
        %2528 = vmatpush1.bf16.msra.mxu0 0
        %2529 = vmatprep.subr.bf16.mxu0 0
        %2530 = vmatpush1.bf16.msra.mxu0 0
        %2531 = vmatprep.subr.bf16.mxu0 0
        %2532 = vmatpush1.bf16.msra.mxu0 0
        %2533 = vmatprep.subr.bf16.mxu0 0
        %2534 = vmatpush1.bf16.msra.mxu0 0
        %2535 = vmatprep.subr.bf16.mxu0 0
        %2536 = vmatpush1.bf16.msra.mxu0 0
        %2537 = vmatprep.subr.bf16.mxu0 0
        %2538 = vmatpush1.bf16.msra.mxu0 0
        %2539 = vmatprep.subr.bf16.mxu0 0
        %2540 = vmatpush1.bf16.msra.mxu0 0
        %2541 = vmatprep.subr.bf16.mxu0 0
        %2542 = vmatpush1.bf16.msra.mxu0 0
        %2543 = vmatprep.subr.bf16.mxu0 0
        %2544 = vmatpush1.bf16.msra.mxu0 0
        %2545 = vmatprep.subr.bf16.mxu0 0
        %2546 = vmatpush1.bf16.msra.mxu0 0
        %2547 = vmatprep.subr.bf16.mxu0 0
        %2548 = vmatpush1.bf16.msra.mxu0 0
        %2549 = vmatprep.subr.bf16.mxu0 0
        %2550 = vmatpush1.bf16.msra.mxu0 0
        %2551 = vmatprep.subr.bf16.mxu0 0
        %2552 = vmatpush1.bf16.msra.mxu0 0
        %2553 = vmatprep.mubr.bf16.mxu0 0
        %2554 = vmatmul.mubr.bf16.gmra.mrb[0].mxu0 %v2507
        %v2555 = vpop.f32.mrb[0].mxu0
        %v2556 = vadd.f32 0.0, %v2555
        %v2557 = vpop.f32.mrb[0].mxu0
        %v2558 = vadd.f32 0.0, %v2557
        %v2559 = vpop.f32.mrb[0].mxu0
        %v2560 = vpop.f32.mrb[0].mxu0
        %2561 = vdwg.mxu0
        %2562 = vmatprep.subr.bf16.mxu0 %v2519
        %2563 = vmatpush1.bf16.msra.mxu0 %v2516
        %2564 = vmatprep.subr.bf16.mxu0 0
        %2565 = vmatpush1.bf16.msra.mxu0 0
        %2566 = vmatprep.subr.bf16.mxu0 0
        %2567 = vmatpush1.bf16.msra.mxu0 0
        %2568 = vmatprep.subr.bf16.mxu0 0
        %2569 = vmatpush1.bf16.msra.mxu0 0
        %2570 = vmatprep.subr.bf16.mxu0 0
        %2571 = vmatpush1.bf16.msra.mxu0 0
        %2572 = vmatprep.subr.bf16.mxu0 0
        %2573 = vmatpush1.bf16.msra.mxu0 0
        %2574 = vmatprep.subr.bf16.mxu0 0
        %2575 = vmatpush1.bf16.msra.mxu0 0
        %2576 = vmatprep.subr.bf16.mxu0 0
        %2577 = vmatpush1.bf16.msra.mxu0 0
        %2578 = vmatprep.subr.bf16.mxu0 0
        %2579 = vmatpush1.bf16.msra.mxu0 0
        %2580 = vmatprep.subr.bf16.mxu0 0
        %2581 = vmatpush1.bf16.msra.mxu0 0
        %2582 = vmatprep.subr.bf16.mxu0 0
        %2583 = vmatpush1.bf16.msra.mxu0 0
        %2584 = vmatprep.subr.bf16.mxu0 0
        %2585 = vmatpush1.bf16.msra.mxu0 0
        %2586 = vmatprep.subr.bf16.mxu0 0
        %2587 = vmatpush1.bf16.msra.mxu0 0
        %2588 = vmatprep.subr.bf16.mxu0 0
        %2589 = vmatpush1.bf16.msra.mxu0 0
        %2590 = vmatprep.subr.bf16.mxu0 0
        %2591 = vmatpush1.bf16.msra.mxu0 0
        %2592 = vmatprep.subr.bf16.mxu0 0
        %2593 = vmatpush1.bf16.msra.mxu0 0
        %2594 = vmatprep.mubr.bf16.mxu0 0
        %2595 = vmatmul.mubr.bf16.gmra.mrb[0].mxu0 %v2507
        %v2596 = vpop.f32.mrb[0].mxu0
        %v2597 = vadd.f32 0.0, %v2596
        %v2598 = vpop.f32.mrb[0].mxu0
        %v2599 = vadd.f32 0.0, %v2598
        %v2600 = vpop.f32.mrb[0].mxu0
        %v2601 = vpop.f32.mrb[0].mxu0
        %2602 = vdwg.mxu0
        %v2603 = vadd.f32 %v2485, %v2556
        %v2604 = vadd.f32 %v2486, %v2558
        %v2605 = vadd.f32 %v2487, %v2597
        %v2606 = vadd.f32 %v2488, %v2599
        %s2607 = scalar_lea.vmem %s1, 80
        %v2608 = vld [vmem:[%s2607] sm:$0xf]
        %2609 = vrot.lane.b32.xlu0 %v256, 54
        %v2610 = vpop.permute.xlu0 %2609
        %2611 = vrot.lane.b32.xlu0 %v257, 54
        %v2612 = vpop.permute.xlu0 %2611
        %2613 = vrot.lane.b32.xlu0 %v258, 54
        %v2614 = vpop.permute.xlu0 %2613
        %2615 = vrot.lane.b32.xlu0 %v266, 54
        %v2616 = vpop.permute.xlu0 %2615
        %2617 = vrot.lane.b32.xlu0 %v267, 54
        %v2618 = vpop.permute.xlu0 %2617
        %vm2619 = vcmask 441344
        %v2620 = vsel %vm2619, %v2610, %v2612
        %v2621 = vsel %vm2619, %v2612, %v2614
        %v2622 = vsel %vm2619, %v2614, %v2616
        %v2623 = vsel %vm2619, %v2616, %v2618
        %v2625 = vsel %vm287, %v2608, 0
        %v2628 = vsel %vm291, %v2620, 0
        %v2631 = vsel %vm291, %v2621, 0
        %v2634 = vsel %vm291, %v2622, 0
        %v2637 = vsel %vm291, %v2623, 0
        %2639 = vmatprep.subr.bf16.mxu0 %v2631
        %2640 = vmatpush1.bf16.msra.mxu0 %v2628
        %2641 = vmatprep.subr.bf16.mxu0 0
        %2642 = vmatpush1.bf16.msra.mxu0 0
        %2643 = vmatprep.subr.bf16.mxu0 0
        %2644 = vmatpush1.bf16.msra.mxu0 0
        %2645 = vmatprep.subr.bf16.mxu0 0
        %2646 = vmatpush1.bf16.msra.mxu0 0
        %2647 = vmatprep.subr.bf16.mxu0 0
        %2648 = vmatpush1.bf16.msra.mxu0 0
        %2649 = vmatprep.subr.bf16.mxu0 0
        %2650 = vmatpush1.bf16.msra.mxu0 0
        %2651 = vmatprep.subr.bf16.mxu0 0
        %2652 = vmatpush1.bf16.msra.mxu0 0
        %2653 = vmatprep.subr.bf16.mxu0 0
        %2654 = vmatpush1.bf16.msra.mxu0 0
        %2655 = vmatprep.subr.bf16.mxu0 0
        %2656 = vmatpush1.bf16.msra.mxu0 0
        %2657 = vmatprep.subr.bf16.mxu0 0
        %2658 = vmatpush1.bf16.msra.mxu0 0
        %2659 = vmatprep.subr.bf16.mxu0 0
        %2660 = vmatpush1.bf16.msra.mxu0 0
        %2661 = vmatprep.subr.bf16.mxu0 0
        %2662 = vmatpush1.bf16.msra.mxu0 0
        %2663 = vmatprep.subr.bf16.mxu0 0
        %2664 = vmatpush1.bf16.msra.mxu0 0
        %2665 = vmatprep.subr.bf16.mxu0 0
        %2666 = vmatpush1.bf16.msra.mxu0 0
        %2667 = vmatprep.subr.bf16.mxu0 0
        %2668 = vmatpush1.bf16.msra.mxu0 0
        %2669 = vmatprep.subr.bf16.mxu0 0
        %2670 = vmatpush1.bf16.msra.mxu0 0
        %2671 = vmatprep.mubr.bf16.mxu0 0
        %2672 = vmatmul.mubr.bf16.gmra.mrb[0].mxu0 %v2625
        %v2673 = vpop.f32.mrb[0].mxu0
        %v2674 = vadd.f32 0.0, %v2673
        %v2675 = vpop.f32.mrb[0].mxu0
        %v2676 = vadd.f32 0.0, %v2675
        %v2677 = vpop.f32.mrb[0].mxu0
        %v2678 = vpop.f32.mrb[0].mxu0
        %2679 = vdwg.mxu0
        %2680 = vmatprep.subr.bf16.mxu0 %v2637
        %2681 = vmatpush1.bf16.msra.mxu0 %v2634
        %2682 = vmatprep.subr.bf16.mxu0 0
        %2683 = vmatpush1.bf16.msra.mxu0 0
        %2684 = vmatprep.subr.bf16.mxu0 0
        %2685 = vmatpush1.bf16.msra.mxu0 0
        %2686 = vmatprep.subr.bf16.mxu0 0
        %2687 = vmatpush1.bf16.msra.mxu0 0
        %2688 = vmatprep.subr.bf16.mxu0 0
        %2689 = vmatpush1.bf16.msra.mxu0 0
        %2690 = vmatprep.subr.bf16.mxu0 0
        %2691 = vmatpush1.bf16.msra.mxu0 0
        %2692 = vmatprep.subr.bf16.mxu0 0
        %2693 = vmatpush1.bf16.msra.mxu0 0
        %2694 = vmatprep.subr.bf16.mxu0 0
        %2695 = vmatpush1.bf16.msra.mxu0 0
        %2696 = vmatprep.subr.bf16.mxu0 0
        %2697 = vmatpush1.bf16.msra.mxu0 0
        %2698 = vmatprep.subr.bf16.mxu0 0
        %2699 = vmatpush1.bf16.msra.mxu0 0
        %2700 = vmatprep.subr.bf16.mxu0 0
        %2701 = vmatpush1.bf16.msra.mxu0 0
        %2702 = vmatprep.subr.bf16.mxu0 0
        %2703 = vmatpush1.bf16.msra.mxu0 0
        %2704 = vmatprep.subr.bf16.mxu0 0
        %2705 = vmatpush1.bf16.msra.mxu0 0
        %2706 = vmatprep.subr.bf16.mxu0 0
        %2707 = vmatpush1.bf16.msra.mxu0 0
        %2708 = vmatprep.subr.bf16.mxu0 0
        %2709 = vmatpush1.bf16.msra.mxu0 0
        %2710 = vmatprep.subr.bf16.mxu0 0
        %2711 = vmatpush1.bf16.msra.mxu0 0
        %2712 = vmatprep.mubr.bf16.mxu0 0
        %2713 = vmatmul.mubr.bf16.gmra.mrb[0].mxu0 %v2625
        %v2714 = vpop.f32.mrb[0].mxu0
        %v2715 = vadd.f32 0.0, %v2714
        %v2716 = vpop.f32.mrb[0].mxu0
        %v2717 = vadd.f32 0.0, %v2716
        %v2718 = vpop.f32.mrb[0].mxu0
        %v2719 = vpop.f32.mrb[0].mxu0
        %2720 = vdwg.mxu0
        %v2721 = vadd.f32 %v2603, %v2674
        %v2722 = vadd.f32 %v2604, %v2676
        %v2723 = vadd.f32 %v2605, %v2715
        %v2724 = vadd.f32 %v2606, %v2717
        %s2725 = scalar_lea.vmem %s1, 84
        %v2726 = vld [vmem:[%s2725] sm:$0xf]
        %2727 = vrot.lane.b32.xlu0 %v256, 46
        %v2728 = vpop.permute.xlu0 %2727
        %2729 = vrot.lane.b32.xlu0 %v257, 46
        %v2730 = vpop.permute.xlu0 %2729
        %2731 = vrot.lane.b32.xlu0 %v258, 46
        %v2732 = vpop.permute.xlu0 %2731
        %2733 = vrot.lane.b32.xlu0 %v266, 46
        %v2734 = vpop.permute.xlu0 %2733
        %2735 = vrot.lane.b32.xlu0 %v267, 46
        %v2736 = vpop.permute.xlu0 %2735
        %vm2737 = vcmask 375808
        %v2738 = vsel %vm2737, %v2728, %v2730
        %v2739 = vsel %vm2737, %v2730, %v2732
        %v2740 = vsel %vm2737, %v2732, %v2734
        %v2741 = vsel %vm2737, %v2734, %v2736
        %v2743 = vsel %vm287, %v2726, 0
        %v2746 = vsel %vm291, %v2738, 0
        %v2749 = vsel %vm291, %v2739, 0
        %v2752 = vsel %vm291, %v2740, 0
        %v2755 = vsel %vm291, %v2741, 0
        %2757 = vmatprep.subr.bf16.mxu0 %v2749
        %2758 = vmatpush1.bf16.msra.mxu0 %v2746
        %2759 = vmatprep.subr.bf16.mxu0 0
        %2760 = vmatpush1.bf16.msra.mxu0 0
        %2761 = vmatprep.subr.bf16.mxu0 0
        %2762 = vmatpush1.bf16.msra.mxu0 0
        %2763 = vmatprep.subr.bf16.mxu0 0
        %2764 = vmatpush1.bf16.msra.mxu0 0
        %2765 = vmatprep.subr.bf16.mxu0 0
        %2766 = vmatpush1.bf16.msra.mxu0 0
        %2767 = vmatprep.subr.bf16.mxu0 0
        %2768 = vmatpush1.bf16.msra.mxu0 0
        %2769 = vmatprep.subr.bf16.mxu0 0
        %2770 = vmatpush1.bf16.msra.mxu0 0
        %2771 = vmatprep.subr.bf16.mxu0 0
        %2772 = vmatpush1.bf16.msra.mxu0 0
        %2773 = vmatprep.subr.bf16.mxu0 0
        %2774 = vmatpush1.bf16.msra.mxu0 0
        %2775 = vmatprep.subr.bf16.mxu0 0
        %2776 = vmatpush1.bf16.msra.mxu0 0
        %2777 = vmatprep.subr.bf16.mxu0 0
        %2778 = vmatpush1.bf16.msra.mxu0 0
        %2779 = vmatprep.subr.bf16.mxu0 0
        %2780 = vmatpush1.bf16.msra.mxu0 0
        %2781 = vmatprep.subr.bf16.mxu0 0
        %2782 = vmatpush1.bf16.msra.mxu0 0
        %2783 = vmatprep.subr.bf16.mxu0 0
        %2784 = vmatpush1.bf16.msra.mxu0 0
        %2785 = vmatprep.subr.bf16.mxu0 0
        %2786 = vmatpush1.bf16.msra.mxu0 0
        %2787 = vmatprep.subr.bf16.mxu0 0
        %2788 = vmatpush1.bf16.msra.mxu0 0
        %2789 = vmatprep.mubr.bf16.mxu0 0
        %2790 = vmatmul.mubr.bf16.gmra.mrb[0].mxu0 %v2743
        %v2791 = vpop.f32.mrb[0].mxu0
        %v2792 = vadd.f32 0.0, %v2791
        %v2793 = vpop.f32.mrb[0].mxu0
        %v2794 = vadd.f32 0.0, %v2793
        %v2795 = vpop.f32.mrb[0].mxu0
        %v2796 = vpop.f32.mrb[0].mxu0
        %2797 = vdwg.mxu0
        %2798 = vmatprep.subr.bf16.mxu0 %v2755
        %2799 = vmatpush1.bf16.msra.mxu0 %v2752
        %2800 = vmatprep.subr.bf16.mxu0 0
        %2801 = vmatpush1.bf16.msra.mxu0 0
        %2802 = vmatprep.subr.bf16.mxu0 0
        %2803 = vmatpush1.bf16.msra.mxu0 0
        %2804 = vmatprep.subr.bf16.mxu0 0
        %2805 = vmatpush1.bf16.msra.mxu0 0
        %2806 = vmatprep.subr.bf16.mxu0 0
        %2807 = vmatpush1.bf16.msra.mxu0 0
        %2808 = vmatprep.subr.bf16.mxu0 0
        %2809 = vmatpush1.bf16.msra.mxu0 0
        %2810 = vmatprep.subr.bf16.mxu0 0
        %2811 = vmatpush1.bf16.msra.mxu0 0
        %2812 = vmatprep.subr.bf16.mxu0 0
        %2813 = vmatpush1.bf16.msra.mxu0 0
        %2814 = vmatprep.subr.bf16.mxu0 0
        %2815 = vmatpush1.bf16.msra.mxu0 0
        %2816 = vmatprep.subr.bf16.mxu0 0
        %2817 = vmatpush1.bf16.msra.mxu0 0
        %2818 = vmatprep.subr.bf16.mxu0 0
        %2819 = vmatpush1.bf16.msra.mxu0 0
        %2820 = vmatprep.subr.bf16.mxu0 0
        %2821 = vmatpush1.bf16.msra.mxu0 0
        %2822 = vmatprep.subr.bf16.mxu0 0
        %2823 = vmatpush1.bf16.msra.mxu0 0
        %2824 = vmatprep.subr.bf16.mxu0 0
        %2825 = vmatpush1.bf16.msra.mxu0 0
        %2826 = vmatprep.subr.bf16.mxu0 0
        %2827 = vmatpush1.bf16.msra.mxu0 0
        %2828 = vmatprep.subr.bf16.mxu0 0
        %2829 = vmatpush1.bf16.msra.mxu0 0
        %2830 = vmatprep.mubr.bf16.mxu0 0
        %2831 = vmatmul.mubr.bf16.gmra.mrb[0].mxu0 %v2743
        %v2832 = vpop.f32.mrb[0].mxu0
        %v2833 = vadd.f32 0.0, %v2832
        %v2834 = vpop.f32.mrb[0].mxu0
        %v2835 = vadd.f32 0.0, %v2834
        %v2836 = vpop.f32.mrb[0].mxu0
        %v2837 = vpop.f32.mrb[0].mxu0
        %2838 = vdwg.mxu0
        %v2839 = vadd.f32 %v2721, %v2792
        %v2840 = vadd.f32 %v2722, %v2794
        %v2841 = vadd.f32 %v2723, %v2833
        %v2842 = vadd.f32 %v2724, %v2835
        %s2843 = scalar_lea.vmem %s1, 88
        %v2844 = vld [vmem:[%s2843] sm:$0xf]
        %2845 = vrot.lane.b32.xlu0 %v256, 45
        %v2846 = vpop.permute.xlu0 %2845
        %2847 = vrot.lane.b32.xlu0 %v257, 45
        %v2848 = vpop.permute.xlu0 %2847
        %2849 = vrot.lane.b32.xlu0 %v258, 45
        %v2850 = vpop.permute.xlu0 %2849
        %2851 = vrot.lane.b32.xlu0 %v266, 45
        %v2852 = vpop.permute.xlu0 %2851
        %2853 = vrot.lane.b32.xlu0 %v267, 45
        %v2854 = vpop.permute.xlu0 %2853
        %vm2855 = vcmask 367616
        %v2856 = vsel %vm2855, %v2846, %v2848
        %v2857 = vsel %vm2855, %v2848, %v2850
        %v2858 = vsel %vm2855, %v2850, %v2852
        %v2859 = vsel %vm2855, %v2852, %v2854
        %v2861 = vsel %vm287, %v2844, 0
        %v2864 = vsel %vm291, %v2856, 0
        %v2867 = vsel %vm291, %v2857, 0
        %v2870 = vsel %vm291, %v2858, 0
        %v2873 = vsel %vm291, %v2859, 0
        %2875 = vmatprep.subr.bf16.mxu0 %v2867
        %2876 = vmatpush1.bf16.msra.mxu0 %v2864
        %2877 = vmatprep.subr.bf16.mxu0 0
        %2878 = vmatpush1.bf16.msra.mxu0 0
        %2879 = vmatprep.subr.bf16.mxu0 0
        %2880 = vmatpush1.bf16.msra.mxu0 0
        %2881 = vmatprep.subr.bf16.mxu0 0
        %2882 = vmatpush1.bf16.msra.mxu0 0
        %2883 = vmatprep.subr.bf16.mxu0 0
        %2884 = vmatpush1.bf16.msra.mxu0 0
        %2885 = vmatprep.subr.bf16.mxu0 0
        %2886 = vmatpush1.bf16.msra.mxu0 0
        %2887 = vmatprep.subr.bf16.mxu0 0
        %2888 = vmatpush1.bf16.msra.mxu0 0
        %2889 = vmatprep.subr.bf16.mxu0 0
        %2890 = vmatpush1.bf16.msra.mxu0 0
        %2891 = vmatprep.subr.bf16.mxu0 0
        %2892 = vmatpush1.bf16.msra.mxu0 0
        %2893 = vmatprep.subr.bf16.mxu0 0
        %2894 = vmatpush1.bf16.msra.mxu0 0
        %2895 = vmatprep.subr.bf16.mxu0 0
        %2896 = vmatpush1.bf16.msra.mxu0 0
        %2897 = vmatprep.subr.bf16.mxu0 0
        %2898 = vmatpush1.bf16.msra.mxu0 0
        %2899 = vmatprep.subr.bf16.mxu0 0
        %2900 = vmatpush1.bf16.msra.mxu0 0
        %2901 = vmatprep.subr.bf16.mxu0 0
        %2902 = vmatpush1.bf16.msra.mxu0 0
        %2903 = vmatprep.subr.bf16.mxu0 0
        %2904 = vmatpush1.bf16.msra.mxu0 0
        %2905 = vmatprep.subr.bf16.mxu0 0
        %2906 = vmatpush1.bf16.msra.mxu0 0
        %2907 = vmatprep.mubr.bf16.mxu0 0
        %2908 = vmatmul.mubr.bf16.gmra.mrb[0].mxu0 %v2861
        %v2909 = vpop.f32.mrb[0].mxu0
        %v2910 = vadd.f32 0.0, %v2909
        %v2911 = vpop.f32.mrb[0].mxu0
        %v2912 = vadd.f32 0.0, %v2911
        %v2913 = vpop.f32.mrb[0].mxu0
        %v2914 = vpop.f32.mrb[0].mxu0
        %2915 = vdwg.mxu0
        %2916 = vmatprep.subr.bf16.mxu0 %v2873
        %2917 = vmatpush1.bf16.msra.mxu0 %v2870
        %2918 = vmatprep.subr.bf16.mxu0 0
        %2919 = vmatpush1.bf16.msra.mxu0 0
        %2920 = vmatprep.subr.bf16.mxu0 0
        %2921 = vmatpush1.bf16.msra.mxu0 0
        %2922 = vmatprep.subr.bf16.mxu0 0
        %2923 = vmatpush1.bf16.msra.mxu0 0
        %2924 = vmatprep.subr.bf16.mxu0 0
        %2925 = vmatpush1.bf16.msra.mxu0 0
        %2926 = vmatprep.subr.bf16.mxu0 0
        %2927 = vmatpush1.bf16.msra.mxu0 0
        %2928 = vmatprep.subr.bf16.mxu0 0
        %2929 = vmatpush1.bf16.msra.mxu0 0
        %2930 = vmatprep.subr.bf16.mxu0 0
        %2931 = vmatpush1.bf16.msra.mxu0 0
        %2932 = vmatprep.subr.bf16.mxu0 0
        %2933 = vmatpush1.bf16.msra.mxu0 0
        %2934 = vmatprep.subr.bf16.mxu0 0
        %2935 = vmatpush1.bf16.msra.mxu0 0
        %2936 = vmatprep.subr.bf16.mxu0 0
        %2937 = vmatpush1.bf16.msra.mxu0 0
        %2938 = vmatprep.subr.bf16.mxu0 0
        %2939 = vmatpush1.bf16.msra.mxu0 0
        %2940 = vmatprep.subr.bf16.mxu0 0
        %2941 = vmatpush1.bf16.msra.mxu0 0
        %2942 = vmatprep.subr.bf16.mxu0 0
        %2943 = vmatpush1.bf16.msra.mxu0 0
        %2944 = vmatprep.subr.bf16.mxu0 0
        %2945 = vmatpush1.bf16.msra.mxu0 0
        %2946 = vmatprep.subr.bf16.mxu0 0
        %2947 = vmatpush1.bf16.msra.mxu0 0
        %2948 = vmatprep.mubr.bf16.mxu0 0
        %2949 = vmatmul.mubr.bf16.gmra.mrb[0].mxu0 %v2861
        %v2950 = vpop.f32.mrb[0].mxu0
        %v2951 = vadd.f32 0.0, %v2950
        %v2952 = vpop.f32.mrb[0].mxu0
        %v2953 = vadd.f32 0.0, %v2952
        %v2954 = vpop.f32.mrb[0].mxu0
        %v2955 = vpop.f32.mrb[0].mxu0
        %2956 = vdwg.mxu0
        %v2957 = vadd.f32 %v2839, %v2910
        %v2958 = vadd.f32 %v2840, %v2912
        %v2959 = vadd.f32 %v2841, %v2951
        %v2960 = vadd.f32 %v2842, %v2953
        %s2961 = scalar_lea.vmem %s1, 92
        %v2962 = vld [vmem:[%s2961] sm:$0xf]
        %2963 = vrot.lane.b32.xlu0 %v256, 44
        %v2964 = vpop.permute.xlu0 %2963
        %2965 = vrot.lane.b32.xlu0 %v257, 44
        %v2966 = vpop.permute.xlu0 %2965
        %2967 = vrot.lane.b32.xlu0 %v258, 44
        %v2968 = vpop.permute.xlu0 %2967
        %2969 = vrot.lane.b32.xlu0 %v266, 44
        %v2970 = vpop.permute.xlu0 %2969
        %2971 = vrot.lane.b32.xlu0 %v267, 44
        %v2972 = vpop.permute.xlu0 %2971
        %vm2973 = vcmask 359424
        %v2974 = vsel %vm2973, %v2964, %v2966
        %v2975 = vsel %vm2973, %v2966, %v2968
        %v2976 = vsel %vm2973, %v2968, %v2970
        %v2977 = vsel %vm2973, %v2970, %v2972
        %v2979 = vsel %vm287, %v2962, 0
        %v2982 = vsel %vm291, %v2974, 0
        %v2985 = vsel %vm291, %v2975, 0
        %v2988 = vsel %vm291, %v2976, 0
        %v2991 = vsel %vm291, %v2977, 0
        %2993 = vmatprep.subr.bf16.mxu0 %v2985
        %2994 = vmatpush1.bf16.msra.mxu0 %v2982
        %2995 = vmatprep.subr.bf16.mxu0 0
        %2996 = vmatpush1.bf16.msra.mxu0 0
        %2997 = vmatprep.subr.bf16.mxu0 0
        %2998 = vmatpush1.bf16.msra.mxu0 0
        %2999 = vmatprep.subr.bf16.mxu0 0
        %3000 = vmatpush1.bf16.msra.mxu0 0
        %3001 = vmatprep.subr.bf16.mxu0 0
        %3002 = vmatpush1.bf16.msra.mxu0 0
        %3003 = vmatprep.subr.bf16.mxu0 0
        %3004 = vmatpush1.bf16.msra.mxu0 0
        %3005 = vmatprep.subr.bf16.mxu0 0
        %3006 = vmatpush1.bf16.msra.mxu0 0
        %3007 = vmatprep.subr.bf16.mxu0 0
        %3008 = vmatpush1.bf16.msra.mxu0 0
        %3009 = vmatprep.subr.bf16.mxu0 0
        %3010 = vmatpush1.bf16.msra.mxu0 0
        %3011 = vmatprep.subr.bf16.mxu0 0
        %3012 = vmatpush1.bf16.msra.mxu0 0
        %3013 = vmatprep.subr.bf16.mxu0 0
        %3014 = vmatpush1.bf16.msra.mxu0 0
        %3015 = vmatprep.subr.bf16.mxu0 0
        %3016 = vmatpush1.bf16.msra.mxu0 0
        %3017 = vmatprep.subr.bf16.mxu0 0
        %3018 = vmatpush1.bf16.msra.mxu0 0
        %3019 = vmatprep.subr.bf16.mxu0 0
        %3020 = vmatpush1.bf16.msra.mxu0 0
        %3021 = vmatprep.subr.bf16.mxu0 0
        %3022 = vmatpush1.bf16.msra.mxu0 0
        %3023 = vmatprep.subr.bf16.mxu0 0
        %3024 = vmatpush1.bf16.msra.mxu0 0
        %3025 = vmatprep.mubr.bf16.mxu0 0
        %3026 = vmatmul.mubr.bf16.gmra.mrb[0].mxu0 %v2979
        %v3027 = vpop.f32.mrb[0].mxu0
        %v3028 = vadd.f32 0.0, %v3027
        %v3029 = vpop.f32.mrb[0].mxu0
        %v3030 = vadd.f32 0.0, %v3029
        %v3031 = vpop.f32.mrb[0].mxu0
        %v3032 = vpop.f32.mrb[0].mxu0
        %3033 = vdwg.mxu0
        %3034 = vmatprep.subr.bf16.mxu0 %v2991
        %3035 = vmatpush1.bf16.msra.mxu0 %v2988
        %3036 = vmatprep.subr.bf16.mxu0 0
        %3037 = vmatpush1.bf16.msra.mxu0 0
        %3038 = vmatprep.subr.bf16.mxu0 0
        %3039 = vmatpush1.bf16.msra.mxu0 0
        %3040 = vmatprep.subr.bf16.mxu0 0
        %3041 = vmatpush1.bf16.msra.mxu0 0
        %3042 = vmatprep.subr.bf16.mxu0 0
        %3043 = vmatpush1.bf16.msra.mxu0 0
        %3044 = vmatprep.subr.bf16.mxu0 0
        %3045 = vmatpush1.bf16.msra.mxu0 0
        %3046 = vmatprep.subr.bf16.mxu0 0
        %3047 = vmatpush1.bf16.msra.mxu0 0
        %3048 = vmatprep.subr.bf16.mxu0 0
        %3049 = vmatpush1.bf16.msra.mxu0 0
        %3050 = vmatprep.subr.bf16.mxu0 0
        %3051 = vmatpush1.bf16.msra.mxu0 0
        %3052 = vmatprep.subr.bf16.mxu0 0
        %3053 = vmatpush1.bf16.msra.mxu0 0
        %3054 = vmatprep.subr.bf16.mxu0 0
        %3055 = vmatpush1.bf16.msra.mxu0 0
        %3056 = vmatprep.subr.bf16.mxu0 0
        %3057 = vmatpush1.bf16.msra.mxu0 0
        %3058 = vmatprep.subr.bf16.mxu0 0
        %3059 = vmatpush1.bf16.msra.mxu0 0
        %3060 = vmatprep.subr.bf16.mxu0 0
        %3061 = vmatpush1.bf16.msra.mxu0 0
        %3062 = vmatprep.subr.bf16.mxu0 0
        %3063 = vmatpush1.bf16.msra.mxu0 0
        %3064 = vmatprep.subr.bf16.mxu0 0
        %3065 = vmatpush1.bf16.msra.mxu0 0
        %3066 = vmatprep.mubr.bf16.mxu0 0
        %3067 = vmatmul.mubr.bf16.gmra.mrb[0].mxu0 %v2979
        %v3068 = vpop.f32.mrb[0].mxu0
        %v3069 = vadd.f32 0.0, %v3068
        %v3070 = vpop.f32.mrb[0].mxu0
        %v3071 = vadd.f32 0.0, %v3070
        %v3072 = vpop.f32.mrb[0].mxu0
        %v3073 = vpop.f32.mrb[0].mxu0
        %3074 = vdwg.mxu0
        %v3075 = vadd.f32 %v2957, %v3028
        %v3076 = vadd.f32 %v2958, %v3030
        %v3077 = vadd.f32 %v2959, %v3069
        %v3078 = vadd.f32 %v2960, %v3071
        %s3079 = scalar_lea.vmem %s1, 96
        %v3080 = vld [vmem:[%s3079] sm:$0xf]
        %3081 = vrot.lane.b32.xlu0 %v256, 36
        %v3082 = vpop.permute.xlu0 %3081
        %3083 = vrot.lane.b32.xlu0 %v257, 36
        %v3084 = vpop.permute.xlu0 %3083
        %3085 = vrot.lane.b32.xlu0 %v258, 36
        %v3086 = vpop.permute.xlu0 %3085
        %3087 = vrot.lane.b32.xlu0 %v266, 36
        %v3088 = vpop.permute.xlu0 %3087
        %3089 = vrot.lane.b32.xlu0 %v267, 36
        %v3090 = vpop.permute.xlu0 %3089
        %vm3091 = vcmask 293888
        %v3092 = vsel %vm3091, %v3082, %v3084
        %v3093 = vsel %vm3091, %v3084, %v3086
        %v3094 = vsel %vm3091, %v3086, %v3088
        %v3095 = vsel %vm3091, %v3088, %v3090
        %v3097 = vsel %vm287, %v3080, 0
        %v3100 = vsel %vm291, %v3092, 0
        %v3103 = vsel %vm291, %v3093, 0
        %v3106 = vsel %vm291, %v3094, 0
        %v3109 = vsel %vm291, %v3095, 0
        %3111 = vmatprep.subr.bf16.mxu0 %v3103
        %3112 = vmatpush1.bf16.msra.mxu0 %v3100
        %3113 = vmatprep.subr.bf16.mxu0 0
        %3114 = vmatpush1.bf16.msra.mxu0 0
        %3115 = vmatprep.subr.bf16.mxu0 0
        %3116 = vmatpush1.bf16.msra.mxu0 0
        %3117 = vmatprep.subr.bf16.mxu0 0
        %3118 = vmatpush1.bf16.msra.mxu0 0
        %3119 = vmatprep.subr.bf16.mxu0 0
        %3120 = vmatpush1.bf16.msra.mxu0 0
        %3121 = vmatprep.subr.bf16.mxu0 0
        %3122 = vmatpush1.bf16.msra.mxu0 0
        %3123 = vmatprep.subr.bf16.mxu0 0
        %3124 = vmatpush1.bf16.msra.mxu0 0
        %3125 = vmatprep.subr.bf16.mxu0 0
        %3126 = vmatpush1.bf16.msra.mxu0 0
        %3127 = vmatprep.subr.bf16.mxu0 0
        %3128 = vmatpush1.bf16.msra.mxu0 0
        %3129 = vmatprep.subr.bf16.mxu0 0
        %3130 = vmatpush1.bf16.msra.mxu0 0
        %3131 = vmatprep.subr.bf16.mxu0 0
        %3132 = vmatpush1.bf16.msra.mxu0 0
        %3133 = vmatprep.subr.bf16.mxu0 0
        %3134 = vmatpush1.bf16.msra.mxu0 0
        %3135 = vmatprep.subr.bf16.mxu0 0
        %3136 = vmatpush1.bf16.msra.mxu0 0
        %3137 = vmatprep.subr.bf16.mxu0 0
        %3138 = vmatpush1.bf16.msra.mxu0 0
        %3139 = vmatprep.subr.bf16.mxu0 0
        %3140 = vmatpush1.bf16.msra.mxu0 0
        %3141 = vmatprep.subr.bf16.mxu0 0
        %3142 = vmatpush1.bf16.msra.mxu0 0
        %3143 = vmatprep.mubr.bf16.mxu0 0
        %3144 = vmatmul.mubr.bf16.gmra.mrb[0].mxu0 %v3097
        %v3145 = vpop.f32.mrb[0].mxu0
        %v3146 = vadd.f32 0.0, %v3145
        %v3147 = vpop.f32.mrb[0].mxu0
        %v3148 = vadd.f32 0.0, %v3147
        %v3149 = vpop.f32.mrb[0].mxu0
        %v3150 = vpop.f32.mrb[0].mxu0
        %3151 = vdwg.mxu0
        %3152 = vmatprep.subr.bf16.mxu0 %v3109
        %3153 = vmatpush1.bf16.msra.mxu0 %v3106
        %3154 = vmatprep.subr.bf16.mxu0 0
        %3155 = vmatpush1.bf16.msra.mxu0 0
        %3156 = vmatprep.subr.bf16.mxu0 0
        %3157 = vmatpush1.bf16.msra.mxu0 0
        %3158 = vmatprep.subr.bf16.mxu0 0
        %3159 = vmatpush1.bf16.msra.mxu0 0
        %3160 = vmatprep.subr.bf16.mxu0 0
        %3161 = vmatpush1.bf16.msra.mxu0 0
        %3162 = vmatprep.subr.bf16.mxu0 0
        %3163 = vmatpush1.bf16.msra.mxu0 0
        %3164 = vmatprep.subr.bf16.mxu0 0
        %3165 = vmatpush1.bf16.msra.mxu0 0
        %3166 = vmatprep.subr.bf16.mxu0 0
        %3167 = vmatpush1.bf16.msra.mxu0 0
        %3168 = vmatprep.subr.bf16.mxu0 0
        %3169 = vmatpush1.bf16.msra.mxu0 0
        %3170 = vmatprep.subr.bf16.mxu0 0
        %3171 = vmatpush1.bf16.msra.mxu0 0
        %3172 = vmatprep.subr.bf16.mxu0 0
        %3173 = vmatpush1.bf16.msra.mxu0 0
        %3174 = vmatprep.subr.bf16.mxu0 0
        %3175 = vmatpush1.bf16.msra.mxu0 0
        %3176 = vmatprep.subr.bf16.mxu0 0
        %3177 = vmatpush1.bf16.msra.mxu0 0
        %3178 = vmatprep.subr.bf16.mxu0 0
        %3179 = vmatpush1.bf16.msra.mxu0 0
        %3180 = vmatprep.subr.bf16.mxu0 0
        %3181 = vmatpush1.bf16.msra.mxu0 0
        %3182 = vmatprep.subr.bf16.mxu0 0
        %3183 = vmatpush1.bf16.msra.mxu0 0
        %3184 = vmatprep.mubr.bf16.mxu0 0
        %3185 = vmatmul.mubr.bf16.gmra.mrb[0].mxu0 %v3097
        %v3186 = vpop.f32.mrb[0].mxu0
        %v3187 = vadd.f32 0.0, %v3186
        %v3188 = vpop.f32.mrb[0].mxu0
        %v3189 = vadd.f32 0.0, %v3188
        %v3190 = vpop.f32.mrb[0].mxu0
        %v3191 = vpop.f32.mrb[0].mxu0
        %3192 = vdwg.mxu0
        %v3193 = vadd.f32 %v3075, %v3146
        %v3194 = vadd.f32 %v3076, %v3148
        %v3195 = vadd.f32 %v3077, %v3187
        %v3196 = vadd.f32 %v3078, %v3189
        %s3197 = scalar_lea.vmem %s1, 100
        %v3198 = vld [vmem:[%s3197] sm:$0xf]
        %3199 = vrot.lane.b32.xlu0 %v256, 35
        %v3200 = vpop.permute.xlu0 %3199
        %3201 = vrot.lane.b32.xlu0 %v257, 35
        %v3202 = vpop.permute.xlu0 %3201
        %3203 = vrot.lane.b32.xlu0 %v258, 35
        %v3204 = vpop.permute.xlu0 %3203
        %3205 = vrot.lane.b32.xlu0 %v266, 35
        %v3206 = vpop.permute.xlu0 %3205
        %3207 = vrot.lane.b32.xlu0 %v267, 35
        %v3208 = vpop.permute.xlu0 %3207
        %vm3209 = vcmask 285696
        %v3210 = vsel %vm3209, %v3200, %v3202
        %v3211 = vsel %vm3209, %v3202, %v3204
        %v3212 = vsel %vm3209, %v3204, %v3206
        %v3213 = vsel %vm3209, %v3206, %v3208
        %v3215 = vsel %vm287, %v3198, 0
        %v3218 = vsel %vm291, %v3210, 0
        %v3221 = vsel %vm291, %v3211, 0
        %v3224 = vsel %vm291, %v3212, 0
        %v3227 = vsel %vm291, %v3213, 0
        %3229 = vmatprep.subr.bf16.mxu0 %v3221
        %3230 = vmatpush1.bf16.msra.mxu0 %v3218
        %3231 = vmatprep.subr.bf16.mxu0 0
        %3232 = vmatpush1.bf16.msra.mxu0 0
        %3233 = vmatprep.subr.bf16.mxu0 0
        %3234 = vmatpush1.bf16.msra.mxu0 0
        %3235 = vmatprep.subr.bf16.mxu0 0
        %3236 = vmatpush1.bf16.msra.mxu0 0
        %3237 = vmatprep.subr.bf16.mxu0 0
        %3238 = vmatpush1.bf16.msra.mxu0 0
        %3239 = vmatprep.subr.bf16.mxu0 0
        %3240 = vmatpush1.bf16.msra.mxu0 0
        %3241 = vmatprep.subr.bf16.mxu0 0
        %3242 = vmatpush1.bf16.msra.mxu0 0
        %3243 = vmatprep.subr.bf16.mxu0 0
        %3244 = vmatpush1.bf16.msra.mxu0 0
        %3245 = vmatprep.subr.bf16.mxu0 0
        %3246 = vmatpush1.bf16.msra.mxu0 0
        %3247 = vmatprep.subr.bf16.mxu0 0
        %3248 = vmatpush1.bf16.msra.mxu0 0
        %3249 = vmatprep.subr.bf16.mxu0 0
        %3250 = vmatpush1.bf16.msra.mxu0 0
        %3251 = vmatprep.subr.bf16.mxu0 0
        %3252 = vmatpush1.bf16.msra.mxu0 0
        %3253 = vmatprep.subr.bf16.mxu0 0
        %3254 = vmatpush1.bf16.msra.mxu0 0
        %3255 = vmatprep.subr.bf16.mxu0 0
        %3256 = vmatpush1.bf16.msra.mxu0 0
        %3257 = vmatprep.subr.bf16.mxu0 0
        %3258 = vmatpush1.bf16.msra.mxu0 0
        %3259 = vmatprep.subr.bf16.mxu0 0
        %3260 = vmatpush1.bf16.msra.mxu0 0
        %3261 = vmatprep.mubr.bf16.mxu0 0
        %3262 = vmatmul.mubr.bf16.gmra.mrb[0].mxu0 %v3215
        %v3263 = vpop.f32.mrb[0].mxu0
        %v3264 = vadd.f32 0.0, %v3263
        %v3265 = vpop.f32.mrb[0].mxu0
        %v3266 = vadd.f32 0.0, %v3265
        %v3267 = vpop.f32.mrb[0].mxu0
        %v3268 = vpop.f32.mrb[0].mxu0
        %3269 = vdwg.mxu0
        %3270 = vmatprep.subr.bf16.mxu0 %v3227
        %3271 = vmatpush1.bf16.msra.mxu0 %v3224
        %3272 = vmatprep.subr.bf16.mxu0 0
        %3273 = vmatpush1.bf16.msra.mxu0 0
        %3274 = vmatprep.subr.bf16.mxu0 0
        %3275 = vmatpush1.bf16.msra.mxu0 0
        %3276 = vmatprep.subr.bf16.mxu0 0
        %3277 = vmatpush1.bf16.msra.mxu0 0
        %3278 = vmatprep.subr.bf16.mxu0 0
        %3279 = vmatpush1.bf16.msra.mxu0 0
        %3280 = vmatprep.subr.bf16.mxu0 0
        %3281 = vmatpush1.bf16.msra.mxu0 0
        %3282 = vmatprep.subr.bf16.mxu0 0
        %3283 = vmatpush1.bf16.msra.mxu0 0
        %3284 = vmatprep.subr.bf16.mxu0 0
        %3285 = vmatpush1.bf16.msra.mxu0 0
        %3286 = vmatprep.subr.bf16.mxu0 0
        %3287 = vmatpush1.bf16.msra.mxu0 0
        %3288 = vmatprep.subr.bf16.mxu0 0
        %3289 = vmatpush1.bf16.msra.mxu0 0
        %3290 = vmatprep.subr.bf16.mxu0 0
        %3291 = vmatpush1.bf16.msra.mxu0 0
        %3292 = vmatprep.subr.bf16.mxu0 0
        %3293 = vmatpush1.bf16.msra.mxu0 0
        %3294 = vmatprep.subr.bf16.mxu0 0
        %3295 = vmatpush1.bf16.msra.mxu0 0
        %3296 = vmatprep.subr.bf16.mxu0 0
        %3297 = vmatpush1.bf16.msra.mxu0 0
        %3298 = vmatprep.subr.bf16.mxu0 0
        %3299 = vmatpush1.bf16.msra.mxu0 0
        %3300 = vmatprep.subr.bf16.mxu0 0
        %3301 = vmatpush1.bf16.msra.mxu0 0
        %3302 = vmatprep.mubr.bf16.mxu0 0
        %3303 = vmatmul.mubr.bf16.gmra.mrb[0].mxu0 %v3215
        %v3304 = vpop.f32.mrb[0].mxu0
        %v3305 = vadd.f32 0.0, %v3304
        %v3306 = vpop.f32.mrb[0].mxu0
        %v3307 = vadd.f32 0.0, %v3306
        %v3308 = vpop.f32.mrb[0].mxu0
        %v3309 = vpop.f32.mrb[0].mxu0
        %3310 = vdwg.mxu0
        %v3311 = vadd.f32 %v3193, %v3264
        %v3312 = vadd.f32 %v3194, %v3266
        %v3313 = vadd.f32 %v3195, %v3305
        %v3314 = vadd.f32 %v3196, %v3307
        %s3315 = scalar_lea.vmem %s1, 104
        %v3316 = vld [vmem:[%s3315] sm:$0xf]
        %3317 = vrot.lane.b32.xlu0 %v256, 34
        %v3318 = vpop.permute.xlu0 %3317
        %3319 = vrot.lane.b32.xlu0 %v257, 34
        %v3320 = vpop.permute.xlu0 %3319
        %3321 = vrot.lane.b32.xlu0 %v258, 34
        %v3322 = vpop.permute.xlu0 %3321
        %3323 = vrot.lane.b32.xlu0 %v266, 34
        %v3324 = vpop.permute.xlu0 %3323
        %3325 = vrot.lane.b32.xlu0 %v267, 34
        %v3326 = vpop.permute.xlu0 %3325
        %vm3327 = vcmask 277504
        %v3328 = vsel %vm3327, %v3318, %v3320
        %v3329 = vsel %vm3327, %v3320, %v3322
        %v3330 = vsel %vm3327, %v3322, %v3324
        %v3331 = vsel %vm3327, %v3324, %v3326
        %v3333 = vsel %vm287, %v3316, 0
        %v3336 = vsel %vm291, %v3328, 0
        %v3339 = vsel %vm291, %v3329, 0
        %v3342 = vsel %vm291, %v3330, 0
        %v3345 = vsel %vm291, %v3331, 0
        %3347 = vmatprep.subr.bf16.mxu0 %v3339
        %3348 = vmatpush1.bf16.msra.mxu0 %v3336
        %3349 = vmatprep.subr.bf16.mxu0 0
        %3350 = vmatpush1.bf16.msra.mxu0 0
        %3351 = vmatprep.subr.bf16.mxu0 0
        %3352 = vmatpush1.bf16.msra.mxu0 0
        %3353 = vmatprep.subr.bf16.mxu0 0
        %3354 = vmatpush1.bf16.msra.mxu0 0
        %3355 = vmatprep.subr.bf16.mxu0 0
        %3356 = vmatpush1.bf16.msra.mxu0 0
        %3357 = vmatprep.subr.bf16.mxu0 0
        %3358 = vmatpush1.bf16.msra.mxu0 0
        %3359 = vmatprep.subr.bf16.mxu0 0
        %3360 = vmatpush1.bf16.msra.mxu0 0
        %3361 = vmatprep.subr.bf16.mxu0 0
        %3362 = vmatpush1.bf16.msra.mxu0 0
        %3363 = vmatprep.subr.bf16.mxu0 0
        %3364 = vmatpush1.bf16.msra.mxu0 0
        %3365 = vmatprep.subr.bf16.mxu0 0
        %3366 = vmatpush1.bf16.msra.mxu0 0
        %3367 = vmatprep.subr.bf16.mxu0 0
        %3368 = vmatpush1.bf16.msra.mxu0 0
        %3369 = vmatprep.subr.bf16.mxu0 0
        %3370 = vmatpush1.bf16.msra.mxu0 0
        %3371 = vmatprep.subr.bf16.mxu0 0
        %3372 = vmatpush1.bf16.msra.mxu0 0
        %3373 = vmatprep.subr.bf16.mxu0 0
        %3374 = vmatpush1.bf16.msra.mxu0 0
        %3375 = vmatprep.subr.bf16.mxu0 0
        %3376 = vmatpush1.bf16.msra.mxu0 0
        %3377 = vmatprep.subr.bf16.mxu0 0
        %3378 = vmatpush1.bf16.msra.mxu0 0
        %3379 = vmatprep.mubr.bf16.mxu0 0
        %3380 = vmatmul.mubr.bf16.gmra.mrb[0].mxu0 %v3333
        %v3381 = vpop.f32.mrb[0].mxu0
        %v3382 = vadd.f32 0.0, %v3381
        %v3383 = vpop.f32.mrb[0].mxu0
        %v3384 = vadd.f32 0.0, %v3383
        %v3385 = vpop.f32.mrb[0].mxu0
        %v3386 = vpop.f32.mrb[0].mxu0
        %3387 = vdwg.mxu0
        %3388 = vmatprep.subr.bf16.mxu0 %v3345
        %3389 = vmatpush1.bf16.msra.mxu0 %v3342
        %3390 = vmatprep.subr.bf16.mxu0 0
        %3391 = vmatpush1.bf16.msra.mxu0 0
        %3392 = vmatprep.subr.bf16.mxu0 0
        %3393 = vmatpush1.bf16.msra.mxu0 0
        %3394 = vmatprep.subr.bf16.mxu0 0
        %3395 = vmatpush1.bf16.msra.mxu0 0
        %3396 = vmatprep.subr.bf16.mxu0 0
        %3397 = vmatpush1.bf16.msra.mxu0 0
        %3398 = vmatprep.subr.bf16.mxu0 0
        %3399 = vmatpush1.bf16.msra.mxu0 0
        %3400 = vmatprep.subr.bf16.mxu0 0
        %3401 = vmatpush1.bf16.msra.mxu0 0
        %3402 = vmatprep.subr.bf16.mxu0 0
        %3403 = vmatpush1.bf16.msra.mxu0 0
        %3404 = vmatprep.subr.bf16.mxu0 0
        %3405 = vmatpush1.bf16.msra.mxu0 0
        %3406 = vmatprep.subr.bf16.mxu0 0
        %3407 = vmatpush1.bf16.msra.mxu0 0
        %3408 = vmatprep.subr.bf16.mxu0 0
        %3409 = vmatpush1.bf16.msra.mxu0 0
        %3410 = vmatprep.subr.bf16.mxu0 0
        %3411 = vmatpush1.bf16.msra.mxu0 0
        %3412 = vmatprep.subr.bf16.mxu0 0
        %3413 = vmatpush1.bf16.msra.mxu0 0
        %3414 = vmatprep.subr.bf16.mxu0 0
        %3415 = vmatpush1.bf16.msra.mxu0 0
        %3416 = vmatprep.subr.bf16.mxu0 0
        %3417 = vmatpush1.bf16.msra.mxu0 0
        %3418 = vmatprep.subr.bf16.mxu0 0
        %3419 = vmatpush1.bf16.msra.mxu0 0
        %3420 = vmatprep.mubr.bf16.mxu0 0
        %3421 = vmatmul.mubr.bf16.gmra.mrb[0].mxu0 %v3333
        %v3422 = vpop.f32.mrb[0].mxu0
        %v3423 = vadd.f32 0.0, %v3422
        %v3424 = vpop.f32.mrb[0].mxu0
        %v3425 = vadd.f32 0.0, %v3424
        %v3426 = vpop.f32.mrb[0].mxu0
        %v3427 = vpop.f32.mrb[0].mxu0
        %3428 = vdwg.mxu0
        %v3429 = vadd.f32 %v3311, %v3382
        %v3430 = vadd.f32 %v3312, %v3384
        %v3431 = vadd.f32 %v3313, %v3423
        %v3432 = vadd.f32 %v3314, %v3425
        %v3433 = vld [vmem:[%s2] sm:$0xff]
        %3435 = vset.pattern.permute.xlu0 0
        %3436 = vperm.xlu0 %3435, %v3433
        %v3437 = vpop.permute.xlu0 %3436
        %v3439 = vadd.f32 %v3429, %v3437
        %v3440 = vadd.f32 %v3430, %v3437
        %v3441 = vadd.f32 %v3431, %v3437
        %v3442 = vadd.f32 %v3432, %v3437
        %v3443 = vmax.f32 %v3439, 0.0
        %v3444 = vmax.f32 %v3440, 0.0
        %v3445 = vmax.f32 %v3441, 0.0
        %v3446 = vmax.f32 %v3442, 0.0
        %v3447 = vld [vmem:[%s3] sm:$0xf]
        %v3448 = vpack.c.bf16 %v3443, %v3443
        %v3449 = vpack.c.bf16 %v3444, %v3444
        %v3450 = vpack.c.bf16 %v3445, %v3445
        %v3451 = vpack.c.bf16 %v3446, %v3446
        %v3452 = vld [vmem:[%s4] sm:$0xff]
        %3454 = vset.pattern.permute.xlu0 0
        %3455 = vperm.xlu0 %3454, %v3452
        %v3456 = vpop.permute.xlu0 %3455
        %v3459 = vsel %vm287, %v3447, 0
        %v3462 = vsel %vm291, %v3448, 0
        %v3465 = vsel %vm291, %v3449, 0
        %v3468 = vsel %vm291, %v3450, 0
        %v3471 = vsel %vm291, %v3451, 0
        %3473 = vmatprep.subr.bf16.mxu0 %v3465
        %3474 = vmatpush1.bf16.msra.mxu0 %v3462
        %3475 = vmatprep.subr.bf16.mxu0 0
        %3476 = vmatpush1.bf16.msra.mxu0 0
        %3477 = vmatprep.subr.bf16.mxu0 0
        %3478 = vmatpush1.bf16.msra.mxu0 0
        %3479 = vmatprep.subr.bf16.mxu0 0
        %3480 = vmatpush1.bf16.msra.mxu0 0
        %3481 = vmatprep.subr.bf16.mxu0 0
        %3482 = vmatpush1.bf16.msra.mxu0 0
        %3483 = vmatprep.subr.bf16.mxu0 0
        %3484 = vmatpush1.bf16.msra.mxu0 0
        %3485 = vmatprep.subr.bf16.mxu0 0
        %3486 = vmatpush1.bf16.msra.mxu0 0
        %3487 = vmatprep.subr.bf16.mxu0 0
        %3488 = vmatpush1.bf16.msra.mxu0 0
        %3489 = vmatprep.subr.bf16.mxu0 0
        %3490 = vmatpush1.bf16.msra.mxu0 0
        %3491 = vmatprep.subr.bf16.mxu0 0
        %3492 = vmatpush1.bf16.msra.mxu0 0
        %3493 = vmatprep.subr.bf16.mxu0 0
        %3494 = vmatpush1.bf16.msra.mxu0 0
        %3495 = vmatprep.subr.bf16.mxu0 0
        %3496 = vmatpush1.bf16.msra.mxu0 0
        %3497 = vmatprep.subr.bf16.mxu0 0
        %3498 = vmatpush1.bf16.msra.mxu0 0
        %3499 = vmatprep.subr.bf16.mxu0 0
        %3500 = vmatpush1.bf16.msra.mxu0 0
        %3501 = vmatprep.subr.bf16.mxu0 0
        %3502 = vmatpush1.bf16.msra.mxu0 0
        %3503 = vmatprep.subr.bf16.mxu0 0
        %3504 = vmatpush1.bf16.msra.mxu0 0
        %3505 = vmatprep.mubr.bf16.mxu0 0
        %3506 = vmatmul.mubr.bf16.gmra.mrb[0].mxu0 %v3459
        %v3507 = vpop.f32.mrb[0].mxu0
        %v3508 = vadd.f32 %v3456, %v3507
        %v3509 = vpop.f32.mrb[0].mxu0
        %v3510 = vadd.f32 %v3456, %v3509
        %v3511 = vpop.f32.mrb[0].mxu0
        %v3512 = vpop.f32.mrb[0].mxu0
        %3513 = vdwg.mxu0
        %3514 = vmatprep.subr.bf16.mxu0 %v3471
        %3515 = vmatpush1.bf16.msra.mxu0 %v3468
        %3516 = vmatprep.subr.bf16.mxu0 0
        %3517 = vmatpush1.bf16.msra.mxu0 0
        %3518 = vmatprep.subr.bf16.mxu0 0
        %3519 = vmatpush1.bf16.msra.mxu0 0
        %3520 = vmatprep.subr.bf16.mxu0 0
        %3521 = vmatpush1.bf16.msra.mxu0 0
        %3522 = vmatprep.subr.bf16.mxu0 0
        %3523 = vmatpush1.bf16.msra.mxu0 0
        %3524 = vmatprep.subr.bf16.mxu0 0
        %3525 = vmatpush1.bf16.msra.mxu0 0
        %3526 = vmatprep.subr.bf16.mxu0 0
        %3527 = vmatpush1.bf16.msra.mxu0 0
        %3528 = vmatprep.subr.bf16.mxu0 0
        %3529 = vmatpush1.bf16.msra.mxu0 0
        %3530 = vmatprep.subr.bf16.mxu0 0
        %3531 = vmatpush1.bf16.msra.mxu0 0
        %3532 = vmatprep.subr.bf16.mxu0 0
        %3533 = vmatpush1.bf16.msra.mxu0 0
        %3534 = vmatprep.subr.bf16.mxu0 0
        %3535 = vmatpush1.bf16.msra.mxu0 0
        %3536 = vmatprep.subr.bf16.mxu0 0
        %3537 = vmatpush1.bf16.msra.mxu0 0
        %3538 = vmatprep.subr.bf16.mxu0 0
        %3539 = vmatpush1.bf16.msra.mxu0 0
        %3540 = vmatprep.subr.bf16.mxu0 0
        %3541 = vmatpush1.bf16.msra.mxu0 0
        %3542 = vmatprep.subr.bf16.mxu0 0
        %3543 = vmatpush1.bf16.msra.mxu0 0
        %3544 = vmatprep.subr.bf16.mxu0 0
        %3545 = vmatpush1.bf16.msra.mxu0 0
        %3546 = vmatprep.mubr.bf16.mxu0 0
        %3547 = vmatmul.mubr.bf16.gmra.mrb[0].mxu0 %v3459
        %v3548 = vpop.f32.mrb[0].mxu0
        %v3549 = vadd.f32 %v3456, %v3548
        %v3550 = vpop.f32.mrb[0].mxu0
        %v3551 = vadd.f32 %v3456, %v3550
        %v3552 = vpop.f32.mrb[0].mxu0
        %v3553 = vpop.f32.mrb[0].mxu0
        %3554 = vdwg.mxu0
        %v3555 = vunpack.c.l.bf16 %v255
        %v3556 = vunpack.c.l.bf16 %v256
        %v3557 = vunpack.c.l.bf16 %v257
        %v3558 = vunpack.c.l.bf16 %v258
        %v3559 = vunpack.c.l.bf16 %v266
        %3565 = vrot.lane.b32.xlu0 %v3555, 17
        %v3566 = vpop.permute.xlu0 %3565
        %3567 = vrot.lane.b32.xlu0 %v3556, 17
        %v3568 = vpop.permute.xlu0 %3567
        %3569 = vrot.lane.b32.xlu0 %v3557, 17
        %v3570 = vpop.permute.xlu0 %3569
        %3571 = vrot.lane.b32.xlu0 %v3558, 17
        %v3572 = vpop.permute.xlu0 %3571
        %3573 = vrot.lane.b32.xlu0 %v3559, 17
        %v3574 = vpop.permute.xlu0 %3573
        %vm3575 = vcmask 138240
        %v3576 = vsel %vm3575, %v3566, %v3568
        %v3577 = vsel %vm3575, %v3568, %v3570
        %v3578 = vsel %vm3575, %v3570, %v3572
        %v3579 = vsel %vm3575, %v3572, %v3574
        %v3584 = vadd.f32 %v3508, %v3576
        %v3585 = vadd.f32 %v3510, %v3577
        %v3586 = vadd.f32 %v3549, %v3578
        %v3587 = vadd.f32 %v3551, %v3579
        %v3588 = vpack.c.bf16 %v3584, %v3584
        %v3589 = vpack.c.bf16 %v3585, %v3585
        %v3590 = vpack.c.bf16 %v3586, %v3586
        %v3591 = vpack.c.bf16 %v3587, %v3587
        %v3596 = vunpack.c.l.b16 %v3588
        %v3597 = vunpack.c.l.b16 %v3589
        %v3598 = vunpack.c.l.b16 %v3590
        %v3599 = vunpack.c.l.b16 %v3591
        %v3600 = vpack.c.b16 %v3597, %v3596
        %v3601 = vpack.c.b16 %v3599, %v3598
        %3604 = vst [vmem:[%s231] sm:$0xff] %v3600
        %3605 = vst [vmem:[%s231 + $0x8] sm:$0xff] %v3601
        %s3606 = sand.u32 %s151, 1
        %s3607 = scalar_lea.sflag [#allocation3], %s3606
        %s3608 = sand.u32 %s151, 1
        %s3609 = smul.addr %s3608, 16
        %s3610 = scalar_lea.vmem [#allocation2], %s3609
        // Predicated region
        $region41: #{tpu_custom_call.1} parent=39 // pred_check
          %p3611 = pneg %p161
        $region42: #{tpu_custom_call.1} parent=39 // pred_check_branch
          %3613 = sbr.rel (%p3611) target = $region44
        $region43: #{tpu_custom_call.1} parent=39 // pred_region
          %s3614 = smul.u32 4, %s24
          %s3616 = ssub.s32 256, 256
          %3617 = vsyncadd %s3607, %s3616
          %s3618 = smul.addr %s23, 8
          %s3619 = sadd.s32 %s3614, %s3618
          %s3620 = smul.addr %s3619, 64
          %s3621 = scalar_lea.hbm %s5, %s3620
          %s3623 = sshll.u32 %s3610, 4
          %s3624 = int_to_ptr.vmem [resolvable:$true] %s3623
          %3626 = dma.vmem_to_hbm [thread:$0]  %s3624, 256, %s3621, %s3607
        $region44: #{tpu_custom_call.1} parent=39 // pred_fallthru
          _
      $region40: #{tpu_custom_call.1} parent=5 // pred_fallthru
        _
      %p3627 = scmp.le.s32.totalorder 2, %s14
      // Predicated region
      $region45: #{tpu_custom_call.1} parent=5 // pred_check
        %p3628 = pneg %p3627
      $region46: #{tpu_custom_call.1} parent=5 // pred_check_branch
        %3630 = sbr.rel (%p3628) target = $region48
      $region47: #{tpu_custom_call.1} parent=5 // pred_region
        %s3631 = ssub.s32 %s14, 2
        // Predicated region
        $region49: #{tpu_custom_call.1} parent=47 // pred_check
          %p3632 = pneg %p167
        $region50: #{tpu_custom_call.1} parent=47 // pred_check_branch
          %3634 = sbr.rel (%p3632) target = $region52
        $region51: #{tpu_custom_call.1} parent=47 // pred_region
          %s3635 = sand.u32 %s152, 1
          %s3636 = scalar_lea.sflag [#allocation3], %s3635
          %s3637 = sand.u32 %s152, 1
          %s3638 = smul.addr %s3637, 16
          %s3639 = scalar_lea.vmem [#allocation2], %s3638
          %3640 = dma.done %s3636, 256
        $region52: #{tpu_custom_call.1} parent=47 // pred_fallthru
          _
      $region48: #{tpu_custom_call.1} parent=5 // pred_fallthru
        _
    $region6: #{tpu_custom_call.1} parent=1 // loop_footer
      %s18 = sadd.s32 1, %s14
    $region7: #{tpu_custom_call.1} parent=1 // loop_footer_branch
      %13 = sbr.rel target = $region3
    $region8: #{tpu_custom_call.1} parent=1 // loop_exit
      _
    %3641 = vsyncpa [#allocation3], 1
    %s3642 = scalar_lea.sflag [#allocation3], 1
    %3643 = vsyncpa %s3642, 1

</llo_original>
